<compile_context>
chip_gen: v6e
topology: v6e:2x2x1
jax: 0.10.0
libtpu: 0.0.40
codegen_flags: <defaults>
</compile_context>

<pallas_src>
import jax
import jax.numpy as jnp
import numpy as np
from jax import lax
from jax.experimental import pallas as pl
from jax.experimental.pallas import tpu as pltpu

# ---- module hyper-parameters (defaults from FusionNeRF.__init__) ----
POS_L = 10
DIR_L = 4
TIME_L = 4
POS_DIM = 3 * (2 * POS_L + 1)               # 63
DIR_DIM = 3 * (2 * DIR_L + 1)               # 27
TIME_DIM = 1 * (2 * TIME_L + 1)             # 9
HIDDEN = 32
STATIC_IN = POS_DIM + DIR_DIM               # 90
DYNAMIC_IN = POS_DIM + DIR_DIM + TIME_DIM   # 99
STATIC_OUT = 4                              # sigma + rgb
DYNAMIC_OUT = 5                             # sigma + rgb + blend

SLAB_W = 8                                  # [px,py,pz,dx,dy,dz,t,1]
PHASE_W = 128                               # sin phases cols 0:64 | cos phases cols 64:128
HEAD_W = 16                                 # padded fused-head width
_DIR_BASE = 3 * POS_L                       # 30
_TIME_BASE = 3 * POS_L + 3 * DIR_L          # 42


# ----------------------------- Pallas kernel ---------------------------------
def _render_kernel(pts_ref, dirs_ref, t_ref, z_ref,
                   freq_ref, w1r_ref, w1sc_ref, w2_ref, b2_ref, w3_ref, b3_ref,
                   out_ref):
    TR, S = z_ref.shape
    NB = TR * S
    f32 = jnp.float32

    # packed per-sample slab [px py pz dx dy dz t 1]; the constant lane carries the
    # +pi/2 cos-phase bias and the folded first-layer bias.
    slab = jnp.concatenate(
        [pts_ref[...], dirs_ref[...], t_ref[...], jnp.ones((NB, 1), f32)], axis=1)

    # --- positional encoding: ONE matmul + ONE sin (cos folded via +pi/2 phase bias) ---
    phase = jnp.dot(slab, freq_ref[...], preferred_element_type=f32)      # (NB, 128)
    enc = jnp.sin(phase)

    # --- fused static+dynamic MLP (hidden = 2*32 = 64), default MXU precision ---
    h = jnp.maximum(jnp.dot(slab, w1r_ref[...], preferred_element_type=f32)
                    + jnp.dot(enc, w1sc_ref[...], preferred_element_type=f32), 0.0)
    h = jnp.maximum(jnp.dot(h, w2_ref[...], preferred_element_type=f32)
                    + b2_ref[...], 0.0)                                   # (NB, 64)
    head = jnp.dot(h, w3_ref[...], preferred_element_type=f32) + b3_ref[...]   # (NB, 16)

    # head columns: 0 s_sigma | 1 d_sigma | 2:5 s_rgb | 5:8 d_rgb | 8 blend_logit
    sg = jax.nn.sigmoid(head[:, 2:9])                                     # one sigmoid
    blend = sg[:, 6:7]
    sigma = head[:, 0:1] + blend * (head[:, 1:2] - head[:, 0:1])
    rgb = sg[:, 0:3] + blend * (sg[:, 3:6] - sg[:, 0:3])

    # --- sample-major -> ray-major: row n = r*S + s, so this is a pure reshape ---
    sigma2d = jnp.reshape(sigma, (TR, S))
    blend2d = jnp.reshape(blend, (TR, S))
    r2d = jnp.reshape(rgb[:, 0:1], (TR, S))
    g2d = jnp.reshape(rgb[:, 1:2], (TR, S))
    b2d = jnp.reshape(rgb[:, 2:3], (TR, S))

    # --- volume rendering in ray-major [TR, S] (samples lane-dense) ---
    z2d = z_ref[...]
    lane = lax.broadcasted_iota(jnp.int32, (TR, S), 1)
    z_next = pltpu.roll(z2d, S - 1, axis=1)                 # z[:, s+1] (wraps at the end)
    delta = jnp.where(lane == S - 1, 1e10, z_next - z2d)

    alpha = 1.0 - jnp.exp(-sigma2d * delta)
    q = 1.0 - alpha + 1e-10

    # exact exclusive cumprod: shift-right-by-1 then log2(S)-step Hillis-Steele scan
    trans = jnp.where(lane >= 1, pltpu.roll(q, 1, axis=1), 1.0)
    off = 1
    while off < S:
        trans = trans * jnp.where(lane >= off, pltpu.roll(trans, off, axis=1), 1.0)
        off *= 2

    w = alpha * trans
    dyw = blend2d * w
    stw = w - dyw

    rr = jnp.sum(w * r2d, axis=1, keepdims=True)
    rg = jnp.sum(w * g2d, axis=1, keepdims=True)
    rb = jnp.sum(w * b2d, axis=1, keepdims=True)
    dep = jnp.sum(w * z2d, axis=1, keepdims=True)

    pieces = [w, stw, dyw, rr, rg, rb, dep]
    pad = out_ref.shape[1] - (3 * S + 4)
    if pad:
        pieces.append(jnp.zeros((TR, pad), f32))
    out_ref[...] = jnp.concatenate(pieces, axis=1)          # single lane-dense store


# ------------------------- host-side weight packing --------------------------
def _pack_fused_params(static_params, dynamic_params):
    (sw1, sb1), (sw2, sb2), (sw3, sb3) = [(np.asarray(w, np.float32), np.asarray(b, np.float32))
                                          for w, b in static_params]
    (dw1, db1), (dw2, db2), (dw3, db3) = [(np.asarray(w, np.float32), np.asarray(b, np.float32))
                                          for w, b in dynamic_params]
    H = sw1.shape[1]
    half = PHASE_W // 2                                      # 64

    # frequency matrix: phase[:, col] = x[:, chan] * 2^k ; cos half gets +pi/2 via slab[:,7]=1
    freq = np.zeros((SLAB_W, PHASE_W), np.float32)
    for k in range(POS_L):
        for c in range(3):
            freq[c, 3 * k + c] = 2.0 ** k
            freq[c, half + 3 * k + c] = 2.0 ** k
    for k in range(DIR_L):
        for c in range(3):
            freq[3 + c, _DIR_BASE + 3 * k + c] = 2.0 ** k
            freq[3 + c, half + _DIR_BASE + 3 * k + c] = 2.0 ** k
    for k in range(TIME_L):
        freq[6, _TIME_BASE + k] = 2.0 ** k
        freq[6, half + _TIME_BASE + k] = 2.0 ** k
    freq[7, half:] = np.pi / 2.0                             # cos(x) = sin(x + pi/2)

    def split_w1(w1, has_time):
        # original row layout: enc_p = [p, sin(p*2^k), cos(p*2^k)...], enc_d, (enc_t)
        wr = np.zeros((SLAB_W, H), np.float32)
        ws = np.zeros((half, H), np.float32)
        wc = np.zeros((half, H), np.float32)
        wr[0:3] = w1[0:3]
        for k in range(POS_L):
            for c in range(3):
                ws[3 * k + c] = w1[3 + 6 * k + c]
                wc[3 * k + c] = w1[6 + 6 * k + c]
        off = POS_DIM                                        # 63
        wr[3:6] = w1[off:off + 3]
        for k in range(DIR_L):
            for c in range(3):
                ws[_DIR_BASE + 3 * k + c] = w1[off + 3 + 6 * k + c]
                wc[_DIR_BASE + 3 * k + c] = w1[off + 6 + 6 * k + c]
        if has_time:
            toff = off + DIR_DIM                             # 90
            wr[6] = w1[toff]
            for k in range(TIME_L):
                ws[_TIME_BASE + k] = w1[toff + 1 + 2 * k]
                wc[_TIME_BASE + k] = w1[toff + 2 + 2 * k]
        return wr, ws, wc

    swr, sws, swc = split_w1(sw1, has_time=False)
    dwr, dws, dwc = split_w1(dw1, has_time=True)

    w1r = np.concatenate([swr, dwr], axis=1)                 # (8, 64)
    w1r[7, :] = np.concatenate([sb1, db1], axis=1)[0]        # fold b1 into the constant lane
    w1sc = np.concatenate([np.concatenate([sws, dws], axis=1),
                           np.concatenate([swc, dwc], axis=1)], axis=0)   # (128, 64)

    w2 = np.zeros((2 * H, 2 * H), np.float32)                # block diagonal
    w2[:H, :H] = sw2
    w2[H:, H:] = dw2
    b2 = np.concatenate([sb2, db2], axis=1)                  # (1, 64)

    # head: 0 s_sigma | 1 d_sigma | 2:5 s_rgb | 5:8 d_rgb | 8 blend | rest pad
    w3 = np.zeros((2 * H, HEAD_W), np.float32)
    b3 = np.zeros((1, HEAD_W), np.float32)
    w3[:H, 0] = sw3[:, 0];       b3[0, 0] = sb3[0, 0]
    w3[:H, 2:5] = sw3[:, 1:4];   b3[0, 2:5] = sb3[0, 1:4]
    w3[H:, 1] = dw3[:, 0];       b3[0, 1] = db3[0, 0]
    w3[H:, 5:8] = dw3[:, 1:4];   b3[0, 5:8] = db3[0, 1:4]
    w3[H:, 8] = dw3[:, 4];       b3[0, 8] = db3[0, 4]

    return freq, w1r, w1sc, w2, b2, w3, b3


# ------------------------------ public wrapper --------------------------------
def fusion_nerf_render(points, dirs, z_vals, time, static_params, dynamic_params,
                       tile_rays=128):
    R, S, _ = points.shape
    f32 = jnp.float32

    # tile: multiple of 8 rays, pad rays up to a multiple (never shrink to degenerate
    # tiles), and prefer >=2 grid steps so both v7x TensorCores get work.
    tr = max(8, (min(tile_rays, max(R, 8)) // 8) * 8)
    if (R + tr - 1) // tr < 2 and tr > 8:
        tr = max(8, (tr // 2 // 8) * 8)
    R_pad = ((R + tr - 1) // tr) * tr
    grid = R_pad // tr
    NB = tr * S

    def pad_rays(x):
        if R_pad == R:
            return x
        cfg = [(0, R_pad - R)] + [(0, 0)] * (x.ndim - 1)
        return jnp.pad(x, cfg, mode="edge")

    # flat per-sample inputs (free reshapes; no host-side slab concat / extra HBM pass)
    pts = pad_rays(points.astype(f32)).reshape(R_pad * S, 3)
    drs = pad_rays(dirs.astype(f32)).reshape(R_pad * S, 3)
    tms = pad_rays(time.astype(f32)).reshape(R_pad * S, 1)
    z2d = pad_rays(z_vals.astype(f32))                       # (R_pad, S)

    packed = _pack_fused_params(static_params, dynamic_params)
    consts = [jnp.asarray(a) for a in packed]

    OUTW = ((3 * S + 4 + 127) // 128) * 128                  # lane-dense packed output

    def const_spec(a):
        return pl.BlockSpec(tuple(a.shape), lambda i: (0, 0))

    in_specs = [pl.BlockSpec((NB, 3), lambda i: (i, 0)),
                pl.BlockSpec((NB, 3), lambda i: (i, 0)),
                pl.BlockSpec((NB, 1), lambda i: (i, 0)),
                pl.BlockSpec((tr, S), lambda i: (i, 0))]
    in_specs += [const_spec(a) for a in consts]

    out = pl.pallas_call(
        _render_kernel,
        out_shape=jax.ShapeDtypeStruct((R_pad, OUTW), f32),
        grid_spec=pltpu.PrefetchScalarGridSpec(
            num_scalar_prefetch=0,
            grid=(grid,),
            in_specs=in_specs,
            out_specs=pl.BlockSpec((tr, OUTW), lambda i: (i, 0)),
        ),
        compiler_params=pltpu.CompilerParams(
            dimension_semantics=("parallel",),
            vmem_limit_bytes=48 * 1024 * 1024,   # headroom under v7x's 64 MiB VMEM
        ),
    )(pts, drs, tms, z2d, *consts)

    out = out[:R]
    return {
        'rgb': out[:, 3 * S:3 * S + 3],
        'depth': out[:, 3 * S + 3],
        'weights': out[:, 0:S],
        'static_weights': out[:, S:2 * S],
        'dynamic_weights': out[:, 2 * S:3 * S],
        'sampling_points': points,
        # TODO(synk): 'consistency' comes from the undefined OpticalFlowEstimator submodule.
    }


# ----------------------- pure-JAX reference (mirrors torch) -----------------------
def _pos_enc(x, num_freqs):
    parts = [x]
    for i in range(num_freqs):
        f = float(2.0 ** i)
        parts.append(jnp.sin(x * f))
        parts.append(jnp.cos(x * f))
    return jnp.concatenate(parts, axis=-1)


def reference_render(points, dirs, z_vals, time, static_params, dynamic_params):
    hp = lax.Precision.HIGHEST                               # scoped f32 reference
    enc_p = _pos_enc(points, POS_L)
    enc_d = _pos_enc(dirs, DIR_L)
    enc_t = _pos_enc(time[..., None], TIME_L)
    static_in = jnp.concatenate([enc_p, enc_d], -1)
    dynamic_in = jnp.concatenate([enc_p, enc_d, enc_t], -1)

    def mlp(x, params):
        (w1, b1), (w2, b2), (w3, b3) = params
        h = jax.nn.relu(jnp.dot(x, w1, precision=hp) + b1)
        h = jax.nn.relu(jnp.dot(h, w2, precision=hp) + b2)
        return jnp.dot(h, w3, precision=hp) + b3

    so = mlp(static_in, static_params)
    do = mlp(dynamic_in, dynamic_params)
    s_sigma, s_rgb = so[..., 0], jax.nn.sigmoid(so[..., 1:4])
    d_sigma, d_rgb = do[..., 0], jax.nn.sigmoid(do[..., 1:4])
    blend = jax.nn.sigmoid(do[..., 4:5])
    # NOTE: the PyTorch source broadcasts blend [R,S,1] against sigma [R,S] (only
    # type-checks when R == S); this is the intended per-sample blending.
    sigma = (1 - blend[..., 0]) * s_sigma + blend[..., 0] * d_sigma
    rgb = (1 - blend) * s_rgb + blend * d_rgb
    delta = jnp.concatenate([z_vals[..., 1:] - z_vals[..., :-1],
                             jnp.full_like(z_vals[..., :1], 1e10)], -1)
    alpha = 1.0 - jnp.exp(-sigma * delta)
    T = jnp.cumprod(jnp.concatenate([jnp.ones_like(alpha[..., :1]),
                                     1.0 - alpha + 1e-10], -1), -1)[..., :-1]
    weights = alpha * T
    return {
        'rgb': jnp.sum(weights[..., None] * rgb, -2),
        'depth': jnp.sum(weights * z_vals, -1),
        'weights': weights,
        'static_weights': (1 - blend[..., 0]) * weights,
        'dynamic_weights': blend[..., 0] * weights,
    }


def init_linear(key, fan_in, fan_out, sigma_head=False):
    kw, kb = jax.random.split(key)
    bound = 1.0 / np.sqrt(fan_in)
    W = jax.random.uniform(kw, (fan_in, fan_out), jnp.float32, -bound, bound)
    b = jax.random.uniform(kb, (1, fan_out), jnp.float32, -bound, bound)
    if sigma_head:
        # Keep the raw density head comfortably positive for this synthetic test so the
        # module's 1e10 far-plane delta stays finite in f32 (the PyTorch module has the
        # same hazard for untrained weights); forward semantics are unchanged.
        W = W.at[:, 0].multiply(0.05)
        b = b.at[0, 0].set(1.5)
    return W, b


if __name__ == "__main__":
    key = jax.random.PRNGKey(0)
    R, S = 16, 8   # 16 rays, 8 samples per ray (small test shapes; grid has 2 steps)
    (k_pts, k_dir, k_z, k_t,
     k_s1, k_s2, k_s3, k_d1, k_d2, k_d3) = jax.random.split(key, 10)

    points = jax.random.uniform(k_pts, (R, S, 3), jnp.float32, -1.0, 1.0)
    d = jax.random.normal(k_dir, (R, 3), jnp.float32)
    d = d / jnp.linalg.norm(d, axis=-1, keepdims=True)
    dirs = jnp.broadcast_to(d[:, None, :], (R, S, 3))
    z_base = jnp.linspace(2.0, 6.0, S).astype(jnp.float32)
    z_vals = jnp.sort(z_base[None, :] + 0.2 * jax.random.uniform(k_z, (R, S), jnp.float32),
                      axis=-1)
    time = jax.random.uniform(k_t, (R, S), jnp.float32)

    static_params = (
        init_linear(k_s1, STATIC_IN, HIDDEN),
        init_linear(k_s2, HIDDEN, HIDDEN),
        init_linear(k_s3, HIDDEN, STATIC_OUT, sigma_head=True),
    )
    dynamic_params = (
        init_linear(k_d1, DYNAMIC_IN, HIDDEN),
        init_linear(k_d2, HIDDEN, HIDDEN),
        init_linear(k_d3, HIDDEN, DYNAMIC_OUT, sigma_head=True),
    )

    out = fusion_nerf_render(points, dirs, z_vals, time, static_params, dynamic_params)
    out = jax.block_until_ready(out)

    ref = reference_render(points, dirs, z_vals, time, static_params, dynamic_params)
    # Tolerance covers single-pass bf16 MXU operand rounding in the kernel vs the
    # HIGHEST-precision f32 reference (per review: default MXU precision in-kernel).
    for name in ('rgb', 'depth', 'weights', 'static_weights', 'dynamic_weights'):
        np.testing.assert_allclose(np.asarray(out[name]), np.asarray(ref[name]),
                                   rtol=1e-2, atol=3e-3)

    print("KERNEL_OK")
</pallas_src>

<mosaic_0001>
module attributes {stable_mosaic.version = 11 : i64} {
  func.func @_render_kernel(%arg0: i32, %arg1: memref<64x3xf32, #tpu.memory_space<vmem>>, %arg2: memref<64x3xf32, #tpu.memory_space<vmem>>, %arg3: memref<64x1xf32, #tpu.memory_space<vmem>>, %arg4: memref<8x8xf32, #tpu.memory_space<vmem>>, %arg5: memref<8x128xf32, #tpu.memory_space<vmem>>, %arg6: memref<8x64xf32, #tpu.memory_space<vmem>>, %arg7: memref<128x64xf32, #tpu.memory_space<vmem>>, %arg8: memref<64x64xf32, #tpu.memory_space<vmem>>, %arg9: memref<1x64xf32, #tpu.memory_space<vmem>>, %arg10: memref<64x16xf32, #tpu.memory_space<vmem>>, %arg11: memref<1x16xf32, #tpu.memory_space<vmem>>, %arg12: memref<8x128xf32, #tpu.memory_space<vmem>>) attributes {dimension_semantics = [#tpu.dimension_semantics<parallel>], iteration_bounds = array<i64: 2>, scalar_prefetch = 0 : i64, scratch_operands = 0 : i64, tpu.core_type = #tpu.core_type<tc>, window_params = [{transform_indices = @transform_0, window_bounds = array<i64: 64, 3>}, {transform_indices = @transform_1, window_bounds = array<i64: 64, 3>}, {transform_indices = @transform_2, window_bounds = array<i64: 64, 1>}, {transform_indices = @transform_3, window_bounds = array<i64: 8, 8>}, {pipeline_mode = #tpu.pipeline_mode<synchronous>, transform_indices = @transform_4, window_bounds = array<i64: 8, 128>}, {pipeline_mode = #tpu.pipeline_mode<synchronous>, transform_indices = @transform_5, window_bounds = array<i64: 8, 64>}, {pipeline_mode = #tpu.pipeline_mode<synchronous>, transform_indices = @transform_6, window_bounds = array<i64: 128, 64>}, {pipeline_mode = #tpu.pipeline_mode<synchronous>, transform_indices = @transform_7, window_bounds = array<i64: 64, 64>}, {pipeline_mode = #tpu.pipeline_mode<synchronous>, transform_indices = @transform_8, window_bounds = array<i64: 1, 64>}, {pipeline_mode = #tpu.pipeline_mode<synchronous>, transform_indices = @transform_9, window_bounds = array<i64: 64, 16>}, {pipeline_mode = #tpu.pipeline_mode<synchronous>, transform_indices = @transform_10, window_bounds = array<i64: 1, 16>}, {transform_indices = @transform_11, window_bounds = array<i64: 8, 128>}]} {
    %c0 = arith.constant 0 : index
    %c0_0 = arith.constant 0 : index
    %0 = vector.load %arg1[%c0, %c0_0] : memref<64x3xf32, #tpu.memory_space<vmem>>, vector<64x3xf32>
    %c0_1 = arith.constant 0 : index
    %c0_2 = arith.constant 0 : index
    %1 = vector.load %arg2[%c0_1, %c0_2] : memref<64x3xf32, #tpu.memory_space<vmem>>, vector<64x3xf32>
    %c0_3 = arith.constant 0 : index
    %c0_4 = arith.constant 0 : index
    %2 = vector.load %arg3[%c0_3, %c0_4] : memref<64x1xf32, #tpu.memory_space<vmem>>, vector<64x1xf32>
    %cst = arith.constant 1.000000e+00 : f32
    %3 = vector.broadcast %cst : f32 to vector<64x1xf32>
    %4 = tpu.concatenate %0, %1, %2, %3 in 1 : vector<64x3xf32>, vector<64x3xf32>, vector<64x1xf32>, vector<64x1xf32> -> vector<64x8xf32>
    %c0_5 = arith.constant 0 : index
    %c0_6 = arith.constant 0 : index
    %5 = vector.load %arg5[%c0_5, %c0_6] : memref<8x128xf32, #tpu.memory_space<vmem>>, vector<8x128xf32>
    %cst_7 = arith.constant dense<0.000000e+00> : vector<64x128xf32>
    %6 = tpu.matmul %4, %5, %cst_7 {dimension_numbers = #tpu.dot_dimension_numbers<[1], [0], [0], [1], [0, 0, 1, 1], [], []>} : vector<64x8xf32>, vector<8x128xf32>, vector<64x128xf32> -> vector<64x128xf32>
    %7 = math.sin %6 : vector<64x128xf32>
    %c0_8 = arith.constant 0 : index
    %c0_9 = arith.constant 0 : index
    %8 = vector.load %arg6[%c0_8, %c0_9] : memref<8x64xf32, #tpu.memory_space<vmem>>, vector<8x64xf32>
    %cst_10 = arith.constant dense<0.000000e+00> : vector<64x64xf32>
    %9 = tpu.matmul %4, %8, %cst_10 {dimension_numbers = #tpu.dot_dimension_numbers<[1], [0], [0], [1], [0, 0, 1, 1], [], []>} : vector<64x8xf32>, vector<8x64xf32>, vector<64x64xf32> -> vector<64x64xf32>
    %c0_11 = arith.constant 0 : index
    %c0_12 = arith.constant 0 : index
    %10 = vector.load %arg7[%c0_11, %c0_12] : memref<128x64xf32, #tpu.memory_space<vmem>>, vector<128x64xf32>
    %cst_13 = arith.constant dense<0.000000e+00> : vector<64x64xf32>
    %11 = tpu.matmul %7, %10, %cst_13 {dimension_numbers = #tpu.dot_dimension_numbers<[1], [0], [0], [1], [0, 0, 1, 1], [], []>} : vector<64x128xf32>, vector<128x64xf32>, vector<64x64xf32> -> vector<64x64xf32>
    %12 = arith.addf %9, %11 : vector<64x64xf32>
    %cst_14 = arith.constant 0.000000e+00 : f32
    %13 = vector.broadcast %cst_14 : f32 to vector<64x64xf32>
    %14 = arith.maximumf %12, %13 : vector<64x64xf32>
    %c0_15 = arith.constant 0 : index
    %c0_16 = arith.constant 0 : index
    %15 = vector.load %arg8[%c0_15, %c0_16] : memref<64x64xf32, #tpu.memory_space<vmem>>, vector<64x64xf32>
    %cst_17 = arith.constant dense<0.000000e+00> : vector<64x64xf32>
    %16 = tpu.matmul %14, %15, %cst_17 {dimension_numbers = #tpu.dot_dimension_numbers<[1], [0], [0], [1], [0, 0, 1, 1], [], []>} : vector<64x64xf32>, vector<64x64xf32>, vector<64x64xf32> -> vector<64x64xf32>
    %c0_18 = arith.constant 0 : index
    %c0_19 = arith.constant 0 : index
    %17 = vector.load %arg9[%c0_18, %c0_19] : memref<1x64xf32, #tpu.memory_space<vmem>>, vector<1x64xf32>
    %18 = vector.broadcast %17 : vector<1x64xf32> to vector<64x64xf32>
    %19 = arith.addf %16, %18 : vector<64x64xf32>
    %cst_20 = arith.constant 0.000000e+00 : f32
    %20 = vector.broadcast %cst_20 : f32 to vector<64x64xf32>
    %21 = arith.maximumf %19, %20 : vector<64x64xf32>
    %c0_21 = arith.constant 0 : index
    %c0_22 = arith.constant 0 : index
    %22 = vector.load %arg10[%c0_21, %c0_22] : memref<64x16xf32, #tpu.memory_space<vmem>>, vector<64x16xf32>
    %cst_23 = arith.constant dense<0.000000e+00> : vector<64x16xf32>
    %23 = tpu.matmul %21, %22, %cst_23 {dimension_numbers = #tpu.dot_dimension_numbers<[1], [0], [0], [1], [0, 0, 1, 1], [], []>} : vector<64x64xf32>, vector<64x16xf32>, vector<64x16xf32> -> vector<64x16xf32>
    %c0_24 = arith.constant 0 : index
    %c0_25 = arith.constant 0 : index
    %24 = vector.load %arg11[%c0_24, %c0_25] : memref<1x16xf32, #tpu.memory_space<vmem>>, vector<1x16xf32>
    %25 = vector.broadcast %24 : vector<1x16xf32> to vector<64x16xf32>
    %26 = arith.addf %23, %25 : vector<64x16xf32>
    %27 = vector.extract_strided_slice %26 {offsets = [0, 2], sizes = [64, 7], strides = [1, 1]} : vector<64x16xf32> to vector<64x7xf32>
    %28 = arith.negf %27 : vector<64x7xf32>
    %29 = math.exp %28 : vector<64x7xf32>
    %cst_26 = arith.constant 1.000000e+00 : f32
    %30 = vector.broadcast %cst_26 : f32 to vector<64x7xf32>
    %31 = arith.addf %30, %29 : vector<64x7xf32>
    %32 = arith.divf %30, %31 : vector<64x7xf32>
    %33 = vector.extract_strided_slice %32 {offsets = [0, 6], sizes = [64, 1], strides = [1, 1]} : vector<64x7xf32> to vector<64x1xf32>
    %34 = vector.extract_strided_slice %26 {offsets = [0, 0], sizes = [64, 1], strides = [1, 1]} : vector<64x16xf32> to vector<64x1xf32>
    %35 = vector.extract_strided_slice %26 {offsets = [0, 1], sizes = [64, 1], strides = [1, 1]} : vector<64x16xf32> to vector<64x1xf32>
    %36 = vector.extract_strided_slice %26 {offsets = [0, 0], sizes = [64, 1], strides = [1, 1]} : vector<64x16xf32> to vector<64x1xf32>
    %37 = arith.subf %35, %36 : vector<64x1xf32>
    %38 = arith.mulf %33, %37 : vector<64x1xf32>
    %39 = arith.addf %34, %38 : vector<64x1xf32>
    %40 = vector.extract_strided_slice %32 {offsets = [0, 0], sizes = [64, 3], strides = [1, 1]} : vector<64x7xf32> to vector<64x3xf32>
    %41 = vector.extract_strided_slice %32 {offsets = [0, 3], sizes = [64, 3], strides = [1, 1]} : vector<64x7xf32> to vector<64x3xf32>
    %42 = vector.extract_strided_slice %32 {offsets = [0, 0], sizes = [64, 3], strides = [1, 1]} : vector<64x7xf32> to vector<64x3xf32>
    %43 = arith.subf %41, %42 : vector<64x3xf32>
    %44 = vector.broadcast %33 : vector<64x1xf32> to vector<64x3xf32>
    %45 = arith.mulf %44, %43 : vector<64x3xf32>
    %46 = arith.addf %40, %45 : vector<64x3xf32>
    %47 = vector.shape_cast %39 : vector<64x1xf32> to vector<8x8xf32>
    %48 = vector.shape_cast %33 : vector<64x1xf32> to vector<8x8xf32>
    %49 = vector.extract_strided_slice %46 {offsets = [0, 0], sizes = [64, 1], strides = [1, 1]} : vector<64x3xf32> to vector<64x1xf32>
    %50 = vector.shape_cast %49 : vector<64x1xf32> to vector<8x8xf32>
    %51 = vector.extract_strided_slice %46 {offsets = [0, 1], sizes = [64, 1], strides = [1, 1]} : vector<64x3xf32> to vector<64x1xf32>
    %52 = vector.shape_cast %51 : vector<64x1xf32> to vector<8x8xf32>
    %53 = vector.extract_strided_slice %46 {offsets = [0, 2], sizes = [64, 1], strides = [1, 1]} : vector<64x3xf32> to vector<64x1xf32>
    %54 = vector.shape_cast %53 : vector<64x1xf32> to vector<8x8xf32>
    %c0_27 = arith.constant 0 : index
    %c0_28 = arith.constant 0 : index
    %55 = vector.load %arg4[%c0_27, %c0_28] : memref<8x8xf32, #tpu.memory_space<vmem>>, vector<8x8xf32>
    %56 = tpu.iota {dimensions = array<i32: 1>} : vector<8x8xi32>
    %c7_i32 = arith.constant 7 : i32
    %57 = tpu.dynamic_rotate %55 by %c7_i32 dim 1 : vector<8x8xf32>, i32 -> vector<8x8xf32>
    %c7_i32_29 = arith.constant 7 : i32
    %58 = vector.broadcast %c7_i32_29 : i32 to vector<8x8xi32>
    %59 = arith.cmpi eq, %56, %58 : vector<8x8xi32>
    %60 = arith.subf %57, %55 : vector<8x8xf32>
    %cst_30 = arith.constant 1.000000e+10 : f32
    %61 = vector.broadcast %cst_30 : f32 to vector<8x8xf32>
    %62 = arith.select %59, %61, %60 : vector<8x8xi1>, vector<8x8xf32>
    %cst_31 = arith.constant 0.000000e+00 : f32
    %63 = vector.broadcast %cst_31 : f32 to vector<8x8xf32>
    %64 = arith.subf %63, %47 : vector<8x8xf32>
    %65 = arith.mulf %64, %62 : vector<8x8xf32>
    %66 = math.exp %65 : vector<8x8xf32>
    %cst_32 = arith.constant 1.000000e+00 : f32
    %67 = vector.broadcast %cst_32 : f32 to vector<8x8xf32>
    %68 = arith.subf %67, %66 : vector<8x8xf32>
    %cst_33 = arith.constant 1.000000e+00 : f32
    %69 = vector.broadcast %cst_33 : f32 to vector<8x8xf32>
    %70 = arith.subf %69, %68 : vector<8x8xf32>
    %cst_34 = arith.constant 1.000000e-10 : f32
    %71 = vector.broadcast %cst_34 : f32 to vector<8x8xf32>
    %72 = arith.addf %70, %71 : vector<8x8xf32>
    %c1_i32 = arith.constant 1 : i32
    %73 = vector.broadcast %c1_i32 : i32 to vector<8x8xi32>
    %74 = arith.cmpi sge, %56, %73 : vector<8x8xi32>
    %c1_i32_35 = arith.constant 1 : i32
    %75 = tpu.dynamic_rotate %72 by %c1_i32_35 dim 1 : vector<8x8xf32>, i32 -> vector<8x8xf32>
    %cst_36 = arith.constant 1.000000e+00 : f32
    %76 = vector.broadcast %cst_36 : f32 to vector<8x8xf32>
    %77 = arith.select %74, %75, %76 : vector<8x8xi1>, vector<8x8xf32>
    %c1_i32_37 = arith.constant 1 : i32
    %78 = vector.broadcast %c1_i32_37 : i32 to vector<8x8xi32>
    %79 = arith.cmpi sge, %56, %78 : vector<8x8xi32>
    %c1_i32_38 = arith.constant 1 : i32
    %80 = tpu.dynamic_rotate %77 by %c1_i32_38 dim 1 : vector<8x8xf32>, i32 -> vector<8x8xf32>
    %cst_39 = arith.constant 1.000000e+00 : f32
    %81 = vector.broadcast %cst_39 : f32 to vector<8x8xf32>
    %82 = arith.select %79, %80, %81 : vector<8x8xi1>, vector<8x8xf32>
    %83 = arith.mulf %77, %82 : vector<8x8xf32>
    %c2_i32 = arith.constant 2 : i32
    %84 = vector.broadcast %c2_i32 : i32 to vector<8x8xi32>
    %85 = arith.cmpi sge, %56, %84 : vector<8x8xi32>
    %c2_i32_40 = arith.constant 2 : i32
    %86 = tpu.dynamic_rotate %83 by %c2_i32_40 dim 1 : vector<8x8xf32>, i32 -> vector<8x8xf32>
    %cst_41 = arith.constant 1.000000e+00 : f32
    %87 = vector.broadcast %cst_41 : f32 to vector<8x8xf32>
    %88 = arith.select %85, %86, %87 : vector<8x8xi1>, vector<8x8xf32>
    %89 = arith.mulf %83, %88 : vector<8x8xf32>
    %c4_i32 = arith.constant 4 : i32
    %90 = vector.broadcast %c4_i32 : i32 to vector<8x8xi32>
    %91 = arith.cmpi sge, %56, %90 : vector<8x8xi32>
    %c4_i32_42 = arith.constant 4 : i32
    %92 = tpu.dynamic_rotate %89 by %c4_i32_42 dim 1 : vector<8x8xf32>, i32 -> vector<8x8xf32>
    %cst_43 = arith.constant 1.000000e+00 : f32
    %93 = vector.broadcast %cst_43 : f32 to vector<8x8xf32>
    %94 = arith.select %91, %92, %93 : vector<8x8xi1>, vector<8x8xf32>
    %95 = arith.mulf %89, %94 : vector<8x8xf32>
    %96 = arith.mulf %68, %95 : vector<8x8xf32>
    %97 = arith.mulf %48, %96 : vector<8x8xf32>
    %98 = arith.subf %96, %97 : vector<8x8xf32>
    %99 = arith.mulf %96, %50 : vector<8x8xf32>
    %cst_44 = arith.constant dense<0.000000e+00> : vector<8xf32>
    %100 = vector.multi_reduction <add>, %99, %cst_44 [1] : vector<8x8xf32> to vector<8xf32>
    %101 = vector.shape_cast %100 : vector<8xf32> to vector<8x1xf32>
    %102 = arith.mulf %96, %52 : vector<8x8xf32>
    %cst_45 = arith.constant dense<0.000000e+00> : vector<8xf32>
    %103 = vector.multi_reduction <add>, %102, %cst_45 [1] : vector<8x8xf32> to vector<8xf32>
    %104 = vector.shape_cast %103 : vector<8xf32> to vector<8x1xf32>
    %105 = arith.mulf %96, %54 : vector<8x8xf32>
    %cst_46 = arith.constant dense<0.000000e+00> : vector<8xf32>
    %106 = vector.multi_reduction <add>, %105, %cst_46 [1] : vector<8x8xf32> to vector<8xf32>
    %107 = vector.shape_cast %106 : vector<8xf32> to vector<8x1xf32>
    %108 = arith.mulf %96, %55 : vector<8x8xf32>
    %cst_47 = arith.constant dense<0.000000e+00> : vector<8xf32>
    %109 = vector.multi_reduction <add>, %108, %cst_47 [1] : vector<8x8xf32> to vector<8xf32>
    %110 = vector.shape_cast %109 : vector<8xf32> to vector<8x1xf32>
    %cst_48 = arith.constant 0.000000e+00 : f32
    %111 = vector.broadcast %cst_48 : f32 to vector<8x100xf32>
    %112 = tpu.concatenate %96, %98, %97, %101, %104, %107, %110, %111 in 1 : vector<8x8xf32>, vector<8x8xf32>, vector<8x8xf32>, vector<8x1xf32>, vector<8x1xf32>, vector<8x1xf32>, vector<8x1xf32>, vector<8x100xf32> -> vector<8x128xf32>
    %c0_49 = arith.constant 0 : index
    %c0_50 = arith.constant 0 : index
    %113 = vector.load %arg12[%c0_49, %c0_50] : memref<8x128xf32, #tpu.memory_space<vmem>>, vector<8x128xf32>
    tpu.vector_store %arg12[%c0_49, %c0_50], %112 {strides = array<i32>} : memref<8x128xf32, #tpu.memory_space<vmem>>, vector<8x128xf32>,
    return
  }
  func.func @transform_0(%arg0: i32) -> (i32, i32) {
    %c0_i32 = arith.constant 0 : i32
    %c0_i32_0 = arith.constant 0 : i32
    return %arg0, %c0_i32 : i32, i32
  }
  func.func @transform_1(%arg0: i32) -> (i32, i32) {
    %c0_i32 = arith.constant 0 : i32
    %c0_i32_0 = arith.constant 0 : i32
    return %arg0, %c0_i32 : i32, i32
  }
  func.func @transform_2(%arg0: i32) -> (i32, i32) {
    %c0_i32 = arith.constant 0 : i32
    %c0_i32_0 = arith.constant 0 : i32
    return %arg0, %c0_i32 : i32, i32
  }
  func.func @transform_3(%arg0: i32) -> (i32, i32) {
    %c0_i32 = arith.constant 0 : i32
    %c0_i32_0 = arith.constant 0 : i32
    return %arg0, %c0_i32 : i32, i32
  }
  func.func @transform_4(%arg0: i32) -> (i32, i32) {
    %c0_i32 = arith.constant 0 : i32
    %c0_i32_0 = arith.constant 0 : i32
    %c0_i32_1 = arith.constant 0 : i32
    return %c0_i32, %c0_i32_0 : i32, i32
  }
  func.func @transform_5(%arg0: i32) -> (i32, i32) {
    %c0_i32 = arith.constant 0 : i32
    %c0_i32_0 = arith.constant 0 : i32
    %c0_i32_1 = arith.constant 0 : i32
    return %c0_i32, %c0_i32_0 : i32, i32
  }
  func.func @transform_6(%arg0: i32) -> (i32, i32) {
    %c0_i32 = arith.constant 0 : i32
    %c0_i32_0 = arith.constant 0 : i32
    %c0_i32_1 = arith.constant 0 : i32
    return %c0_i32, %c0_i32_0 : i32, i32
  }
  func.func @transform_7(%arg0: i32) -> (i32, i32) {
    %c0_i32 = arith.constant 0 : i32
    %c0_i32_0 = arith.constant 0 : i32
    %c0_i32_1 = arith.constant 0 : i32
    return %c0_i32, %c0_i32_0 : i32, i32
  }
  func.func @transform_8(%arg0: i32) -> (i32, i32) {
    %c0_i32 = arith.constant 0 : i32
    %c0_i32_0 = arith.constant 0 : i32
    %c0_i32_1 = arith.constant 0 : i32
    return %c0_i32, %c0_i32_0 : i32, i32
  }
  func.func @transform_9(%arg0: i32) -> (i32, i32) {
    %c0_i32 = arith.constant 0 : i32
    %c0_i32_0 = arith.constant 0 : i32
    %c0_i32_1 = arith.constant 0 : i32
    return %c0_i32, %c0_i32_0 : i32, i32
  }
  func.func @transform_10(%arg0: i32) -> (i32, i32) {
    %c0_i32 = arith.constant 0 : i32
    %c0_i32_0 = arith.constant 0 : i32
    %c0_i32_1 = arith.constant 0 : i32
    return %c0_i32, %c0_i32_0 : i32, i32
  }
  func.func @transform_11(%arg0: i32) -> (i32, i32) {
    %c0_i32 = arith.constant 0 : i32
    %c0_i32_0 = arith.constant 0 : i32
    return %arg0, %c0_i32 : i32, i32
  }
}

</mosaic_0001>

<llo_original>
// kernel: tpu_custom_call.1
$region0: #{tpu_custom_call.1}
  #allocation0 [shape = 'u32[]', space=smem, size = 0x4, offset = 0x4, fixed_abs, tag = 'smem constant byte address 0x4 - core index']
  #allocation1 [shape = 'u32[144,128]{1,0:T(1,128)}', space=vmem, size = 0x12000, scoped, tag = 'internal scratch']
  %s0 = inlined_call_operand.vmem [shape: f32[128,3], index: 0, kind: input, shape index: {}]
  %s1 = inlined_call_operand.vmem [shape: f32[128,3], index: 1, kind: input, shape index: {}]
  %s2 = inlined_call_operand.vmem [shape: f32[128,1], index: 2, kind: input, shape index: {}]
  %s3 = inlined_call_operand.vmem [shape: f32[16,8], index: 3, kind: input, shape index: {}]
  %s4 = inlined_call_operand.vmem [shape: f32[8,128], index: 4, kind: input, shape index: {}]
  %s5 = inlined_call_operand.vmem [shape: f32[8,64], index: 5, kind: input, shape index: {}]
  %s6 = inlined_call_operand.vmem [shape: f32[128,64], index: 6, kind: input, shape index: {}]
  %s7 = inlined_call_operand.vmem [shape: f32[64,64], index: 7, kind: input, shape index: {}]
  %s8 = inlined_call_operand.vmem [shape: f32[1,64], index: 8, kind: input, shape index: {}]
  %s9 = inlined_call_operand.vmem [shape: f32[64,16], index: 9, kind: input, shape index: {}]
  %s10 = inlined_call_operand.vmem [shape: f32[1,16], index: 10, kind: input, shape index: {}]
  %s11 = inlined_call_operand.hbm [shape: f32[16,128], index: 11, kind: output, shape index: {}]
  %s12 = sld [smem:[#allocation0]]
  $region77: #{tpu_custom_call.1} parent=0
    _
  %s14 = ssub.s32 1, %s12
  %s15 = scalar_select 0, %s14, %s12
  $region1: #{tpu_custom_call.1} parent=0
    #allocation2 [shape = 'u8[8192]{0}', space=vmem, size = 0x2000, scoped, tag = 'output window, operand 0']
    #allocation3 [shape = 's32[2]{0}', space=sflag, size = 0x8, scoped, tag = 'scoped memory for tpu_custom_call.1']
    %16 = vsyncpa [#allocation3], 0
    %s17 = scalar_lea.sflag [#allocation3], 1
    %18 = vsyncpa %s17, 0
    loop: start=0, step=1, limit=4
    $region2: #{tpu_custom_call.1} parent=1 // loop_pre_header
      _
    $region3: #{tpu_custom_call.1} parent=1 // loop_header
      %s20 = sphi 0, %s24
      %p21 = scmp.ge.s32.totalorder %s20, 4
      %s30 = sphi 0, %s32
      %s33 = sphi 0, %s30
      %s34 = sphi 0, %s33
      %s50 = sphi 0, %s34
      %s56 = sphi 0, %s58
      %s59 = sphi 0, %s56
      %s60 = sphi 0, %s59
      %s76 = sphi 0, %s60
      %s82 = sphi 0, %s84
      %s85 = sphi 0, %s82
      %s86 = sphi 0, %s85
      %s102 = sphi 0, %s86
      %s108 = sphi 0, %s110
      %s111 = sphi 0, %s108
      %s112 = sphi 0, %s111
      %s128 = sphi 0, %s112
      %s132 = sphi 0, %s132
      %s134 = sphi 0, %s132
      %s135 = sphi 0, %s134
      %s149 = sphi 0, %s135
      %s153 = sphi 0, %s153
      %s155 = sphi 0, %s153
      %s156 = sphi 0, %s155
      %s170 = sphi 0, %s156
      %s174 = sphi 0, %s174
      %s176 = sphi 0, %s174
      %s177 = sphi 0, %s176
      %s191 = sphi 0, %s177
      %s195 = sphi 0, %s195
      %s197 = sphi 0, %s195
      %s198 = sphi 0, %s197
      %s212 = sphi 0, %s198
      %s216 = sphi 0, %s216
      %s218 = sphi 0, %s216
      %s219 = sphi 0, %s218
      %s233 = sphi 0, %s219
      %s237 = sphi 0, %s237
      %s239 = sphi 0, %s237
      %s240 = sphi 0, %s239
      %s254 = sphi 0, %s240
      %s258 = sphi 0, %s258
      %s260 = sphi 0, %s258
      %s261 = sphi 0, %s260
      %s275 = sphi 0, %s261
      %s281 = sphi 0, %s283
      %s284 = sphi 0, %s281
      %s285 = sphi 0, %s284
      %s301 = sphi 0, %s285
    $region4: #{tpu_custom_call.1} parent=1 // loop_header_branch
      %23 = sbr.rel (%p21) target = $region8
    $region5: #{tpu_custom_call.1} parent=1 // loop_body
      %s25 = ssub.s32 %s20, 1
      %s26 = ssub.s32 %s20, 2
      %s27 = sadd.s32 %s20, 1
      %s28 = ssub.s32 %s20, %s27
      %p29 = scmp.eq.s32.totalorder %s28, 0
      %s31 = sadd.s32 %s30, 1
      %s32 = scalar_select %p29, %s30, %s31
      %p35 = pneg %p29
      %p36 = scmp.eq.s32.totalorder %s20, 1
      %p37 = por %p35, %p36
      %p38 = scmp.ne.s32.totalorder %s30, %s33
      %p39 = scmp.eq.s32.totalorder %s20, 0
      %p40 = por %p38, %p39
      %p41 = scmp.ne.s32.totalorder %s30, %s33
      %p42 = scmp.eq.s32.totalorder %s25, 1
      %p43 = por %p41, %p42
      %p44 = scmp.ne.s32.totalorder %s33, %s34
      %p45 = scmp.eq.s32.totalorder %s25, 0
      %p46 = por %p44, %p45
      %p47 = scmp.ne.s32.totalorder %s33, %s34
      %p48 = scmp.eq.s32.totalorder %s26, 1
      %p49 = por %p47, %p48
      %p51 = scmp.ne.s32.totalorder %s34, %s50
      %p52 = scmp.eq.s32.totalorder %s26, 0
      %p53 = por %p51, %p52
      %s54 = ssub.s32 %s20, %s27
      %p55 = scmp.eq.s32.totalorder %s54, 0
      %s57 = sadd.s32 %s56, 1
      %s58 = scalar_select %p55, %s56, %s57
      %p61 = pneg %p55
      %p62 = scmp.eq.s32.totalorder %s20, 1
      %p63 = por %p61, %p62
      %p64 = scmp.ne.s32.totalorder %s56, %s59
      %p65 = scmp.eq.s32.totalorder %s20, 0
      %p66 = por %p64, %p65
      %p67 = scmp.ne.s32.totalorder %s56, %s59
      %p68 = scmp.eq.s32.totalorder %s25, 1
      %p69 = por %p67, %p68
      %p70 = scmp.ne.s32.totalorder %s59, %s60
      %p71 = scmp.eq.s32.totalorder %s25, 0
      %p72 = por %p70, %p71
      %p73 = scmp.ne.s32.totalorder %s59, %s60
      %p74 = scmp.eq.s32.totalorder %s26, 1
      %p75 = por %p73, %p74
      %p77 = scmp.ne.s32.totalorder %s60, %s76
      %p78 = scmp.eq.s32.totalorder %s26, 0
      %p79 = por %p77, %p78
      %s80 = ssub.s32 %s20, %s27
      %p81 = scmp.eq.s32.totalorder %s80, 0
      %s83 = sadd.s32 %s82, 1
      %s84 = scalar_select %p81, %s82, %s83
      %p87 = pneg %p81
      %p88 = scmp.eq.s32.totalorder %s20, 1
      %p89 = por %p87, %p88
      %p90 = scmp.ne.s32.totalorder %s82, %s85
      %p91 = scmp.eq.s32.totalorder %s20, 0
      %p92 = por %p90, %p91
      %p93 = scmp.ne.s32.totalorder %s82, %s85
      %p94 = scmp.eq.s32.totalorder %s25, 1
      %p95 = por %p93, %p94
      %p96 = scmp.ne.s32.totalorder %s85, %s86
      %p97 = scmp.eq.s32.totalorder %s25, 0
      %p98 = por %p96, %p97
      %p99 = scmp.ne.s32.totalorder %s85, %s86
      %p100 = scmp.eq.s32.totalorder %s26, 1
      %p101 = por %p99, %p100
      %p103 = scmp.ne.s32.totalorder %s86, %s102
      %p104 = scmp.eq.s32.totalorder %s26, 0
      %p105 = por %p103, %p104
      %s106 = ssub.s32 %s20, %s27
      %p107 = scmp.eq.s32.totalorder %s106, 0
      %s109 = sadd.s32 %s108, 1
      %s110 = scalar_select %p107, %s108, %s109
      %p113 = pneg %p107
      %p114 = scmp.eq.s32.totalorder %s20, 1
      %p115 = por %p113, %p114
      %p116 = scmp.ne.s32.totalorder %s108, %s111
      %p117 = scmp.eq.s32.totalorder %s20, 0
      %p118 = por %p116, %p117
      %p119 = scmp.ne.s32.totalorder %s108, %s111
      %p120 = scmp.eq.s32.totalorder %s25, 1
      %p121 = por %p119, %p120
      %p122 = scmp.ne.s32.totalorder %s111, %s112
      %p123 = scmp.eq.s32.totalorder %s25, 0
      %p124 = por %p122, %p123
      %p125 = scmp.ne.s32.totalorder %s111, %s112
      %p126 = scmp.eq.s32.totalorder %s26, 1
      %p127 = por %p125, %p126
      %p129 = scmp.ne.s32.totalorder %s112, %s128
      %p130 = scmp.eq.s32.totalorder %s26, 0
      %p131 = por %p129, %p130
      %s133 = sadd.s32 %s132, 1
      %p136 = scmp.eq.s32.totalorder %s20, 1
      %p137 = scmp.ne.s32.totalorder %s132, %s134
      %p138 = scmp.eq.s32.totalorder %s20, 0
      %p139 = por %p137, %p138
      %p140 = scmp.ne.s32.totalorder %s132, %s134
      %p141 = scmp.eq.s32.totalorder %s25, 1
      %p142 = por %p140, %p141
      %p143 = scmp.ne.s32.totalorder %s134, %s135
      %p144 = scmp.eq.s32.totalorder %s25, 0
      %p145 = por %p143, %p144
      %p146 = scmp.ne.s32.totalorder %s134, %s135
      %p147 = scmp.eq.s32.totalorder %s26, 1
      %p148 = por %p146, %p147
      %p150 = scmp.ne.s32.totalorder %s135, %s149
      %p151 = scmp.eq.s32.totalorder %s26, 0
      %p152 = por %p150, %p151
      %s154 = sadd.s32 %s153, 1
      %p157 = scmp.eq.s32.totalorder %s20, 1
      %p158 = scmp.ne.s32.totalorder %s153, %s155
      %p159 = scmp.eq.s32.totalorder %s20, 0
      %p160 = por %p158, %p159
      %p161 = scmp.ne.s32.totalorder %s153, %s155
      %p162 = scmp.eq.s32.totalorder %s25, 1
      %p163 = por %p161, %p162
      %p164 = scmp.ne.s32.totalorder %s155, %s156
      %p165 = scmp.eq.s32.totalorder %s25, 0
      %p166 = por %p164, %p165
      %p167 = scmp.ne.s32.totalorder %s155, %s156
      %p168 = scmp.eq.s32.totalorder %s26, 1
      %p169 = por %p167, %p168
      %p171 = scmp.ne.s32.totalorder %s156, %s170
      %p172 = scmp.eq.s32.totalorder %s26, 0
      %p173 = por %p171, %p172
      %s175 = sadd.s32 %s174, 1
      %p178 = scmp.eq.s32.totalorder %s20, 1
      %p179 = scmp.ne.s32.totalorder %s174, %s176
      %p180 = scmp.eq.s32.totalorder %s20, 0
      %p181 = por %p179, %p180
      %p182 = scmp.ne.s32.totalorder %s174, %s176
      %p183 = scmp.eq.s32.totalorder %s25, 1
      %p184 = por %p182, %p183
      %p185 = scmp.ne.s32.totalorder %s176, %s177
      %p186 = scmp.eq.s32.totalorder %s25, 0
      %p187 = por %p185, %p186
      %p188 = scmp.ne.s32.totalorder %s176, %s177
      %p189 = scmp.eq.s32.totalorder %s26, 1
      %p190 = por %p188, %p189
      %p192 = scmp.ne.s32.totalorder %s177, %s191
      %p193 = scmp.eq.s32.totalorder %s26, 0
      %p194 = por %p192, %p193
      %s196 = sadd.s32 %s195, 1
      %p199 = scmp.eq.s32.totalorder %s20, 1
      %p200 = scmp.ne.s32.totalorder %s195, %s197
      %p201 = scmp.eq.s32.totalorder %s20, 0
      %p202 = por %p200, %p201
      %p203 = scmp.ne.s32.totalorder %s195, %s197
      %p204 = scmp.eq.s32.totalorder %s25, 1
      %p205 = por %p203, %p204
      %p206 = scmp.ne.s32.totalorder %s197, %s198
      %p207 = scmp.eq.s32.totalorder %s25, 0
      %p208 = por %p206, %p207
      %p209 = scmp.ne.s32.totalorder %s197, %s198
      %p210 = scmp.eq.s32.totalorder %s26, 1
      %p211 = por %p209, %p210
      %p213 = scmp.ne.s32.totalorder %s198, %s212
      %p214 = scmp.eq.s32.totalorder %s26, 0
      %p215 = por %p213, %p214
      %s217 = sadd.s32 %s216, 1
      %p220 = scmp.eq.s32.totalorder %s20, 1
      %p221 = scmp.ne.s32.totalorder %s216, %s218
      %p222 = scmp.eq.s32.totalorder %s20, 0
      %p223 = por %p221, %p222
      %p224 = scmp.ne.s32.totalorder %s216, %s218
      %p225 = scmp.eq.s32.totalorder %s25, 1
      %p226 = por %p224, %p225
      %p227 = scmp.ne.s32.totalorder %s218, %s219
      %p228 = scmp.eq.s32.totalorder %s25, 0
      %p229 = por %p227, %p228
      %p230 = scmp.ne.s32.totalorder %s218, %s219
      %p231 = scmp.eq.s32.totalorder %s26, 1
      %p232 = por %p230, %p231
      %p234 = scmp.ne.s32.totalorder %s219, %s233
      %p235 = scmp.eq.s32.totalorder %s26, 0
      %p236 = por %p234, %p235
      %s238 = sadd.s32 %s237, 1
      %p241 = scmp.eq.s32.totalorder %s20, 1
      %p242 = scmp.ne.s32.totalorder %s237, %s239
      %p243 = scmp.eq.s32.totalorder %s20, 0
      %p244 = por %p242, %p243
      %p245 = scmp.ne.s32.totalorder %s237, %s239
      %p246 = scmp.eq.s32.totalorder %s25, 1
      %p247 = por %p245, %p246
      %p248 = scmp.ne.s32.totalorder %s239, %s240
      %p249 = scmp.eq.s32.totalorder %s25, 0
      %p250 = por %p248, %p249
      %p251 = scmp.ne.s32.totalorder %s239, %s240
      %p252 = scmp.eq.s32.totalorder %s26, 1
      %p253 = por %p251, %p252
      %p255 = scmp.ne.s32.totalorder %s240, %s254
      %p256 = scmp.eq.s32.totalorder %s26, 0
      %p257 = por %p255, %p256
      %s259 = sadd.s32 %s258, 1
      %p262 = scmp.eq.s32.totalorder %s20, 1
      %p263 = scmp.ne.s32.totalorder %s258, %s260
      %p264 = scmp.eq.s32.totalorder %s20, 0
      %p265 = por %p263, %p264
      %p266 = scmp.ne.s32.totalorder %s258, %s260
      %p267 = scmp.eq.s32.totalorder %s25, 1
      %p268 = por %p266, %p267
      %p269 = scmp.ne.s32.totalorder %s260, %s261
      %p270 = scmp.eq.s32.totalorder %s25, 0
      %p271 = por %p269, %p270
      %p272 = scmp.ne.s32.totalorder %s260, %s261
      %p273 = scmp.eq.s32.totalorder %s26, 1
      %p274 = por %p272, %p273
      %p276 = scmp.ne.s32.totalorder %s261, %s275
      %p277 = scmp.eq.s32.totalorder %s26, 0
      %p278 = por %p276, %p277
      %s279 = ssub.s32 %s20, %s27
      %p280 = scmp.eq.s32.totalorder %s279, 0
      %s282 = sadd.s32 %s281, 1
      %s283 = scalar_select %p280, %s281, %s282
      %p286 = pneg %p280
      %p287 = scmp.eq.s32.totalorder %s20, 1
      %p288 = por %p286, %p287
      %p289 = scmp.ne.s32.totalorder %s281, %s284
      %p290 = scmp.eq.s32.totalorder %s20, 0
      %p291 = por %p289, %p290
      %p292 = scmp.ne.s32.totalorder %s281, %s284
      %p293 = scmp.eq.s32.totalorder %s25, 1
      %p294 = por %p292, %p293
      %p295 = scmp.ne.s32.totalorder %s284, %s285
      %p296 = scmp.eq.s32.totalorder %s25, 0
      %p297 = por %p295, %p296
      %p298 = scmp.ne.s32.totalorder %s284, %s285
      %p299 = scmp.eq.s32.totalorder %s26, 1
      %p300 = por %p298, %p299
      %p302 = scmp.ne.s32.totalorder %s285, %s301
      %p303 = scmp.eq.s32.totalorder %s26, 0
      %p304 = por %p302, %p303
      %p305 = scmp.le.s32.totalorder 1, %s20
      %p306 = scmp.lt.s32.totalorder %s20, 3
      %p307 = pnand %p305, %p306
      %p308 = pneg %p307
      // Predicated region
      $region9: #{tpu_custom_call.1} parent=5 // pred_check
        _
      $region10: #{tpu_custom_call.1} parent=5 // pred_check_branch
        %310 = sbr.rel (%p307) target = $region12
      $region11: #{tpu_custom_call.1} parent=5 // pred_region
        %s311 = ssub.s32 %s20, 1
        // Predicated region
        $region13: #{tpu_custom_call.1} parent=11 // pred_check
          %p312 = pneg %p145
        $region14: #{tpu_custom_call.1} parent=11 // pred_check_branch
          %314 = sbr.rel (%p312) target = $region16
        $region15: #{tpu_custom_call.1} parent=11 // pred_region
          _
        $region16: #{tpu_custom_call.1} parent=11 // pred_fallthru
          _
        // Predicated region
        $region17: #{tpu_custom_call.1} parent=11 // pred_check
          %p315 = pneg %p166
        $region18: #{tpu_custom_call.1} parent=11 // pred_check_branch
          %317 = sbr.rel (%p315) target = $region20
        $region19: #{tpu_custom_call.1} parent=11 // pred_region
          _
        $region20: #{tpu_custom_call.1} parent=11 // pred_fallthru
          _
        // Predicated region
        $region21: #{tpu_custom_call.1} parent=11 // pred_check
          %p318 = pneg %p187
        $region22: #{tpu_custom_call.1} parent=11 // pred_check_branch
          %320 = sbr.rel (%p318) target = $region24
        $region23: #{tpu_custom_call.1} parent=11 // pred_region
          _
        $region24: #{tpu_custom_call.1} parent=11 // pred_fallthru
          _
        // Predicated region
        $region25: #{tpu_custom_call.1} parent=11 // pred_check
          %p321 = pneg %p208
        $region26: #{tpu_custom_call.1} parent=11 // pred_check_branch
          %323 = sbr.rel (%p321) target = $region28
        $region27: #{tpu_custom_call.1} parent=11 // pred_region
          _
        $region28: #{tpu_custom_call.1} parent=11 // pred_fallthru
          _
        // Predicated region
        $region29: #{tpu_custom_call.1} parent=11 // pred_check
          %p324 = pneg %p229
        $region30: #{tpu_custom_call.1} parent=11 // pred_check_branch
          %326 = sbr.rel (%p324) target = $region32
        $region31: #{tpu_custom_call.1} parent=11 // pred_region
          _
        $region32: #{tpu_custom_call.1} parent=11 // pred_fallthru
          _
        // Predicated region
        $region33: #{tpu_custom_call.1} parent=11 // pred_check
          %p327 = pneg %p250
        $region34: #{tpu_custom_call.1} parent=11 // pred_check_branch
          %329 = sbr.rel (%p327) target = $region36
        $region35: #{tpu_custom_call.1} parent=11 // pred_region
          _
        $region36: #{tpu_custom_call.1} parent=11 // pred_fallthru
          _
        // Predicated region
        $region37: #{tpu_custom_call.1} parent=11 // pred_check
          %p330 = pneg %p271
        $region38: #{tpu_custom_call.1} parent=11 // pred_check_branch
          %332 = sbr.rel (%p330) target = $region40
        $region39: #{tpu_custom_call.1} parent=11 // pred_region
          _
        $region40: #{tpu_custom_call.1} parent=11 // pred_fallthru
          _
      $region12: #{tpu_custom_call.1} parent=5 // pred_fallthru
        _
      %p333 = scmp.lt.s32.totalorder %s20, 2
      // Predicated region
      $region41: #{tpu_custom_call.1} parent=5 // pred_check
        %p334 = pneg %p333
      $region42: #{tpu_custom_call.1} parent=5 // pred_check_branch
        %336 = sbr.rel (%p334) target = $region44
      $region43: #{tpu_custom_call.1} parent=5 // pred_region
        // Predicated region
        $region45: #{tpu_custom_call.1} parent=43 // pred_check
          %p337 = pneg %p40
        $region46: #{tpu_custom_call.1} parent=43 // pred_check_branch
          %339 = sbr.rel (%p337) target = $region48
        $region47: #{tpu_custom_call.1} parent=43 // pred_region
          %s340 = smul.u32 8, %s20
          %p341 = scmp.lt.s32.totalorder %s340, 15
          %s342 = scalar_select %p341, %s340, 15
          %s343 = smul.addr %s342, 8
          %s344 = scalar_lea.vmem %s0, %s343
          %s345 = smul.u32 8, %s20
        $region48: #{tpu_custom_call.1} parent=43 // pred_fallthru
          _
        // Predicated region
        $region49: #{tpu_custom_call.1} parent=43 // pred_check
          %p346 = pneg %p66
        $region50: #{tpu_custom_call.1} parent=43 // pred_check_branch
          %348 = sbr.rel (%p346) target = $region52
        $region51: #{tpu_custom_call.1} parent=43 // pred_region
          %s349 = smul.u32 8, %s20
          %p350 = scmp.lt.s32.totalorder %s349, 15
          %s351 = scalar_select %p350, %s349, 15
          %s352 = smul.addr %s351, 8
          %s353 = scalar_lea.vmem %s1, %s352
          %s354 = smul.u32 8, %s20
        $region52: #{tpu_custom_call.1} parent=43 // pred_fallthru
          _
        // Predicated region
        $region53: #{tpu_custom_call.1} parent=43 // pred_check
          %p355 = pneg %p92
        $region54: #{tpu_custom_call.1} parent=43 // pred_check_branch
          %357 = sbr.rel (%p355) target = $region56
        $region55: #{tpu_custom_call.1} parent=43 // pred_region
          %s358 = smul.u32 8, %s20
          %p359 = scmp.lt.s32.totalorder %s358, 15
          %s360 = scalar_select %p359, %s358, 15
          %s361 = smul.addr %s360, 8
          %s362 = scalar_lea.vmem %s2, %s361
          %s363 = smul.u32 8, %s20
        $region56: #{tpu_custom_call.1} parent=43 // pred_fallthru
          _
        // Predicated region
        $region57: #{tpu_custom_call.1} parent=43 // pred_check
          %p364 = pneg %p118
        $region58: #{tpu_custom_call.1} parent=43 // pred_check_branch
          %366 = sbr.rel (%p364) target = $region60
        $region59: #{tpu_custom_call.1} parent=43 // pred_region
          %p367 = scmp.lt.s32.totalorder %s20, 1
          %s368 = scalar_select %p367, %s20, 1
          %s369 = smul.addr %s368, 8
          %s370 = scalar_lea.vmem %s3, %s369
        $region60: #{tpu_custom_call.1} parent=43 // pred_fallthru
          _
      $region44: #{tpu_custom_call.1} parent=5 // pred_fallthru
        _
      %p371 = scmp.le.s32.totalorder 1, %s20
      %p372 = scmp.lt.s32.totalorder %s20, 3
      %p373 = pnand %p371, %p372
      %p374 = pneg %p373
      // Predicated region
      $region61: #{tpu_custom_call.1} parent=5 // pred_check
        _
      $region62: #{tpu_custom_call.1} parent=5 // pred_check_branch
        %376 = sbr.rel (%p373) target = $region64
      $region63: #{tpu_custom_call.1} parent=5 // pred_region
        %s377 = ssub.s32 %s20, 1
        %s378 = smul.u32 8, %s25
        %p379 = scmp.lt.s32.totalorder %s378, 15
        %s380 = scalar_select %p379, %s378, 15
        %s381 = smul.addr %s380, 8
        %s382 = scalar_lea.vmem %s0, %s381
        %p383 = pneg %p46
        %p384 = pneg %p43
        %s385 = smul.u32 8, %s25
        %p386 = scmp.lt.s32.totalorder %s385, 15
        %s387 = scalar_select %p386, %s385, 15
        %s388 = smul.addr %s387, 8
        %s389 = scalar_lea.vmem %s1, %s388
        %p390 = pneg %p72
        %p391 = pneg %p69
        %s392 = smul.u32 8, %s25
        %p393 = scmp.lt.s32.totalorder %s392, 15
        %s394 = scalar_select %p393, %s392, 15
        %s395 = smul.addr %s394, 8
        %s396 = scalar_lea.vmem %s2, %s395
        %p397 = pneg %p98
        %p398 = pneg %p95
        %p399 = scmp.lt.s32.totalorder %s25, 1
        %s400 = scalar_select %p399, %s25, 1
        %s401 = smul.addr %s400, 8
        %s402 = scalar_lea.vmem %s3, %s401
        %p403 = pneg %p124
        %p404 = pneg %p121
        %p405 = pneg %p145
        %p406 = pneg %p142
        %p407 = pneg %p166
        %p408 = pneg %p163
        %p409 = pneg %p187
        %p410 = pneg %p184
        %p411 = pneg %p208
        %p412 = pneg %p205
        %p413 = pneg %p229
        %p414 = pneg %p226
        %p415 = pneg %p250
        %p416 = pneg %p247
        %p417 = pneg %p271
        %p418 = pneg %p268
        %p419 = pneg %p297
        %p420 = pneg %p294
        %s421 = sand.u32 %s284, 1
        %s422 = scalar_lea.sflag [#allocation3], %s421
        %s423 = sand.u32 %s284, 1
        %s424 = smul.addr %s423, 8
        %s425 = scalar_lea.vmem [#allocation2], %s424
        %s426 = smul.u32 8, %s25
        %p427 = scmp.lt.s32.totalorder %s426, 15
        %s428 = scalar_select %p427, %s426, 15
        %s429 = smul.addr %s428, 8
        %s430 = scalar_lea.vmem %s0, %s429
        %s431 = smul.u32 8, %s25
        %s432 = smul.u32 8, %s25
        %p433 = scmp.lt.s32.totalorder %s432, 15
        %s434 = scalar_select %p433, %s432, 15
        %s435 = smul.addr %s434, 8
        %s436 = scalar_lea.vmem %s1, %s435
        %s437 = smul.u32 8, %s25
        %s438 = smul.u32 8, %s25
        %p439 = scmp.lt.s32.totalorder %s438, 15
        %s440 = scalar_select %p439, %s438, 15
        %s441 = smul.addr %s440, 8
        %s442 = scalar_lea.vmem %s2, %s441
        %s443 = smul.u32 8, %s25
        %p444 = scmp.lt.s32.totalorder %s25, 1
        %s445 = scalar_select %p444, %s25, 1
        %s446 = smul.addr %s445, 8
        %s447 = scalar_lea.vmem %s3, %s446
        %v448 = vld [vmem:[%s430] sm:$0xff]
        %v449 = vld [vmem:[%s430 + $0x8] sm:$0xff]
        %v450 = vld [vmem:[%s430 + $0x10] sm:$0xff]
        %v451 = vld [vmem:[%s430 + $0x18] sm:$0xff]
        %v452 = vld [vmem:[%s430 + $0x20] sm:$0xff]
        %v453 = vld [vmem:[%s430 + $0x28] sm:$0xff]
        %v454 = vld [vmem:[%s430 + $0x30] sm:$0xff]
        %v455 = vld [vmem:[%s430 + $0x38] sm:$0xff]
        %v456 = vld [vmem:[%s436] sm:$0xff]
        %v457 = vld [vmem:[%s436 + $0x8] sm:$0xff]
        %v458 = vld [vmem:[%s436 + $0x10] sm:$0xff]
        %v459 = vld [vmem:[%s436 + $0x18] sm:$0xff]
        %v460 = vld [vmem:[%s436 + $0x20] sm:$0xff]
        %v461 = vld [vmem:[%s436 + $0x28] sm:$0xff]
        %v462 = vld [vmem:[%s436 + $0x30] sm:$0xff]
        %v463 = vld [vmem:[%s436 + $0x38] sm:$0xff]
        %v464 = vld [vmem:[%s442] sm:$0xff]
        %v465 = vld [vmem:[%s442 + $0x8] sm:$0xff]
        %v466 = vld [vmem:[%s442 + $0x10] sm:$0xff]
        %v467 = vld [vmem:[%s442 + $0x18] sm:$0xff]
        %v468 = vld [vmem:[%s442 + $0x20] sm:$0xff]
        %v469 = vld [vmem:[%s442 + $0x28] sm:$0xff]
        %v470 = vld [vmem:[%s442 + $0x30] sm:$0xff]
        %v471 = vld [vmem:[%s442 + $0x38] sm:$0xff]
        %480 = vrot.lane.b32.xlu0 %v456, 3
        %v481 = vpop.permute.xlu0 %480
        %482 = vrot.lane.b32.xlu0 %v457, 3
        %v483 = vpop.permute.xlu0 %482
        %484 = vrot.lane.b32.xlu0 %v458, 3
        %v485 = vpop.permute.xlu0 %484
        %486 = vrot.lane.b32.xlu0 %v459, 3
        %v487 = vpop.permute.xlu0 %486
        %488 = vrot.lane.b32.xlu0 %v460, 3
        %v489 = vpop.permute.xlu0 %488
        %490 = vrot.lane.b32.xlu0 %v461, 3
        %v491 = vpop.permute.xlu0 %490
        %492 = vrot.lane.b32.xlu0 %v462, 3
        %v493 = vpop.permute.xlu0 %492
        %494 = vrot.lane.b32.xlu0 %v463, 3
        %v495 = vpop.permute.xlu0 %494
        %512 = vrot.lane.b32.xlu0 %v464, 6
        %v513 = vpop.permute.xlu0 %512
        %514 = vrot.lane.b32.xlu0 %v465, 6
        %v515 = vpop.permute.xlu0 %514
        %516 = vrot.lane.b32.xlu0 %v466, 6
        %v517 = vpop.permute.xlu0 %516
        %518 = vrot.lane.b32.xlu0 %v467, 6
        %v519 = vpop.permute.xlu0 %518
        %520 = vrot.lane.b32.xlu0 %v468, 6
        %v521 = vpop.permute.xlu0 %520
        %522 = vrot.lane.b32.xlu0 %v469, 6
        %v523 = vpop.permute.xlu0 %522
        %524 = vrot.lane.b32.xlu0 %v470, 6
        %v525 = vpop.permute.xlu0 %524
        %526 = vrot.lane.b32.xlu0 %v471, 6
        %v527 = vpop.permute.xlu0 %526
        %vm536 = vcmask 23552
        %v537 = vsel %vm536, %v448, %v481
        %v538 = vsel %vm536, %v449, %v483
        %v539 = vsel %vm536, %v450, %v485
        %v540 = vsel %vm536, %v451, %v487
        %v541 = vsel %vm536, %v452, %v489
        %v542 = vsel %vm536, %v453, %v491
        %v543 = vsel %vm536, %v454, %v493
        %v544 = vsel %vm536, %v455, %v495
        %vm545 = vcmask 48128
        %v546 = vsel %vm545, %v537, %v513
        %v547 = vsel %vm545, %v538, %v515
        %v548 = vsel %vm545, %v539, %v517
        %v549 = vsel %vm545, %v540, %v519
        %v550 = vsel %vm545, %v541, %v521
        %v551 = vsel %vm545, %v542, %v523
        %v552 = vsel %vm545, %v543, %v525
        %v553 = vsel %vm545, %v544, %v527
        %vm554 = vcmask 56320
        %v555 = vsel %vm554, %v546, 1.0
        %v556 = vsel %vm554, %v547, 1.0
        %v557 = vsel %vm554, %v548, 1.0
        %v558 = vsel %vm554, %v549, 1.0
        %v559 = vsel %vm554, %v550, 1.0
        %v560 = vsel %vm554, %v551, 1.0
        %v561 = vsel %vm554, %v552, 1.0
        %v562 = vsel %vm554, %v553, 1.0
        %v563 = vld [vmem:[%s4] sm:$0xff]
        %vm564 = vcmask 64512
        %v566 = vsel %vm564, %v555, 0
        %v569 = vsel %vm564, %v556, 0
        %v572 = vsel %vm564, %v557, 0
        %v575 = vsel %vm564, %v558, 0
        %v578 = vsel %vm564, %v559, 0
        %v581 = vsel %vm564, %v560, 0
        %v584 = vsel %vm564, %v561, 0
        %v587 = vsel %vm564, %v562, 0
        %589 = vmatprep.subr.mxu0 0.0
        %590 = vmatpush1.msra.mxu0 0.0
        %591 = vmatprep.subr.mxu0 0.0
        %592 = vmatpush1.msra.mxu0 0.0
        %593 = vmatprep.subr.mxu0 0.0
        %594 = vmatpush1.msra.mxu0 0.0
        %595 = vmatprep.subr.mxu0 0.0
        %596 = vmatpush1.msra.mxu0 0.0
        %597 = vmatprep.subr.mxu0 0.0
        %598 = vmatpush1.msra.mxu0 0.0
        %599 = vmatprep.subr.mxu0 0.0
        %600 = vmatpush1.msra.mxu0 0.0
        %601 = vmatprep.subr.mxu0 0.0
        %602 = vmatpush1.msra.mxu0 0.0
        %603 = vmatprep.subr.mxu0 0.0
        %604 = vmatpush1.msra.mxu0 0.0
        %605 = vmatprep.subr.mxu0 0.0
        %606 = vmatpush1.msra.mxu0 0.0
        %607 = vmatprep.subr.mxu0 0.0
        %608 = vmatpush1.msra.mxu0 0.0
        %609 = vmatprep.subr.mxu0 0.0
        %610 = vmatpush1.msra.mxu0 0.0
        %611 = vmatprep.subr.mxu0 0.0
        %612 = vmatpush1.msra.mxu0 0.0
        %613 = vmatprep.subr.mxu0 0.0
        %614 = vmatpush1.msra.mxu0 0.0
        %615 = vmatprep.subr.mxu0 0.0
        %616 = vmatpush1.msra.mxu0 0.0
        %617 = vmatprep.subr.mxu0 0.0
        %618 = vmatpush1.msra.mxu0 0.0
        %619 = vmatprep.subr.mxu0 0.0
        %620 = vmatpush1.msra.mxu0 %v563
        %621 = vmatprep.subr.mxu0 0.0
        %622 = vmatpush2.msra.mxu0 0.0
        %623 = vmatprep.subr.mxu0 0.0
        %624 = vmatpush2.msra.mxu0 0.0
        %625 = vmatprep.subr.mxu0 0.0
        %626 = vmatpush2.msra.mxu0 0.0
        %627 = vmatprep.subr.mxu0 0.0
        %628 = vmatpush2.msra.mxu0 0.0
        %629 = vmatprep.subr.mxu0 0.0
        %630 = vmatpush2.msra.mxu0 0.0
        %631 = vmatprep.subr.mxu0 0.0
        %632 = vmatpush2.msra.mxu0 0.0
        %633 = vmatprep.subr.mxu0 0.0
        %634 = vmatpush2.msra.mxu0 0.0
        %635 = vmatprep.subr.mxu0 0.0
        %636 = vmatpush2.msra.mxu0 0.0
        %637 = vmatprep.subr.mxu0 0.0
        %638 = vmatpush2.msra.mxu0 0.0
        %639 = vmatprep.subr.mxu0 0.0
        %640 = vmatpush2.msra.mxu0 0.0
        %641 = vmatprep.subr.mxu0 0.0
        %642 = vmatpush2.msra.mxu0 0.0
        %643 = vmatprep.subr.mxu0 0.0
        %644 = vmatpush2.msra.mxu0 0.0
        %645 = vmatprep.subr.mxu0 0.0
        %646 = vmatpush2.msra.mxu0 0.0
        %647 = vmatprep.subr.mxu0 0.0
        %648 = vmatpush2.msra.mxu0 0.0
        %649 = vmatprep.subr.mxu0 0.0
        %650 = vmatpush2.msra.mxu0 0.0
        %651 = vmatprep.subr.mxu0 0.0
        %652 = vmatpush2.msra.mxu0 0.0
        %653 = vmatprep.mubr.f32.mxu0 0.0
        %654 = vmatmul.mubr.f32.gmra.mxu0 %v566
        %v655 = vpop.f32.mrf.mxu0
        %v656 = vadd.f32 0.0, %v655
        %v657 = vpop.f32.mrf.mxu0
        %658 = vmatprep.mubr.f32.mxu0 0.0
        %659 = vmatmul.mubr.f32.gmra.mxu0 %v569
        %v660 = vpop.f32.mrf.mxu0
        %v661 = vadd.f32 0.0, %v660
        %v662 = vpop.f32.mrf.mxu0
        %663 = vmatprep.mubr.f32.mxu0 0.0
        %664 = vmatmul.mubr.f32.gmra.mxu0 %v572
        %v665 = vpop.f32.mrf.mxu0
        %v666 = vadd.f32 0.0, %v665
        %v667 = vpop.f32.mrf.mxu0
        %668 = vmatprep.mubr.f32.mxu0 0.0
        %669 = vmatmul.mubr.f32.gmra.mxu0 %v575
        %v670 = vpop.f32.mrf.mxu0
        %v671 = vadd.f32 0.0, %v670
        %v672 = vpop.f32.mrf.mxu0
        %673 = vmatprep.mubr.f32.mxu0 0.0
        %674 = vmatmul.mubr.f32.gmra.mxu0 %v578
        %v675 = vpop.f32.mrf.mxu0
        %v676 = vadd.f32 0.0, %v675
        %v677 = vpop.f32.mrf.mxu0
        %678 = vmatprep.mubr.f32.mxu0 0.0
        %679 = vmatmul.mubr.f32.gmra.mxu0 %v581
        %v680 = vpop.f32.mrf.mxu0
        %v681 = vadd.f32 0.0, %v680
        %v682 = vpop.f32.mrf.mxu0
        %683 = vmatprep.mubr.f32.mxu0 0.0
        %684 = vmatmul.mubr.f32.gmra.mxu0 %v584
        %v685 = vpop.f32.mrf.mxu0
        %v686 = vadd.f32 0.0, %v685
        %v687 = vpop.f32.mrf.mxu0
        %688 = vmatprep.mubr.f32.mxu0 0.0
        %689 = vmatmul.mubr.f32.gmra.mxu0 %v587
        %v690 = vpop.f32.mrf.mxu0
        %v691 = vadd.f32 0.0, %v690
        %v692 = vpop.f32.mrf.mxu0
        %693 = vdwg.mxu0
        %v694 = vand.u32 2147483647, %v656
        %vm695 = vcmp.le.f32.partialorder %v694, 0.7853982
        %vm696 = vcmp.lt.s32.totalorder %v656, 0
        %v697 = vand.u32 %v656, 2139095040
        %v698 = vshrl.u32 %v697, 23
        %v699 = vsub.s32 %v698, 127
        %v700 = vand.u32 2147483647, %v656
        %v701 = vand.u32 %v700, 8388607
        %v702 = vor.u32 %v701, 8388608
        %v703 = vsub.s32 0, %v702
        %v704 = vadd.s32 %v699, 1
        %vm705 = vcmp.gt.s32.totalorder %v704, 0
        %v706 = vsel %vm705, %v704, 0
        %v707 = vshrl.u32 %v706, 5
        %v708 = vand.u32 %v706, 31
        %v709 = vsub.s32 32, %v708
        %v710 = vshrl.u32 683565275, %v709
        %v711 = vshll.u32 683565275, %v708
        %v712 = vshrl.u32 2475754826, %v709
        %v713 = vor.u32 %v711, %v712
        %v714 = vshll.u32 2475754826, %v708
        %v715 = vshrl.u32 2131351028, %v709
        %v716 = vor.u32 %v714, %v715
        %v717 = vshll.u32 2131351028, %v708
        %v718 = vshrl.u32 2102212464, %v709
        %v719 = vor.u32 %v717, %v718
        %v720 = vshll.u32 2102212464, %v708
        %v721 = vshrl.u32 920167782, %v709
        %v722 = vor.u32 %v720, %v721
        %v723 = vshll.u32 920167782, %v708
        %v724 = vshrl.u32 1326507024, %v709
        %v725 = vor.u32 %v723, %v724
        %vm726 = vcmp.lt.s32.totalorder %v707, 1
        %vm727 = vcmp.lt.s32.totalorder %v707, 2
        %vm728 = vcmp.lt.s32.totalorder %v707, 3
        %vm729 = vcmp.lt.s32.totalorder %v707, 4
        %v730 = vsel %vm726, %v710, %v713
        %v731 = vsel %vm729, %v719, 2102212464
        %v732 = vsel %vm728, %v716, %v731
        %v733 = vsel %vm727, %v730, %v732
        %v734 = vsel %vm726, %v713, %v716
        %v735 = vsel %vm729, %v722, 920167782
        %v736 = vsel %vm728, %v719, %v735
        %v737 = vsel %vm727, %v734, %v736
        %v738 = vsel %vm726, %v716, %v719
        %v739 = vsel %vm729, %v725, 1326507024
        %v740 = vsel %vm728, %v722, %v739
        %v741 = vsel %vm727, %v738, %v740
        %v742 = vshll.u32 %v702, 8
        %v743 = vmul.u32.u64.compose %v742, %v741
        %v744 = vextract.low.u32 %v743
        %v745 = vextract.high.u32 %v743
        %v746 = vmul.u32.u64.compose %v742, %v737
        %v747 = vextract.low.u32 %v746
        %v748 = vextract.high.u32 %v746
        %v749 = vmul.u32 %v742, %v733
        %v750 = vadd.s32 %v745, %v747
        %vm751 = vc.u32 %v745, %v747
        %v752 = vadd.s32 %v748, 1
        %v753 = vsel %vm751, %v752, %v748
        %v754 = vadd.s32 %v749, %v753
        %v755 = vadd.s32 %v754, 536870912
        %v756 = vshrl.u32 %v755, 30
        %v757 = vshll.u32 %v756, 30
        %v758 = vsub.s32 %v754, %v757
        %vm759 = vcmp.lt.s32.totalorder %v758, 0
        %v760 = vsub.s32 0, %v758
        %v761 = vsel %vm759, %v760, %v758
        %v762 = vclz %v761
        %v763 = vsub.s32 %v762, 2
        %vm764 = vcmp.gt.s32.totalorder 0, %v763
        %v765 = vsel %vm764, 0, %v763
        %v766 = vsub.s32 32, %v765
        %v767 = vshll.u32 %v758, %v765
        %v768 = vshrl.u32 %v750, %v766
        %v769 = vor.u32 %v767, %v768
        %v770 = vsub.s32 4294967266, %v765
        %v771 = vadd.s32 %v770, 127
        %v772 = vshll.u32 %v771, 23
        %v773 = vor.u32 4788187, %v772
        %v774 = vand.u32 2147483647, %v773
        %v776 = vcvt.s32.f32 %v769
        %v777 = vmul.f32 %v776, %v774
        %v778 = vxor.u32 %v777, 2147483648
        %v779 = vsel %vm696, %v778, %v777
        %v780 = vsub.s32 4, %v756
        %v781 = vsel %vm696, %v780, %v756
        %v782 = vsel %vm695, %v656, %v779
        %v783 = vsel %vm695, 0, %v781
        %v784 = vcosq.f32.pop %v782
        %v785 = vsinq.f32.pop %v782
        %vm786 = vweird.f32 %v656
        %v787 = vadd.s32 %v783, 3
        %v788 = vand.u32 %v787, 3
        %vm789 = vcmp.lt.s32.totalorder %v788, 2
        %vm790 = vcmp.eq.s32.totalorder %v788, 0
        %v791 = vxor.u32 %v785, 2147483648
        %v792 = vsel %vm790, %v784, %v791
        %vm793 = vcmp.eq.s32.totalorder %v788, 2
        %v794 = vxor.u32 %v784, 2147483648
        %v795 = vsel %vm793, %v794, %v785
        %v796 = vsel %vm789, %v792, %v795
        %v797 = vsel %vm786, nan, %v796
        %v798 = vand.u32 2147483647, %v661
        %vm799 = vcmp.le.f32.partialorder %v798, 0.7853982
        %vm800 = vcmp.lt.s32.totalorder %v661, 0
        %v801 = vand.u32 %v661, 2139095040
        %v802 = vshrl.u32 %v801, 23
        %v803 = vsub.s32 %v802, 127
        %v804 = vand.u32 2147483647, %v661
        %v805 = vand.u32 %v804, 8388607
        %v806 = vor.u32 %v805, 8388608
        %v807 = vsub.s32 0, %v806
        %v808 = vadd.s32 %v803, 1
        %vm809 = vcmp.gt.s32.totalorder %v808, 0
        %v810 = vsel %vm809, %v808, 0
        %v811 = vshrl.u32 %v810, 5
        %v812 = vand.u32 %v810, 31
        %v813 = vsub.s32 32, %v812
        %v814 = vshrl.u32 683565275, %v813
        %v815 = vshll.u32 683565275, %v812
        %v816 = vshrl.u32 2475754826, %v813
        %v817 = vor.u32 %v815, %v816
        %v818 = vshll.u32 2475754826, %v812
        %v819 = vshrl.u32 2131351028, %v813
        %v820 = vor.u32 %v818, %v819
        %v821 = vshll.u32 2131351028, %v812
        %v822 = vshrl.u32 2102212464, %v813
        %v823 = vor.u32 %v821, %v822
        %v824 = vshll.u32 2102212464, %v812
        %v825 = vshrl.u32 920167782, %v813
        %v826 = vor.u32 %v824, %v825
        %v827 = vshll.u32 920167782, %v812
        %v828 = vshrl.u32 1326507024, %v813
        %v829 = vor.u32 %v827, %v828
        %vm830 = vcmp.lt.s32.totalorder %v811, 1
        %vm831 = vcmp.lt.s32.totalorder %v811, 2
        %vm832 = vcmp.lt.s32.totalorder %v811, 3
        %vm833 = vcmp.lt.s32.totalorder %v811, 4
        %v834 = vsel %vm830, %v814, %v817
        %v835 = vsel %vm833, %v823, 2102212464
        %v836 = vsel %vm832, %v820, %v835
        %v837 = vsel %vm831, %v834, %v836
        %v838 = vsel %vm830, %v817, %v820
        %v839 = vsel %vm833, %v826, 920167782
        %v840 = vsel %vm832, %v823, %v839
        %v841 = vsel %vm831, %v838, %v840
        %v842 = vsel %vm830, %v820, %v823
        %v843 = vsel %vm833, %v829, 1326507024
        %v844 = vsel %vm832, %v826, %v843
        %v845 = vsel %vm831, %v842, %v844
        %v846 = vshll.u32 %v806, 8
        %v847 = vmul.u32.u64.compose %v846, %v845
        %v848 = vextract.low.u32 %v847
        %v849 = vextract.high.u32 %v847
        %v850 = vmul.u32.u64.compose %v846, %v841
        %v851 = vextract.low.u32 %v850
        %v852 = vextract.high.u32 %v850
        %v853 = vmul.u32 %v846, %v837
        %v854 = vadd.s32 %v849, %v851
        %vm855 = vc.u32 %v849, %v851
        %v856 = vadd.s32 %v852, 1
        %v857 = vsel %vm855, %v856, %v852
        %v858 = vadd.s32 %v853, %v857
        %v859 = vadd.s32 %v858, 536870912
        %v860 = vshrl.u32 %v859, 30
        %v861 = vshll.u32 %v860, 30
        %v862 = vsub.s32 %v858, %v861
        %vm863 = vcmp.lt.s32.totalorder %v862, 0
        %v864 = vsub.s32 0, %v862
        %v865 = vsel %vm863, %v864, %v862
        %v866 = vclz %v865
        %v867 = vsub.s32 %v866, 2
        %vm868 = vcmp.gt.s32.totalorder 0, %v867
        %v869 = vsel %vm868, 0, %v867
        %v870 = vsub.s32 32, %v869
        %v871 = vshll.u32 %v862, %v869
        %v872 = vshrl.u32 %v854, %v870
        %v873 = vor.u32 %v871, %v872
        %v874 = vsub.s32 4294967266, %v869
        %v875 = vadd.s32 %v874, 127
        %v876 = vshll.u32 %v875, 23
        %v877 = vor.u32 4788187, %v876
        %v878 = vand.u32 2147483647, %v877
        %v880 = vcvt.s32.f32 %v873
        %v881 = vmul.f32 %v880, %v878
        %v882 = vxor.u32 %v881, 2147483648
        %v883 = vsel %vm800, %v882, %v881
        %v884 = vsub.s32 4, %v860
        %v885 = vsel %vm800, %v884, %v860
        %v886 = vsel %vm799, %v661, %v883
        %v887 = vsel %vm799, 0, %v885
        %v888 = vcosq.f32.pop %v886
        %v889 = vsinq.f32.pop %v886
        %vm890 = vweird.f32 %v661
        %v891 = vadd.s32 %v887, 3
        %v892 = vand.u32 %v891, 3
        %vm893 = vcmp.lt.s32.totalorder %v892, 2
        %vm894 = vcmp.eq.s32.totalorder %v892, 0
        %v895 = vxor.u32 %v889, 2147483648
        %v896 = vsel %vm894, %v888, %v895
        %vm897 = vcmp.eq.s32.totalorder %v892, 2
        %v898 = vxor.u32 %v888, 2147483648
        %v899 = vsel %vm897, %v898, %v889
        %v900 = vsel %vm893, %v896, %v899
        %v901 = vsel %vm890, nan, %v900
        %v902 = vand.u32 2147483647, %v666
        %vm903 = vcmp.le.f32.partialorder %v902, 0.7853982
        %vm904 = vcmp.lt.s32.totalorder %v666, 0
        %v905 = vand.u32 %v666, 2139095040
        %v906 = vshrl.u32 %v905, 23
        %v907 = vsub.s32 %v906, 127
        %v908 = vand.u32 2147483647, %v666
        %v909 = vand.u32 %v908, 8388607
        %v910 = vor.u32 %v909, 8388608
        %v911 = vsub.s32 0, %v910
        %v912 = vadd.s32 %v907, 1
        %vm913 = vcmp.gt.s32.totalorder %v912, 0
        %v914 = vsel %vm913, %v912, 0
        %v915 = vshrl.u32 %v914, 5
        %v916 = vand.u32 %v914, 31
        %v917 = vsub.s32 32, %v916
        %v918 = vshrl.u32 683565275, %v917
        %v919 = vshll.u32 683565275, %v916
        %v920 = vshrl.u32 2475754826, %v917
        %v921 = vor.u32 %v919, %v920
        %v922 = vshll.u32 2475754826, %v916
        %v923 = vshrl.u32 2131351028, %v917
        %v924 = vor.u32 %v922, %v923
        %v925 = vshll.u32 2131351028, %v916
        %v926 = vshrl.u32 2102212464, %v917
        %v927 = vor.u32 %v925, %v926
        %v928 = vshll.u32 2102212464, %v916
        %v929 = vshrl.u32 920167782, %v917
        %v930 = vor.u32 %v928, %v929
        %v931 = vshll.u32 920167782, %v916
        %v932 = vshrl.u32 1326507024, %v917
        %v933 = vor.u32 %v931, %v932
        %vm934 = vcmp.lt.s32.totalorder %v915, 1
        %vm935 = vcmp.lt.s32.totalorder %v915, 2
        %vm936 = vcmp.lt.s32.totalorder %v915, 3
        %vm937 = vcmp.lt.s32.totalorder %v915, 4
        %v938 = vsel %vm934, %v918, %v921
        %v939 = vsel %vm937, %v927, 2102212464
        %v940 = vsel %vm936, %v924, %v939
        %v941 = vsel %vm935, %v938, %v940
        %v942 = vsel %vm934, %v921, %v924
        %v943 = vsel %vm937, %v930, 920167782
        %v944 = vsel %vm936, %v927, %v943
        %v945 = vsel %vm935, %v942, %v944
        %v946 = vsel %vm934, %v924, %v927
        %v947 = vsel %vm937, %v933, 1326507024
        %v948 = vsel %vm936, %v930, %v947
        %v949 = vsel %vm935, %v946, %v948
        %v950 = vshll.u32 %v910, 8
        %v951 = vmul.u32.u64.compose %v950, %v949
        %v952 = vextract.low.u32 %v951
        %v953 = vextract.high.u32 %v951
        %v954 = vmul.u32.u64.compose %v950, %v945
        %v955 = vextract.low.u32 %v954
        %v956 = vextract.high.u32 %v954
        %v957 = vmul.u32 %v950, %v941
        %v958 = vadd.s32 %v953, %v955
        %vm959 = vc.u32 %v953, %v955
        %v960 = vadd.s32 %v956, 1
        %v961 = vsel %vm959, %v960, %v956
        %v962 = vadd.s32 %v957, %v961
        %v963 = vadd.s32 %v962, 536870912
        %v964 = vshrl.u32 %v963, 30
        %v965 = vshll.u32 %v964, 30
        %v966 = vsub.s32 %v962, %v965
        %vm967 = vcmp.lt.s32.totalorder %v966, 0
        %v968 = vsub.s32 0, %v966
        %v969 = vsel %vm967, %v968, %v966
        %v970 = vclz %v969
        %v971 = vsub.s32 %v970, 2
        %vm972 = vcmp.gt.s32.totalorder 0, %v971
        %v973 = vsel %vm972, 0, %v971
        %v974 = vsub.s32 32, %v973
        %v975 = vshll.u32 %v966, %v973
        %v976 = vshrl.u32 %v958, %v974
        %v977 = vor.u32 %v975, %v976
        %v978 = vsub.s32 4294967266, %v973
        %v979 = vadd.s32 %v978, 127
        %v980 = vshll.u32 %v979, 23
        %v981 = vor.u32 4788187, %v980
        %v982 = vand.u32 2147483647, %v981
        %v984 = vcvt.s32.f32 %v977
        %v985 = vmul.f32 %v984, %v982
        %v986 = vxor.u32 %v985, 2147483648
        %v987 = vsel %vm904, %v986, %v985
        %v988 = vsub.s32 4, %v964
        %v989 = vsel %vm904, %v988, %v964
        %v990 = vsel %vm903, %v666, %v987
        %v991 = vsel %vm903, 0, %v989
        %v992 = vcosq.f32.pop %v990
        %v993 = vsinq.f32.pop %v990
        %vm994 = vweird.f32 %v666
        %v995 = vadd.s32 %v991, 3
        %v996 = vand.u32 %v995, 3
        %vm997 = vcmp.lt.s32.totalorder %v996, 2
        %vm998 = vcmp.eq.s32.totalorder %v996, 0
        %v999 = vxor.u32 %v993, 2147483648
        %v1000 = vsel %vm998, %v992, %v999
        %vm1001 = vcmp.eq.s32.totalorder %v996, 2
        %v1002 = vxor.u32 %v992, 2147483648
        %v1003 = vsel %vm1001, %v1002, %v993
        %v1004 = vsel %vm997, %v1000, %v1003
        %v1005 = vsel %vm994, nan, %v1004
        %v1006 = vand.u32 2147483647, %v671
        %vm1007 = vcmp.le.f32.partialorder %v1006, 0.7853982
        %vm1008 = vcmp.lt.s32.totalorder %v671, 0
        %v1009 = vand.u32 %v671, 2139095040
        %v1010 = vshrl.u32 %v1009, 23
        %v1011 = vsub.s32 %v1010, 127
        %v1012 = vand.u32 2147483647, %v671
        %v1013 = vand.u32 %v1012, 8388607
        %v1014 = vor.u32 %v1013, 8388608
        %v1015 = vsub.s32 0, %v1014
        %v1016 = vadd.s32 %v1011, 1
        %vm1017 = vcmp.gt.s32.totalorder %v1016, 0
        %v1018 = vsel %vm1017, %v1016, 0
        %v1019 = vshrl.u32 %v1018, 5
        %v1020 = vand.u32 %v1018, 31
        %v1021 = vsub.s32 32, %v1020
        %v1022 = vshrl.u32 683565275, %v1021
        %v1023 = vshll.u32 683565275, %v1020
        %v1024 = vshrl.u32 2475754826, %v1021
        %v1025 = vor.u32 %v1023, %v1024
        %v1026 = vshll.u32 2475754826, %v1020
        %v1027 = vshrl.u32 2131351028, %v1021
        %v1028 = vor.u32 %v1026, %v1027
        %v1029 = vshll.u32 2131351028, %v1020
        %v1030 = vshrl.u32 2102212464, %v1021
        %v1031 = vor.u32 %v1029, %v1030
        %v1032 = vshll.u32 2102212464, %v1020
        %v1033 = vshrl.u32 920167782, %v1021
        %v1034 = vor.u32 %v1032, %v1033
        %v1035 = vshll.u32 920167782, %v1020
        %v1036 = vshrl.u32 1326507024, %v1021
        %v1037 = vor.u32 %v1035, %v1036
        %vm1038 = vcmp.lt.s32.totalorder %v1019, 1
        %vm1039 = vcmp.lt.s32.totalorder %v1019, 2
        %vm1040 = vcmp.lt.s32.totalorder %v1019, 3
        %vm1041 = vcmp.lt.s32.totalorder %v1019, 4
        %v1042 = vsel %vm1038, %v1022, %v1025
        %v1043 = vsel %vm1041, %v1031, 2102212464
        %v1044 = vsel %vm1040, %v1028, %v1043
        %v1045 = vsel %vm1039, %v1042, %v1044
        %v1046 = vsel %vm1038, %v1025, %v1028
        %v1047 = vsel %vm1041, %v1034, 920167782
        %v1048 = vsel %vm1040, %v1031, %v1047
        %v1049 = vsel %vm1039, %v1046, %v1048
        %v1050 = vsel %vm1038, %v1028, %v1031
        %v1051 = vsel %vm1041, %v1037, 1326507024
        %v1052 = vsel %vm1040, %v1034, %v1051
        %v1053 = vsel %vm1039, %v1050, %v1052
        %v1054 = vshll.u32 %v1014, 8
        %v1055 = vmul.u32.u64.compose %v1054, %v1053
        %v1056 = vextract.low.u32 %v1055
        %v1057 = vextract.high.u32 %v1055
        %v1058 = vmul.u32.u64.compose %v1054, %v1049
        %v1059 = vextract.low.u32 %v1058
        %v1060 = vextract.high.u32 %v1058
        %v1061 = vmul.u32 %v1054, %v1045
        %v1062 = vadd.s32 %v1057, %v1059
        %vm1063 = vc.u32 %v1057, %v1059
        %v1064 = vadd.s32 %v1060, 1
        %v1065 = vsel %vm1063, %v1064, %v1060
        %v1066 = vadd.s32 %v1061, %v1065
        %v1067 = vadd.s32 %v1066, 536870912
        %v1068 = vshrl.u32 %v1067, 30
        %v1069 = vshll.u32 %v1068, 30
        %v1070 = vsub.s32 %v1066, %v1069
        %vm1071 = vcmp.lt.s32.totalorder %v1070, 0
        %v1072 = vsub.s32 0, %v1070
        %v1073 = vsel %vm1071, %v1072, %v1070
        %v1074 = vclz %v1073
        %v1075 = vsub.s32 %v1074, 2
        %vm1076 = vcmp.gt.s32.totalorder 0, %v1075
        %v1077 = vsel %vm1076, 0, %v1075
        %v1078 = vsub.s32 32, %v1077
        %v1079 = vshll.u32 %v1070, %v1077
        %v1080 = vshrl.u32 %v1062, %v1078
        %v1081 = vor.u32 %v1079, %v1080
        %v1082 = vsub.s32 4294967266, %v1077
        %v1083 = vadd.s32 %v1082, 127
        %v1084 = vshll.u32 %v1083, 23
        %v1085 = vor.u32 4788187, %v1084
        %v1086 = vand.u32 2147483647, %v1085
        %v1088 = vcvt.s32.f32 %v1081
        %v1089 = vmul.f32 %v1088, %v1086
        %v1090 = vxor.u32 %v1089, 2147483648
        %v1091 = vsel %vm1008, %v1090, %v1089
        %v1092 = vsub.s32 4, %v1068
        %v1093 = vsel %vm1008, %v1092, %v1068
        %v1094 = vsel %vm1007, %v671, %v1091
        %v1095 = vsel %vm1007, 0, %v1093
        %v1096 = vcosq.f32.pop %v1094
        %v1097 = vsinq.f32.pop %v1094
        %vm1098 = vweird.f32 %v671
        %v1099 = vadd.s32 %v1095, 3
        %v1100 = vand.u32 %v1099, 3
        %vm1101 = vcmp.lt.s32.totalorder %v1100, 2
        %vm1102 = vcmp.eq.s32.totalorder %v1100, 0
        %v1103 = vxor.u32 %v1097, 2147483648
        %v1104 = vsel %vm1102, %v1096, %v1103
        %vm1105 = vcmp.eq.s32.totalorder %v1100, 2
        %v1106 = vxor.u32 %v1096, 2147483648
        %v1107 = vsel %vm1105, %v1106, %v1097
        %v1108 = vsel %vm1101, %v1104, %v1107
        %v1109 = vsel %vm1098, nan, %v1108
        %v1110 = vand.u32 2147483647, %v676
        %vm1111 = vcmp.le.f32.partialorder %v1110, 0.7853982
        %vm1112 = vcmp.lt.s32.totalorder %v676, 0
        %v1113 = vand.u32 %v676, 2139095040
        %v1114 = vshrl.u32 %v1113, 23
        %v1115 = vsub.s32 %v1114, 127
        %v1116 = vand.u32 2147483647, %v676
        %v1117 = vand.u32 %v1116, 8388607
        %v1118 = vor.u32 %v1117, 8388608
        %v1119 = vsub.s32 0, %v1118
        %v1120 = vadd.s32 %v1115, 1
        %vm1121 = vcmp.gt.s32.totalorder %v1120, 0
        %v1122 = vsel %vm1121, %v1120, 0
        %v1123 = vshrl.u32 %v1122, 5
        %v1124 = vand.u32 %v1122, 31
        %v1125 = vsub.s32 32, %v1124
        %v1126 = vshrl.u32 683565275, %v1125
        %v1127 = vshll.u32 683565275, %v1124
        %v1128 = vshrl.u32 2475754826, %v1125
        %v1129 = vor.u32 %v1127, %v1128
        %v1130 = vshll.u32 2475754826, %v1124
        %v1131 = vshrl.u32 2131351028, %v1125
        %v1132 = vor.u32 %v1130, %v1131
        %v1133 = vshll.u32 2131351028, %v1124
        %v1134 = vshrl.u32 2102212464, %v1125
        %v1135 = vor.u32 %v1133, %v1134
        %v1136 = vshll.u32 2102212464, %v1124
        %v1137 = vshrl.u32 920167782, %v1125
        %v1138 = vor.u32 %v1136, %v1137
        %v1139 = vshll.u32 920167782, %v1124
        %v1140 = vshrl.u32 1326507024, %v1125
        %v1141 = vor.u32 %v1139, %v1140
        %vm1142 = vcmp.lt.s32.totalorder %v1123, 1
        %vm1143 = vcmp.lt.s32.totalorder %v1123, 2
        %vm1144 = vcmp.lt.s32.totalorder %v1123, 3
        %vm1145 = vcmp.lt.s32.totalorder %v1123, 4
        %v1146 = vsel %vm1142, %v1126, %v1129
        %v1147 = vsel %vm1145, %v1135, 2102212464
        %v1148 = vsel %vm1144, %v1132, %v1147
        %v1149 = vsel %vm1143, %v1146, %v1148
        %v1150 = vsel %vm1142, %v1129, %v1132
        %v1151 = vsel %vm1145, %v1138, 920167782
        %v1152 = vsel %vm1144, %v1135, %v1151
        %v1153 = vsel %vm1143, %v1150, %v1152
        %v1154 = vsel %vm1142, %v1132, %v1135
        %v1155 = vsel %vm1145, %v1141, 1326507024
        %v1156 = vsel %vm1144, %v1138, %v1155
        %v1157 = vsel %vm1143, %v1154, %v1156
        %v1158 = vshll.u32 %v1118, 8
        %v1159 = vmul.u32.u64.compose %v1158, %v1157
        %v1160 = vextract.low.u32 %v1159
        %v1161 = vextract.high.u32 %v1159
        %v1162 = vmul.u32.u64.compose %v1158, %v1153
        %v1163 = vextract.low.u32 %v1162
        %v1164 = vextract.high.u32 %v1162
        %v1165 = vmul.u32 %v1158, %v1149
        %v1166 = vadd.s32 %v1161, %v1163
        %vm1167 = vc.u32 %v1161, %v1163
        %v1168 = vadd.s32 %v1164, 1
        %v1169 = vsel %vm1167, %v1168, %v1164
        %v1170 = vadd.s32 %v1165, %v1169
        %v1171 = vadd.s32 %v1170, 536870912
        %v1172 = vshrl.u32 %v1171, 30
        %v1173 = vshll.u32 %v1172, 30
        %v1174 = vsub.s32 %v1170, %v1173
        %vm1175 = vcmp.lt.s32.totalorder %v1174, 0
        %v1176 = vsub.s32 0, %v1174
        %v1177 = vsel %vm1175, %v1176, %v1174
        %v1178 = vclz %v1177
        %v1179 = vsub.s32 %v1178, 2
        %vm1180 = vcmp.gt.s32.totalorder 0, %v1179
        %v1181 = vsel %vm1180, 0, %v1179
        %v1182 = vsub.s32 32, %v1181
        %v1183 = vshll.u32 %v1174, %v1181
        %v1184 = vshrl.u32 %v1166, %v1182
        %v1185 = vor.u32 %v1183, %v1184
        %v1186 = vsub.s32 4294967266, %v1181
        %v1187 = vadd.s32 %v1186, 127
        %v1188 = vshll.u32 %v1187, 23
        %v1189 = vor.u32 4788187, %v1188
        %v1190 = vand.u32 2147483647, %v1189
        %v1192 = vcvt.s32.f32 %v1185
        %v1193 = vmul.f32 %v1192, %v1190
        %v1194 = vxor.u32 %v1193, 2147483648
        %v1195 = vsel %vm1112, %v1194, %v1193
        %v1196 = vsub.s32 4, %v1172
        %v1197 = vsel %vm1112, %v1196, %v1172
        %v1198 = vsel %vm1111, %v676, %v1195
        %v1199 = vsel %vm1111, 0, %v1197
        %v1200 = vcosq.f32.pop %v1198
        %v1201 = vsinq.f32.pop %v1198
        %vm1202 = vweird.f32 %v676
        %v1203 = vadd.s32 %v1199, 3
        %v1204 = vand.u32 %v1203, 3
        %vm1205 = vcmp.lt.s32.totalorder %v1204, 2
        %vm1206 = vcmp.eq.s32.totalorder %v1204, 0
        %v1207 = vxor.u32 %v1201, 2147483648
        %v1208 = vsel %vm1206, %v1200, %v1207
        %vm1209 = vcmp.eq.s32.totalorder %v1204, 2
        %v1210 = vxor.u32 %v1200, 2147483648
        %v1211 = vsel %vm1209, %v1210, %v1201
        %v1212 = vsel %vm1205, %v1208, %v1211
        %v1213 = vsel %vm1202, nan, %v1212
        %v1214 = vand.u32 2147483647, %v681
        %vm1215 = vcmp.le.f32.partialorder %v1214, 0.7853982
        %vm1216 = vcmp.lt.s32.totalorder %v681, 0
        %v1217 = vand.u32 %v681, 2139095040
        %v1218 = vshrl.u32 %v1217, 23
        %v1219 = vsub.s32 %v1218, 127
        %v1220 = vand.u32 2147483647, %v681
        %v1221 = vand.u32 %v1220, 8388607
        %v1222 = vor.u32 %v1221, 8388608
        %v1223 = vsub.s32 0, %v1222
        %v1224 = vadd.s32 %v1219, 1
        %vm1225 = vcmp.gt.s32.totalorder %v1224, 0
        %v1226 = vsel %vm1225, %v1224, 0
        %v1227 = vshrl.u32 %v1226, 5
        %v1228 = vand.u32 %v1226, 31
        %v1229 = vsub.s32 32, %v1228
        %v1230 = vshrl.u32 683565275, %v1229
        %v1231 = vshll.u32 683565275, %v1228
        %v1232 = vshrl.u32 2475754826, %v1229
        %v1233 = vor.u32 %v1231, %v1232
        %v1234 = vshll.u32 2475754826, %v1228
        %v1235 = vshrl.u32 2131351028, %v1229
        %v1236 = vor.u32 %v1234, %v1235
        %v1237 = vshll.u32 2131351028, %v1228
        %v1238 = vshrl.u32 2102212464, %v1229
        %v1239 = vor.u32 %v1237, %v1238
        %v1240 = vshll.u32 2102212464, %v1228
        %v1241 = vshrl.u32 920167782, %v1229
        %v1242 = vor.u32 %v1240, %v1241
        %v1243 = vshll.u32 920167782, %v1228
        %v1244 = vshrl.u32 1326507024, %v1229
        %v1245 = vor.u32 %v1243, %v1244
        %vm1246 = vcmp.lt.s32.totalorder %v1227, 1
        %vm1247 = vcmp.lt.s32.totalorder %v1227, 2
        %vm1248 = vcmp.lt.s32.totalorder %v1227, 3
        %vm1249 = vcmp.lt.s32.totalorder %v1227, 4
        %v1250 = vsel %vm1246, %v1230, %v1233
        %v1251 = vsel %vm1249, %v1239, 2102212464
        %v1252 = vsel %vm1248, %v1236, %v1251
        %v1253 = vsel %vm1247, %v1250, %v1252
        %v1254 = vsel %vm1246, %v1233, %v1236
        %v1255 = vsel %vm1249, %v1242, 920167782
        %v1256 = vsel %vm1248, %v1239, %v1255
        %v1257 = vsel %vm1247, %v1254, %v1256
        %v1258 = vsel %vm1246, %v1236, %v1239
        %v1259 = vsel %vm1249, %v1245, 1326507024
        %v1260 = vsel %vm1248, %v1242, %v1259
        %v1261 = vsel %vm1247, %v1258, %v1260
        %v1262 = vshll.u32 %v1222, 8
        %v1263 = vmul.u32.u64.compose %v1262, %v1261
        %v1264 = vextract.low.u32 %v1263
        %v1265 = vextract.high.u32 %v1263
        %v1266 = vmul.u32.u64.compose %v1262, %v1257
        %v1267 = vextract.low.u32 %v1266
        %v1268 = vextract.high.u32 %v1266
        %v1269 = vmul.u32 %v1262, %v1253
        %v1270 = vadd.s32 %v1265, %v1267
        %vm1271 = vc.u32 %v1265, %v1267
        %v1272 = vadd.s32 %v1268, 1
        %v1273 = vsel %vm1271, %v1272, %v1268
        %v1274 = vadd.s32 %v1269, %v1273
        %v1275 = vadd.s32 %v1274, 536870912
        %v1276 = vshrl.u32 %v1275, 30
        %v1277 = vshll.u32 %v1276, 30
        %v1278 = vsub.s32 %v1274, %v1277
        %vm1279 = vcmp.lt.s32.totalorder %v1278, 0
        %v1280 = vsub.s32 0, %v1278
        %v1281 = vsel %vm1279, %v1280, %v1278
        %v1282 = vclz %v1281
        %v1283 = vsub.s32 %v1282, 2
        %vm1284 = vcmp.gt.s32.totalorder 0, %v1283
        %v1285 = vsel %vm1284, 0, %v1283
        %v1286 = vsub.s32 32, %v1285
        %v1287 = vshll.u32 %v1278, %v1285
        %v1288 = vshrl.u32 %v1270, %v1286
        %v1289 = vor.u32 %v1287, %v1288
        %v1290 = vsub.s32 4294967266, %v1285
        %v1291 = vadd.s32 %v1290, 127
        %v1292 = vshll.u32 %v1291, 23
        %v1293 = vor.u32 4788187, %v1292
        %v1294 = vand.u32 2147483647, %v1293
        %v1296 = vcvt.s32.f32 %v1289
        %v1297 = vmul.f32 %v1296, %v1294
        %v1298 = vxor.u32 %v1297, 2147483648
        %v1299 = vsel %vm1216, %v1298, %v1297
        %v1300 = vsub.s32 4, %v1276
        %v1301 = vsel %vm1216, %v1300, %v1276
        %v1302 = vsel %vm1215, %v681, %v1299
        %v1303 = vsel %vm1215, 0, %v1301
        %v1304 = vcosq.f32.pop %v1302
        %v1305 = vsinq.f32.pop %v1302
        %vm1306 = vweird.f32 %v681
        %v1307 = vadd.s32 %v1303, 3
        %v1308 = vand.u32 %v1307, 3
        %vm1309 = vcmp.lt.s32.totalorder %v1308, 2
        %vm1310 = vcmp.eq.s32.totalorder %v1308, 0
        %v1311 = vxor.u32 %v1305, 2147483648
        %v1312 = vsel %vm1310, %v1304, %v1311
        %vm1313 = vcmp.eq.s32.totalorder %v1308, 2
        %v1314 = vxor.u32 %v1304, 2147483648
        %v1315 = vsel %vm1313, %v1314, %v1305
        %v1316 = vsel %vm1309, %v1312, %v1315
        %v1317 = vsel %vm1306, nan, %v1316
        %v1318 = vand.u32 2147483647, %v686
        %vm1319 = vcmp.le.f32.partialorder %v1318, 0.7853982
        %vm1320 = vcmp.lt.s32.totalorder %v686, 0
        %v1321 = vand.u32 %v686, 2139095040
        %v1322 = vshrl.u32 %v1321, 23
        %v1323 = vsub.s32 %v1322, 127
        %v1324 = vand.u32 2147483647, %v686
        %v1325 = vand.u32 %v1324, 8388607
        %v1326 = vor.u32 %v1325, 8388608
        %v1327 = vsub.s32 0, %v1326
        %v1328 = vadd.s32 %v1323, 1
        %vm1329 = vcmp.gt.s32.totalorder %v1328, 0
        %v1330 = vsel %vm1329, %v1328, 0
        %v1331 = vshrl.u32 %v1330, 5
        %v1332 = vand.u32 %v1330, 31
        %v1333 = vsub.s32 32, %v1332
        %v1334 = vshrl.u32 683565275, %v1333
        %v1335 = vshll.u32 683565275, %v1332
        %v1336 = vshrl.u32 2475754826, %v1333
        %v1337 = vor.u32 %v1335, %v1336
        %v1338 = vshll.u32 2475754826, %v1332
        %v1339 = vshrl.u32 2131351028, %v1333
        %v1340 = vor.u32 %v1338, %v1339
        %v1341 = vshll.u32 2131351028, %v1332
        %v1342 = vshrl.u32 2102212464, %v1333
        %v1343 = vor.u32 %v1341, %v1342
        %v1344 = vshll.u32 2102212464, %v1332
        %v1345 = vshrl.u32 920167782, %v1333
        %v1346 = vor.u32 %v1344, %v1345
        %v1347 = vshll.u32 920167782, %v1332
        %v1348 = vshrl.u32 1326507024, %v1333
        %v1349 = vor.u32 %v1347, %v1348
        %vm1350 = vcmp.lt.s32.totalorder %v1331, 1
        %vm1351 = vcmp.lt.s32.totalorder %v1331, 2
        %vm1352 = vcmp.lt.s32.totalorder %v1331, 3
        %vm1353 = vcmp.lt.s32.totalorder %v1331, 4
        %v1354 = vsel %vm1350, %v1334, %v1337
        %v1355 = vsel %vm1353, %v1343, 2102212464
        %v1356 = vsel %vm1352, %v1340, %v1355
        %v1357 = vsel %vm1351, %v1354, %v1356
        %v1358 = vsel %vm1350, %v1337, %v1340
        %v1359 = vsel %vm1353, %v1346, 920167782
        %v1360 = vsel %vm1352, %v1343, %v1359
        %v1361 = vsel %vm1351, %v1358, %v1360
        %v1362 = vsel %vm1350, %v1340, %v1343
        %v1363 = vsel %vm1353, %v1349, 1326507024
        %v1364 = vsel %vm1352, %v1346, %v1363
        %v1365 = vsel %vm1351, %v1362, %v1364
        %v1366 = vshll.u32 %v1326, 8
        %v1367 = vmul.u32.u64.compose %v1366, %v1365
        %v1368 = vextract.low.u32 %v1367
        %v1369 = vextract.high.u32 %v1367
        %v1370 = vmul.u32.u64.compose %v1366, %v1361
        %v1371 = vextract.low.u32 %v1370
        %v1372 = vextract.high.u32 %v1370
        %v1373 = vmul.u32 %v1366, %v1357
        %v1374 = vadd.s32 %v1369, %v1371
        %vm1375 = vc.u32 %v1369, %v1371
        %v1376 = vadd.s32 %v1372, 1
        %v1377 = vsel %vm1375, %v1376, %v1372
        %v1378 = vadd.s32 %v1373, %v1377
        %v1379 = vadd.s32 %v1378, 536870912
        %v1380 = vshrl.u32 %v1379, 30
        %v1381 = vshll.u32 %v1380, 30
        %v1382 = vsub.s32 %v1378, %v1381
        %vm1383 = vcmp.lt.s32.totalorder %v1382, 0
        %v1384 = vsub.s32 0, %v1382
        %v1385 = vsel %vm1383, %v1384, %v1382
        %v1386 = vclz %v1385
        %v1387 = vsub.s32 %v1386, 2
        %vm1388 = vcmp.gt.s32.totalorder 0, %v1387
        %v1389 = vsel %vm1388, 0, %v1387
        %v1390 = vsub.s32 32, %v1389
        %v1391 = vshll.u32 %v1382, %v1389
        %v1392 = vshrl.u32 %v1374, %v1390
        %v1393 = vor.u32 %v1391, %v1392
        %v1394 = vsub.s32 4294967266, %v1389
        %v1395 = vadd.s32 %v1394, 127
        %v1396 = vshll.u32 %v1395, 23
        %v1397 = vor.u32 4788187, %v1396
        %v1398 = vand.u32 2147483647, %v1397
        %v1400 = vcvt.s32.f32 %v1393
        %v1401 = vmul.f32 %v1400, %v1398
        %v1402 = vxor.u32 %v1401, 2147483648
        %v1403 = vsel %vm1320, %v1402, %v1401
        %v1404 = vsub.s32 4, %v1380
        %v1405 = vsel %vm1320, %v1404, %v1380
        %v1406 = vsel %vm1319, %v686, %v1403
        %v1407 = vsel %vm1319, 0, %v1405
        %v1408 = vcosq.f32.pop %v1406
        %v1409 = vsinq.f32.pop %v1406
        %vm1410 = vweird.f32 %v686
        %v1411 = vadd.s32 %v1407, 3
        %v1412 = vand.u32 %v1411, 3
        %vm1413 = vcmp.lt.s32.totalorder %v1412, 2
        %vm1414 = vcmp.eq.s32.totalorder %v1412, 0
        %v1415 = vxor.u32 %v1409, 2147483648
        %v1416 = vsel %vm1414, %v1408, %v1415
        %vm1417 = vcmp.eq.s32.totalorder %v1412, 2
        %v1418 = vxor.u32 %v1408, 2147483648
        %v1419 = vsel %vm1417, %v1418, %v1409
        %v1420 = vsel %vm1413, %v1416, %v1419
        %v1421 = vsel %vm1410, nan, %v1420
        %v1422 = vand.u32 2147483647, %v691
        %vm1423 = vcmp.le.f32.partialorder %v1422, 0.7853982
        %vm1424 = vcmp.lt.s32.totalorder %v691, 0
        %v1425 = vand.u32 %v691, 2139095040
        %v1426 = vshrl.u32 %v1425, 23
        %v1427 = vsub.s32 %v1426, 127
        %v1428 = vand.u32 2147483647, %v691
        %v1429 = vand.u32 %v1428, 8388607
        %v1430 = vor.u32 %v1429, 8388608
        %v1431 = vsub.s32 0, %v1430
        %v1432 = vadd.s32 %v1427, 1
        %vm1433 = vcmp.gt.s32.totalorder %v1432, 0
        %v1434 = vsel %vm1433, %v1432, 0
        %v1435 = vshrl.u32 %v1434, 5
        %v1436 = vand.u32 %v1434, 31
        %v1437 = vsub.s32 32, %v1436
        %v1438 = vshrl.u32 683565275, %v1437
        %v1439 = vshll.u32 683565275, %v1436
        %v1440 = vshrl.u32 2475754826, %v1437
        %v1441 = vor.u32 %v1439, %v1440
        %v1442 = vshll.u32 2475754826, %v1436
        %v1443 = vshrl.u32 2131351028, %v1437
        %v1444 = vor.u32 %v1442, %v1443
        %v1445 = vshll.u32 2131351028, %v1436
        %v1446 = vshrl.u32 2102212464, %v1437
        %v1447 = vor.u32 %v1445, %v1446
        %v1448 = vshll.u32 2102212464, %v1436
        %v1449 = vshrl.u32 920167782, %v1437
        %v1450 = vor.u32 %v1448, %v1449
        %v1451 = vshll.u32 920167782, %v1436
        %v1452 = vshrl.u32 1326507024, %v1437
        %v1453 = vor.u32 %v1451, %v1452
        %vm1454 = vcmp.lt.s32.totalorder %v1435, 1
        %vm1455 = vcmp.lt.s32.totalorder %v1435, 2
        %vm1456 = vcmp.lt.s32.totalorder %v1435, 3
        %vm1457 = vcmp.lt.s32.totalorder %v1435, 4
        %v1458 = vsel %vm1454, %v1438, %v1441
        %v1459 = vsel %vm1457, %v1447, 2102212464
        %v1460 = vsel %vm1456, %v1444, %v1459
        %v1461 = vsel %vm1455, %v1458, %v1460
        %v1462 = vsel %vm1454, %v1441, %v1444
        %v1463 = vsel %vm1457, %v1450, 920167782
        %v1464 = vsel %vm1456, %v1447, %v1463
        %v1465 = vsel %vm1455, %v1462, %v1464
        %v1466 = vsel %vm1454, %v1444, %v1447
        %v1467 = vsel %vm1457, %v1453, 1326507024
        %v1468 = vsel %vm1456, %v1450, %v1467
        %v1469 = vsel %vm1455, %v1466, %v1468
        %v1470 = vshll.u32 %v1430, 8
        %v1471 = vmul.u32.u64.compose %v1470, %v1469
        %v1472 = vextract.low.u32 %v1471
        %v1473 = vextract.high.u32 %v1471
        %v1474 = vmul.u32.u64.compose %v1470, %v1465
        %v1475 = vextract.low.u32 %v1474
        %v1476 = vextract.high.u32 %v1474
        %v1477 = vmul.u32 %v1470, %v1461
        %v1478 = vadd.s32 %v1473, %v1475
        %vm1479 = vc.u32 %v1473, %v1475
        %v1480 = vadd.s32 %v1476, 1
        %v1481 = vsel %vm1479, %v1480, %v1476
        %v1482 = vadd.s32 %v1477, %v1481
        %v1483 = vadd.s32 %v1482, 536870912
        %v1484 = vshrl.u32 %v1483, 30
        %v1485 = vshll.u32 %v1484, 30
        %v1486 = vsub.s32 %v1482, %v1485
        %vm1487 = vcmp.lt.s32.totalorder %v1486, 0
        %v1488 = vsub.s32 0, %v1486
        %v1489 = vsel %vm1487, %v1488, %v1486
        %v1490 = vclz %v1489
        %v1491 = vsub.s32 %v1490, 2
        %vm1492 = vcmp.gt.s32.totalorder 0, %v1491
        %v1493 = vsel %vm1492, 0, %v1491
        %v1494 = vsub.s32 32, %v1493
        %v1495 = vshll.u32 %v1486, %v1493
        %v1496 = vshrl.u32 %v1478, %v1494
        %v1497 = vor.u32 %v1495, %v1496
        %v1498 = vsub.s32 4294967266, %v1493
        %v1499 = vadd.s32 %v1498, 127
        %v1500 = vshll.u32 %v1499, 23
        %v1501 = vor.u32 4788187, %v1500
        %v1502 = vand.u32 2147483647, %v1501
        %v1504 = vcvt.s32.f32 %v1497
        %v1505 = vmul.f32 %v1504, %v1502
        %v1506 = vxor.u32 %v1505, 2147483648
        %v1507 = vsel %vm1424, %v1506, %v1505
        %v1508 = vsub.s32 4, %v1484
        %v1509 = vsel %vm1424, %v1508, %v1484
        %v1510 = vsel %vm1423, %v691, %v1507
        %v1511 = vsel %vm1423, 0, %v1509
        %v1512 = vcosq.f32.pop %v1510
        %v1513 = vsinq.f32.pop %v1510
        %vm1514 = vweird.f32 %v691
        %v1515 = vadd.s32 %v1511, 3
        %v1516 = vand.u32 %v1515, 3
        %vm1517 = vcmp.lt.s32.totalorder %v1516, 2
        %vm1518 = vcmp.eq.s32.totalorder %v1516, 0
        %v1519 = vxor.u32 %v1513, 2147483648
        %v1520 = vsel %vm1518, %v1512, %v1519
        %vm1521 = vcmp.eq.s32.totalorder %v1516, 2
        %v1522 = vxor.u32 %v1512, 2147483648
        %v1523 = vsel %vm1521, %v1522, %v1513
        %v1524 = vsel %vm1517, %v1520, %v1523
        %v1525 = vsel %vm1514, nan, %v1524
        %v1526 = vld [vmem:[%s5] sm:$0xff]
        %v1527 = vld [vmem:[%s6] sm:$0xff]
        %v1528 = vld [vmem:[%s6 + $0x8] sm:$0xff]
        %v1529 = vld [vmem:[%s6 + $0x10] sm:$0xff]
        %v1530 = vld [vmem:[%s6 + $0x18] sm:$0xff]
        %v1531 = vld [vmem:[%s6 + $0x20] sm:$0xff]
        %v1532 = vld [vmem:[%s6 + $0x28] sm:$0xff]
        %v1533 = vld [vmem:[%s6 + $0x30] sm:$0xff]
        %v1534 = vld [vmem:[%s6 + $0x38] sm:$0xff]
        %v1535 = vld [vmem:[%s6 + $0x40] sm:$0xff]
        %v1536 = vld [vmem:[%s6 + $0x48] sm:$0xff]
        %v1537 = vld [vmem:[%s6 + $0x50] sm:$0xff]
        %v1538 = vld [vmem:[%s6 + $0x58] sm:$0xff]
        %v1539 = vld [vmem:[%s6 + $0x60] sm:$0xff]
        %v1540 = vld [vmem:[%s6 + $0x68] sm:$0xff]
        %v1541 = vld [vmem:[%s6 + $0x70] sm:$0xff]
        %v1542 = vld [vmem:[%s6 + $0x78] sm:$0xff]
        %1543 = vmatprep.subr.mxu0 0.0
        %1544 = vmatpush1.msra.mxu0 %v1542
        %1545 = vmatprep.subr.mxu0 0.0
        %1546 = vmatpush1.msra.mxu0 %v1541
        %1547 = vmatprep.subr.mxu0 0.0
        %1548 = vmatpush1.msra.mxu0 %v1540
        %1549 = vmatprep.subr.mxu0 0.0
        %1550 = vmatpush1.msra.mxu0 %v1539
        %1551 = vmatprep.subr.mxu0 0.0
        %1552 = vmatpush1.msra.mxu0 %v1538
        %1553 = vmatprep.subr.mxu0 0.0
        %1554 = vmatpush1.msra.mxu0 %v1537
        %1555 = vmatprep.subr.mxu0 0.0
        %1556 = vmatpush1.msra.mxu0 %v1536
        %1557 = vmatprep.subr.mxu0 0.0
        %1558 = vmatpush1.msra.mxu0 %v1535
        %1559 = vmatprep.subr.mxu0 0.0
        %1560 = vmatpush1.msra.mxu0 %v1534
        %1561 = vmatprep.subr.mxu0 0.0
        %1562 = vmatpush1.msra.mxu0 %v1533
        %1563 = vmatprep.subr.mxu0 0.0
        %1564 = vmatpush1.msra.mxu0 %v1532
        %1565 = vmatprep.subr.mxu0 0.0
        %1566 = vmatpush1.msra.mxu0 %v1531
        %1567 = vmatprep.subr.mxu0 0.0
        %1568 = vmatpush1.msra.mxu0 %v1530
        %1569 = vmatprep.subr.mxu0 0.0
        %1570 = vmatpush1.msra.mxu0 %v1529
        %1571 = vmatprep.subr.mxu0 0.0
        %1572 = vmatpush1.msra.mxu0 %v1528
        %1573 = vmatprep.subr.mxu0 0.0
        %1574 = vmatpush1.msra.mxu0 %v1527
        %1575 = vmatprep.subr.mxu0 0.0
        %1576 = vmatpush2.msra.mxu0 0.0
        %1577 = vmatprep.subr.mxu0 0.0
        %1578 = vmatpush2.msra.mxu0 0.0
        %1579 = vmatprep.subr.mxu0 0.0
        %1580 = vmatpush2.msra.mxu0 0.0
        %1581 = vmatprep.subr.mxu0 0.0
        %1582 = vmatpush2.msra.mxu0 0.0
        %1583 = vmatprep.subr.mxu0 0.0
        %1584 = vmatpush2.msra.mxu0 0.0
        %1585 = vmatprep.subr.mxu0 0.0
        %1586 = vmatpush2.msra.mxu0 0.0
        %1587 = vmatprep.subr.mxu0 0.0
        %1588 = vmatpush2.msra.mxu0 0.0
        %1589 = vmatprep.subr.mxu0 0.0
        %1590 = vmatpush2.msra.mxu0 0.0
        %1591 = vmatprep.subr.mxu0 0.0
        %1592 = vmatpush2.msra.mxu0 0.0
        %1593 = vmatprep.subr.mxu0 0.0
        %1594 = vmatpush2.msra.mxu0 0.0
        %1595 = vmatprep.subr.mxu0 0.0
        %1596 = vmatpush2.msra.mxu0 0.0
        %1597 = vmatprep.subr.mxu0 0.0
        %1598 = vmatpush2.msra.mxu0 0.0
        %1599 = vmatprep.subr.mxu0 0.0
        %1600 = vmatpush2.msra.mxu0 0.0
        %1601 = vmatprep.subr.mxu0 0.0
        %1602 = vmatpush2.msra.mxu0 0.0
        %1603 = vmatprep.subr.mxu0 0.0
        %1604 = vmatpush2.msra.mxu0 0.0
        %1605 = vmatprep.subr.mxu0 0.0
        %1606 = vmatpush2.msra.mxu0 0.0
        %1607 = vmatprep.mubr.f32.mxu0 0.0
        %1608 = vmatmul.mubr.f32.gmra.mxu0 %v797
        %v1609 = vpop.f32.mrf.mxu0
        %v1610 = vadd.f32 0.0, %v1609
        %v1611 = vpop.f32.mrf.mxu0
        %1612 = vmatprep.mubr.f32.mxu0 0.0
        %1613 = vmatmul.mubr.f32.gmra.mxu0 %v901
        %v1614 = vpop.f32.mrf.mxu0
        %v1615 = vadd.f32 0.0, %v1614
        %v1616 = vpop.f32.mrf.mxu0
        %1617 = vmatprep.mubr.f32.mxu0 0.0
        %1618 = vmatmul.mubr.f32.gmra.mxu0 %v1005
        %v1619 = vpop.f32.mrf.mxu0
        %v1620 = vadd.f32 0.0, %v1619
        %v1621 = vpop.f32.mrf.mxu0
        %1622 = vmatprep.mubr.f32.mxu0 0.0
        %1623 = vmatmul.mubr.f32.gmra.mxu0 %v1109
        %v1624 = vpop.f32.mrf.mxu0
        %v1625 = vadd.f32 0.0, %v1624
        %v1626 = vpop.f32.mrf.mxu0
        %1627 = vmatprep.mubr.f32.mxu0 0.0
        %1628 = vmatmul.mubr.f32.gmra.mxu0 %v1213
        %v1629 = vpop.f32.mrf.mxu0
        %v1630 = vadd.f32 0.0, %v1629
        %v1631 = vpop.f32.mrf.mxu0
        %1632 = vmatprep.mubr.f32.mxu0 0.0
        %1633 = vmatmul.mubr.f32.gmra.mxu0 %v1317
        %v1634 = vpop.f32.mrf.mxu0
        %v1635 = vadd.f32 0.0, %v1634
        %v1636 = vpop.f32.mrf.mxu0
        %1637 = vmatprep.mubr.f32.mxu0 0.0
        %1638 = vmatmul.mubr.f32.gmra.mxu0 %v1421
        %v1639 = vpop.f32.mrf.mxu0
        %v1640 = vadd.f32 0.0, %v1639
        %v1641 = vpop.f32.mrf.mxu0
        %1642 = vmatprep.mubr.f32.mxu0 0.0
        %1643 = vmatmul.mubr.f32.gmra.mxu0 %v1525
        %v1644 = vpop.f32.mrf.mxu0
        %v1645 = vadd.f32 0.0, %v1644
        %v1646 = vpop.f32.mrf.mxu0
        %1647 = vdwg.mxu0
        %1648 = vmatprep.subr.mxu0 0.0
        %1649 = vmatpush1.msra.mxu0 0.0
        %1650 = vmatprep.subr.mxu0 0.0
        %1651 = vmatpush1.msra.mxu0 0.0
        %1652 = vmatprep.subr.mxu0 0.0
        %1653 = vmatpush1.msra.mxu0 0.0
        %1654 = vmatprep.subr.mxu0 0.0
        %1655 = vmatpush1.msra.mxu0 0.0
        %1656 = vmatprep.subr.mxu0 0.0
        %1657 = vmatpush1.msra.mxu0 0.0
        %1658 = vmatprep.subr.mxu0 0.0
        %1659 = vmatpush1.msra.mxu0 0.0
        %1660 = vmatprep.subr.mxu0 0.0
        %1661 = vmatpush1.msra.mxu0 0.0
        %1662 = vmatprep.subr.mxu0 0.0
        %1663 = vmatpush1.msra.mxu0 0.0
        %1664 = vmatprep.subr.mxu0 0.0
        %1665 = vmatpush1.msra.mxu0 0.0
        %1666 = vmatprep.subr.mxu0 0.0
        %1667 = vmatpush1.msra.mxu0 0.0
        %1668 = vmatprep.subr.mxu0 0.0
        %1669 = vmatpush1.msra.mxu0 0.0
        %1670 = vmatprep.subr.mxu0 0.0
        %1671 = vmatpush1.msra.mxu0 0.0
        %1672 = vmatprep.subr.mxu0 0.0
        %1673 = vmatpush1.msra.mxu0 0.0
        %1674 = vmatprep.subr.mxu0 0.0
        %1675 = vmatpush1.msra.mxu0 0.0
        %1676 = vmatprep.subr.mxu0 0.0
        %1677 = vmatpush1.msra.mxu0 0.0
        %1678 = vmatprep.subr.mxu0 0.0
        %1679 = vmatpush1.msra.mxu0 %v1526
        %1680 = vmatprep.subr.mxu0 0.0
        %1681 = vmatpush2.msra.mxu0 0.0
        %1682 = vmatprep.subr.mxu0 0.0
        %1683 = vmatpush2.msra.mxu0 0.0
        %1684 = vmatprep.subr.mxu0 0.0
        %1685 = vmatpush2.msra.mxu0 0.0
        %1686 = vmatprep.subr.mxu0 0.0
        %1687 = vmatpush2.msra.mxu0 0.0
        %1688 = vmatprep.subr.mxu0 0.0
        %1689 = vmatpush2.msra.mxu0 0.0
        %1690 = vmatprep.subr.mxu0 0.0
        %1691 = vmatpush2.msra.mxu0 0.0
        %1692 = vmatprep.subr.mxu0 0.0
        %1693 = vmatpush2.msra.mxu0 0.0
        %1694 = vmatprep.subr.mxu0 0.0
        %1695 = vmatpush2.msra.mxu0 0.0
        %1696 = vmatprep.subr.mxu0 0.0
        %1697 = vmatpush2.msra.mxu0 0.0
        %1698 = vmatprep.subr.mxu0 0.0
        %1699 = vmatpush2.msra.mxu0 0.0
        %1700 = vmatprep.subr.mxu0 0.0
        %1701 = vmatpush2.msra.mxu0 0.0
        %1702 = vmatprep.subr.mxu0 0.0
        %1703 = vmatpush2.msra.mxu0 0.0
        %1704 = vmatprep.subr.mxu0 0.0
        %1705 = vmatpush2.msra.mxu0 0.0
        %1706 = vmatprep.subr.mxu0 0.0
        %1707 = vmatpush2.msra.mxu0 0.0
        %1708 = vmatprep.subr.mxu0 0.0
        %1709 = vmatpush2.msra.mxu0 0.0
        %1710 = vmatprep.subr.mxu0 0.0
        %1711 = vmatpush2.msra.mxu0 0.0
        %1712 = vmatprep.mubr.f32.mxu0 0.0
        %1713 = vmatmul.mubr.f32.gmra.mxu0 %v566
        %v1714 = vpop.f32.mrf.mxu0
        %v1715 = vadd.f32 %v1610, %v1714
        %v1716 = vpop.f32.mrf.mxu0
        %1717 = vmatprep.mubr.f32.mxu0 0.0
        %1718 = vmatmul.mubr.f32.gmra.mxu0 %v569
        %v1719 = vpop.f32.mrf.mxu0
        %v1720 = vadd.f32 %v1615, %v1719
        %v1721 = vpop.f32.mrf.mxu0
        %1722 = vmatprep.mubr.f32.mxu0 0.0
        %1723 = vmatmul.mubr.f32.gmra.mxu0 %v572
        %v1724 = vpop.f32.mrf.mxu0
        %v1725 = vadd.f32 %v1620, %v1724
        %v1726 = vpop.f32.mrf.mxu0
        %1727 = vmatprep.mubr.f32.mxu0 0.0
        %1728 = vmatmul.mubr.f32.gmra.mxu0 %v575
        %v1729 = vpop.f32.mrf.mxu0
        %v1730 = vadd.f32 %v1625, %v1729
        %v1731 = vpop.f32.mrf.mxu0
        %1732 = vmatprep.mubr.f32.mxu0 0.0
        %1733 = vmatmul.mubr.f32.gmra.mxu0 %v578
        %v1734 = vpop.f32.mrf.mxu0
        %v1735 = vadd.f32 %v1630, %v1734
        %v1736 = vpop.f32.mrf.mxu0
        %1737 = vmatprep.mubr.f32.mxu0 0.0
        %1738 = vmatmul.mubr.f32.gmra.mxu0 %v581
        %v1739 = vpop.f32.mrf.mxu0
        %v1740 = vadd.f32 %v1635, %v1739
        %v1741 = vpop.f32.mrf.mxu0
        %1742 = vmatprep.mubr.f32.mxu0 0.0
        %1743 = vmatmul.mubr.f32.gmra.mxu0 %v584
        %v1744 = vpop.f32.mrf.mxu0
        %v1745 = vadd.f32 %v1640, %v1744
        %v1746 = vpop.f32.mrf.mxu0
        %1747 = vmatprep.mubr.f32.mxu0 0.0
        %1748 = vmatmul.mubr.f32.gmra.mxu0 %v587
        %v1749 = vpop.f32.mrf.mxu0
        %v1750 = vadd.f32 %v1645, %v1749
        %v1751 = vpop.f32.mrf.mxu0
        %1752 = vdwg.mxu0
        %v1753 = vmax.f32 %v1715, 0.0
        %v1754 = vmax.f32 %v1720, 0.0
        %v1755 = vmax.f32 %v1725, 0.0
        %v1756 = vmax.f32 %v1730, 0.0
        %v1757 = vmax.f32 %v1735, 0.0
        %v1758 = vmax.f32 %v1740, 0.0
        %v1759 = vmax.f32 %v1745, 0.0
        %v1760 = vmax.f32 %v1750, 0.0
        %v1761 = vld [vmem:[%s7] sm:$0xff]
        %v1762 = vld [vmem:[%s7 + $0x8] sm:$0xff]
        %v1763 = vld [vmem:[%s7 + $0x10] sm:$0xff]
        %v1764 = vld [vmem:[%s7 + $0x18] sm:$0xff]
        %v1765 = vld [vmem:[%s7 + $0x20] sm:$0xff]
        %v1766 = vld [vmem:[%s7 + $0x28] sm:$0xff]
        %v1767 = vld [vmem:[%s7 + $0x30] sm:$0xff]
        %v1768 = vld [vmem:[%s7 + $0x38] sm:$0xff]
        %v1769 = vld [vmem:[%s8] sm:$0x1]
        %v1771 = vlaneseq
        %v1772 = vshrl.u32 %v1771, 7
        %v1773 = vsub.s32 0, %v1772
        %v1774 = vrot.slane %v1769, %v1773
        %vm1776 = vcmask 523264
        %v1778 = vsel %vm1776, %v1753, 0
        %v1781 = vsel %vm1776, %v1754, 0
        %v1784 = vsel %vm1776, %v1755, 0
        %v1787 = vsel %vm1776, %v1756, 0
        %v1790 = vsel %vm1776, %v1757, 0
        %v1793 = vsel %vm1776, %v1758, 0
        %v1796 = vsel %vm1776, %v1759, 0
        %v1799 = vsel %vm1776, %v1760, 0
        %1801 = vmatprep.subr.mxu0 0.0
        %1802 = vmatpush1.msra.mxu0 0.0
        %1803 = vmatprep.subr.mxu0 0.0
        %1804 = vmatpush1.msra.mxu0 0.0
        %1805 = vmatprep.subr.mxu0 0.0
        %1806 = vmatpush1.msra.mxu0 0.0
        %1807 = vmatprep.subr.mxu0 0.0
        %1808 = vmatpush1.msra.mxu0 0.0
        %1809 = vmatprep.subr.mxu0 0.0
        %1810 = vmatpush1.msra.mxu0 0.0
        %1811 = vmatprep.subr.mxu0 0.0
        %1812 = vmatpush1.msra.mxu0 0.0
        %1813 = vmatprep.subr.mxu0 0.0
        %1814 = vmatpush1.msra.mxu0 0.0
        %1815 = vmatprep.subr.mxu0 0.0
        %1816 = vmatpush1.msra.mxu0 0.0
        %1817 = vmatprep.subr.mxu0 0.0
        %1818 = vmatpush1.msra.mxu0 %v1768
        %1819 = vmatprep.subr.mxu0 0.0
        %1820 = vmatpush1.msra.mxu0 %v1767
        %1821 = vmatprep.subr.mxu0 0.0
        %1822 = vmatpush1.msra.mxu0 %v1766
        %1823 = vmatprep.subr.mxu0 0.0
        %1824 = vmatpush1.msra.mxu0 %v1765
        %1825 = vmatprep.subr.mxu0 0.0
        %1826 = vmatpush1.msra.mxu0 %v1764
        %1827 = vmatprep.subr.mxu0 0.0
        %1828 = vmatpush1.msra.mxu0 %v1763
        %1829 = vmatprep.subr.mxu0 0.0
        %1830 = vmatpush1.msra.mxu0 %v1762
        %1831 = vmatprep.subr.mxu0 0.0
        %1832 = vmatpush1.msra.mxu0 %v1761
        %1833 = vmatprep.subr.mxu0 0.0
        %1834 = vmatpush2.msra.mxu0 0.0
        %1835 = vmatprep.subr.mxu0 0.0
        %1836 = vmatpush2.msra.mxu0 0.0
        %1837 = vmatprep.subr.mxu0 0.0
        %1838 = vmatpush2.msra.mxu0 0.0
        %1839 = vmatprep.subr.mxu0 0.0
        %1840 = vmatpush2.msra.mxu0 0.0
        %1841 = vmatprep.subr.mxu0 0.0
        %1842 = vmatpush2.msra.mxu0 0.0
        %1843 = vmatprep.subr.mxu0 0.0
        %1844 = vmatpush2.msra.mxu0 0.0
        %1845 = vmatprep.subr.mxu0 0.0
        %1846 = vmatpush2.msra.mxu0 0.0
        %1847 = vmatprep.subr.mxu0 0.0
        %1848 = vmatpush2.msra.mxu0 0.0
        %1849 = vmatprep.subr.mxu0 0.0
        %1850 = vmatpush2.msra.mxu0 0.0
        %1851 = vmatprep.subr.mxu0 0.0
        %1852 = vmatpush2.msra.mxu0 0.0
        %1853 = vmatprep.subr.mxu0 0.0
        %1854 = vmatpush2.msra.mxu0 0.0
        %1855 = vmatprep.subr.mxu0 0.0
        %1856 = vmatpush2.msra.mxu0 0.0
        %1857 = vmatprep.subr.mxu0 0.0
        %1858 = vmatpush2.msra.mxu0 0.0
        %1859 = vmatprep.subr.mxu0 0.0
        %1860 = vmatpush2.msra.mxu0 0.0
        %1861 = vmatprep.subr.mxu0 0.0
        %1862 = vmatpush2.msra.mxu0 0.0
        %1863 = vmatprep.subr.mxu0 0.0
        %1864 = vmatpush2.msra.mxu0 0.0
        %1865 = vmatprep.mubr.f32.mxu0 0.0
        %1866 = vmatmul.mubr.f32.gmra.mxu0 %v1778
        %v1867 = vpop.f32.mrf.mxu0
        %v1868 = vadd.f32 %v1774, %v1867
        %v1869 = vpop.f32.mrf.mxu0
        %1870 = vmatprep.mubr.f32.mxu0 0.0
        %1871 = vmatmul.mubr.f32.gmra.mxu0 %v1781
        %v1872 = vpop.f32.mrf.mxu0
        %v1873 = vadd.f32 %v1774, %v1872
        %v1874 = vpop.f32.mrf.mxu0
        %1875 = vmatprep.mubr.f32.mxu0 0.0
        %1876 = vmatmul.mubr.f32.gmra.mxu0 %v1784
        %v1877 = vpop.f32.mrf.mxu0
        %v1878 = vadd.f32 %v1774, %v1877
        %v1879 = vpop.f32.mrf.mxu0
        %1880 = vmatprep.mubr.f32.mxu0 0.0
        %1881 = vmatmul.mubr.f32.gmra.mxu0 %v1787
        %v1882 = vpop.f32.mrf.mxu0
        %v1883 = vadd.f32 %v1774, %v1882
        %v1884 = vpop.f32.mrf.mxu0
        %1885 = vmatprep.mubr.f32.mxu0 0.0
        %1886 = vmatmul.mubr.f32.gmra.mxu0 %v1790
        %v1887 = vpop.f32.mrf.mxu0
        %v1888 = vadd.f32 %v1774, %v1887
        %v1889 = vpop.f32.mrf.mxu0
        %1890 = vmatprep.mubr.f32.mxu0 0.0
        %1891 = vmatmul.mubr.f32.gmra.mxu0 %v1793
        %v1892 = vpop.f32.mrf.mxu0
        %v1893 = vadd.f32 %v1774, %v1892
        %v1894 = vpop.f32.mrf.mxu0
        %1895 = vmatprep.mubr.f32.mxu0 0.0
        %1896 = vmatmul.mubr.f32.gmra.mxu0 %v1796
        %v1897 = vpop.f32.mrf.mxu0
        %v1898 = vadd.f32 %v1774, %v1897
        %v1899 = vpop.f32.mrf.mxu0
        %1900 = vmatprep.mubr.f32.mxu0 0.0
        %1901 = vmatmul.mubr.f32.gmra.mxu0 %v1799
        %v1902 = vpop.f32.mrf.mxu0
        %v1903 = vadd.f32 %v1774, %v1902
        %v1904 = vpop.f32.mrf.mxu0
        %1905 = vdwg.mxu0
        %v1906 = vmax.f32 %v1868, 0.0
        %v1907 = vmax.f32 %v1873, 0.0
        %v1908 = vmax.f32 %v1878, 0.0
        %v1909 = vmax.f32 %v1883, 0.0
        %v1910 = vmax.f32 %v1888, 0.0
        %v1911 = vmax.f32 %v1893, 0.0
        %v1912 = vmax.f32 %v1898, 0.0
        %v1913 = vmax.f32 %v1903, 0.0
        %v1914 = vld [vmem:[%s9] sm:$0xff]
        %v1915 = vld [vmem:[%s9 + $0x8] sm:$0xff]
        %v1916 = vld [vmem:[%s9 + $0x10] sm:$0xff]
        %v1917 = vld [vmem:[%s9 + $0x18] sm:$0xff]
        %v1918 = vld [vmem:[%s9 + $0x20] sm:$0xff]
        %v1919 = vld [vmem:[%s9 + $0x28] sm:$0xff]
        %v1920 = vld [vmem:[%s9 + $0x30] sm:$0xff]
        %v1921 = vld [vmem:[%s9 + $0x38] sm:$0xff]
        %v1922 = vld [vmem:[%s10] sm:$0x1]
        %v1924 = vlaneseq
        %v1925 = vshrl.u32 %v1924, 7
        %v1926 = vsub.s32 0, %v1925
        %v1927 = vrot.slane %v1922, %v1926
        %v1930 = vsel %vm1776, %v1906, 0
        %v1933 = vsel %vm1776, %v1907, 0
        %v1936 = vsel %vm1776, %v1908, 0
        %v1939 = vsel %vm1776, %v1909, 0
        %v1942 = vsel %vm1776, %v1910, 0
        %v1945 = vsel %vm1776, %v1911, 0
        %v1948 = vsel %vm1776, %v1912, 0
        %v1951 = vsel %vm1776, %v1913, 0
        %1953 = vmatprep.subr.mxu0 0.0
        %1954 = vmatpush1.msra.mxu0 0.0
        %1955 = vmatprep.subr.mxu0 0.0
        %1956 = vmatpush1.msra.mxu0 0.0
        %1957 = vmatprep.subr.mxu0 0.0
        %1958 = vmatpush1.msra.mxu0 0.0
        %1959 = vmatprep.subr.mxu0 0.0
        %1960 = vmatpush1.msra.mxu0 0.0
        %1961 = vmatprep.subr.mxu0 0.0
        %1962 = vmatpush1.msra.mxu0 0.0
        %1963 = vmatprep.subr.mxu0 0.0
        %1964 = vmatpush1.msra.mxu0 0.0
        %1965 = vmatprep.subr.mxu0 0.0
        %1966 = vmatpush1.msra.mxu0 0.0
        %1967 = vmatprep.subr.mxu0 0.0
        %1968 = vmatpush1.msra.mxu0 0.0
        %1969 = vmatprep.subr.mxu0 0.0
        %1970 = vmatpush1.msra.mxu0 %v1921
        %1971 = vmatprep.subr.mxu0 0.0
        %1972 = vmatpush1.msra.mxu0 %v1920
        %1973 = vmatprep.subr.mxu0 0.0
        %1974 = vmatpush1.msra.mxu0 %v1919
        %1975 = vmatprep.subr.mxu0 0.0
        %1976 = vmatpush1.msra.mxu0 %v1918
        %1977 = vmatprep.subr.mxu0 0.0
        %1978 = vmatpush1.msra.mxu0 %v1917
        %1979 = vmatprep.subr.mxu0 0.0
        %1980 = vmatpush1.msra.mxu0 %v1916
        %1981 = vmatprep.subr.mxu0 0.0
        %1982 = vmatpush1.msra.mxu0 %v1915
        %1983 = vmatprep.subr.mxu0 0.0
        %1984 = vmatpush1.msra.mxu0 %v1914
        %1985 = vmatprep.subr.mxu0 0.0
        %1986 = vmatpush2.msra.mxu0 0.0
        %1987 = vmatprep.subr.mxu0 0.0
        %1988 = vmatpush2.msra.mxu0 0.0
        %1989 = vmatprep.subr.mxu0 0.0
        %1990 = vmatpush2.msra.mxu0 0.0
        %1991 = vmatprep.subr.mxu0 0.0
        %1992 = vmatpush2.msra.mxu0 0.0
        %1993 = vmatprep.subr.mxu0 0.0
        %1994 = vmatpush2.msra.mxu0 0.0
        %1995 = vmatprep.subr.mxu0 0.0
        %1996 = vmatpush2.msra.mxu0 0.0
        %1997 = vmatprep.subr.mxu0 0.0
        %1998 = vmatpush2.msra.mxu0 0.0
        %1999 = vmatprep.subr.mxu0 0.0
        %2000 = vmatpush2.msra.mxu0 0.0
        %2001 = vmatprep.subr.mxu0 0.0
        %2002 = vmatpush2.msra.mxu0 0.0
        %2003 = vmatprep.subr.mxu0 0.0
        %2004 = vmatpush2.msra.mxu0 0.0
        %2005 = vmatprep.subr.mxu0 0.0
        %2006 = vmatpush2.msra.mxu0 0.0
        %2007 = vmatprep.subr.mxu0 0.0
        %2008 = vmatpush2.msra.mxu0 0.0
        %2009 = vmatprep.subr.mxu0 0.0
        %2010 = vmatpush2.msra.mxu0 0.0
        %2011 = vmatprep.subr.mxu0 0.0
        %2012 = vmatpush2.msra.mxu0 0.0
        %2013 = vmatprep.subr.mxu0 0.0
        %2014 = vmatpush2.msra.mxu0 0.0
        %2015 = vmatprep.subr.mxu0 0.0
        %2016 = vmatpush2.msra.mxu0 0.0
        %2017 = vmatprep.mubr.f32.mxu0 0.0
        %2018 = vmatmul.mubr.f32.gmra.mxu0 %v1930
        %v2019 = vpop.f32.mrf.mxu0
        %v2020 = vadd.f32 %v1927, %v2019
        %v2021 = vpop.f32.mrf.mxu0
        %2022 = vmatprep.mubr.f32.mxu0 0.0
        %2023 = vmatmul.mubr.f32.gmra.mxu0 %v1933
        %v2024 = vpop.f32.mrf.mxu0
        %v2025 = vadd.f32 %v1927, %v2024
        %v2026 = vpop.f32.mrf.mxu0
        %2027 = vmatprep.mubr.f32.mxu0 0.0
        %2028 = vmatmul.mubr.f32.gmra.mxu0 %v1936
        %v2029 = vpop.f32.mrf.mxu0
        %v2030 = vadd.f32 %v1927, %v2029
        %v2031 = vpop.f32.mrf.mxu0
        %2032 = vmatprep.mubr.f32.mxu0 0.0
        %2033 = vmatmul.mubr.f32.gmra.mxu0 %v1939
        %v2034 = vpop.f32.mrf.mxu0
        %v2035 = vadd.f32 %v1927, %v2034
        %v2036 = vpop.f32.mrf.mxu0
        %2037 = vmatprep.mubr.f32.mxu0 0.0
        %2038 = vmatmul.mubr.f32.gmra.mxu0 %v1942
        %v2039 = vpop.f32.mrf.mxu0
        %v2040 = vadd.f32 %v1927, %v2039
        %v2041 = vpop.f32.mrf.mxu0
        %2042 = vmatprep.mubr.f32.mxu0 0.0
        %2043 = vmatmul.mubr.f32.gmra.mxu0 %v1945
        %v2044 = vpop.f32.mrf.mxu0
        %v2045 = vadd.f32 %v1927, %v2044
        %v2046 = vpop.f32.mrf.mxu0
        %2047 = vmatprep.mubr.f32.mxu0 0.0
        %2048 = vmatmul.mubr.f32.gmra.mxu0 %v1948
        %v2049 = vpop.f32.mrf.mxu0
        %v2050 = vadd.f32 %v1927, %v2049
        %v2051 = vpop.f32.mrf.mxu0
        %2052 = vmatprep.mubr.f32.mxu0 0.0
        %2053 = vmatmul.mubr.f32.gmra.mxu0 %v1951
        %v2054 = vpop.f32.mrf.mxu0
        %v2055 = vadd.f32 %v1927, %v2054
        %v2056 = vpop.f32.mrf.mxu0
        %2057 = vdwg.mxu0
        %v2058 = vxor.u32 %v2020, 2147483648
        %v2059 = vxor.u32 %v2025, 2147483648
        %v2060 = vxor.u32 %v2030, 2147483648
        %v2061 = vxor.u32 %v2035, 2147483648
        %v2062 = vxor.u32 %v2040, 2147483648
        %v2063 = vxor.u32 %v2045, 2147483648
        %v2064 = vxor.u32 %v2050, 2147483648
        %v2065 = vxor.u32 %v2055, 2147483648
        %v2066 = vmul.f32 %v2058, 1.442695
        %v2067 = vpow.pop %v2066
        %v2068 = vmul.f32 %v2059, 1.442695
        %v2069 = vpow.pop %v2068
        %v2070 = vmul.f32 %v2060, 1.442695
        %v2071 = vpow.pop %v2070
        %v2072 = vmul.f32 %v2061, 1.442695
        %v2073 = vpow.pop %v2072
        %v2074 = vmul.f32 %v2062, 1.442695
        %v2075 = vpow.pop %v2074
        %v2076 = vmul.f32 %v2063, 1.442695
        %v2077 = vpow.pop %v2076
        %v2078 = vmul.f32 %v2064, 1.442695
        %v2079 = vpow.pop %v2078
        %v2080 = vmul.f32 %v2065, 1.442695
        %v2081 = vpow.pop %v2080
        %v2082 = vadd.f32 %v2067, 1.0
        %v2083 = vadd.f32 %v2069, 1.0
        %v2084 = vadd.f32 %v2071, 1.0
        %v2085 = vadd.f32 %v2073, 1.0
        %v2086 = vadd.f32 %v2075, 1.0
        %v2087 = vadd.f32 %v2077, 1.0
        %v2088 = vadd.f32 %v2079, 1.0
        %v2089 = vadd.f32 %v2081, 1.0
        %v2090 = vrcp.pop %v2082
        %v2091 = vmul.f32 1.0, %v2090
        %v2092 = vrcp.pop %v2083
        %v2093 = vmul.f32 1.0, %v2092
        %v2094 = vrcp.pop %v2084
        %v2095 = vmul.f32 1.0, %v2094
        %v2096 = vrcp.pop %v2085
        %v2097 = vmul.f32 1.0, %v2096
        %v2098 = vrcp.pop %v2086
        %v2099 = vmul.f32 1.0, %v2098
        %v2100 = vrcp.pop %v2087
        %v2101 = vmul.f32 1.0, %v2100
        %v2102 = vrcp.pop %v2088
        %v2103 = vmul.f32 1.0, %v2102
        %v2104 = vrcp.pop %v2089
        %v2105 = vmul.f32 1.0, %v2104
        %2114 = vrot.lane.b32.xlu0 %v2020, 1
        %v2115 = vpop.permute.xlu0 %2114
        %2116 = vrot.lane.b32.xlu0 %v2025, 1
        %v2117 = vpop.permute.xlu0 %2116
        %2118 = vrot.lane.b32.xlu0 %v2030, 1
        %v2119 = vpop.permute.xlu0 %2118
        %2120 = vrot.lane.b32.xlu0 %v2035, 1
        %v2121 = vpop.permute.xlu0 %2120
        %2122 = vrot.lane.b32.xlu0 %v2040, 1
        %v2123 = vpop.permute.xlu0 %2122
        %2124 = vrot.lane.b32.xlu0 %v2045, 1
        %v2125 = vpop.permute.xlu0 %2124
        %2126 = vrot.lane.b32.xlu0 %v2050, 1
        %v2127 = vpop.permute.xlu0 %2126
        %2128 = vrot.lane.b32.xlu0 %v2055, 1
        %v2129 = vpop.permute.xlu0 %2128
        %v2138 = vsub.f32 %v2020, %v2115
        %v2139 = vsub.f32 %v2025, %v2117
        %v2140 = vsub.f32 %v2030, %v2119
        %v2141 = vsub.f32 %v2035, %v2121
        %v2142 = vsub.f32 %v2040, %v2123
        %v2143 = vsub.f32 %v2045, %v2125
        %v2144 = vsub.f32 %v2050, %v2127
        %v2145 = vsub.f32 %v2055, %v2129
        %2154 = vrot.lane.b32.xlu0 %v2138, 7
        %v2155 = vpop.permute.xlu0 %2154
        %2156 = vrot.lane.b32.xlu0 %v2139, 7
        %v2157 = vpop.permute.xlu0 %2156
        %2158 = vrot.lane.b32.xlu0 %v2140, 7
        %v2159 = vpop.permute.xlu0 %2158
        %2160 = vrot.lane.b32.xlu0 %v2141, 7
        %v2161 = vpop.permute.xlu0 %2160
        %2162 = vrot.lane.b32.xlu0 %v2142, 7
        %v2163 = vpop.permute.xlu0 %2162
        %2164 = vrot.lane.b32.xlu0 %v2143, 7
        %v2165 = vpop.permute.xlu0 %2164
        %2166 = vrot.lane.b32.xlu0 %v2144, 7
        %v2167 = vpop.permute.xlu0 %2166
        %2168 = vrot.lane.b32.xlu0 %v2145, 7
        %v2169 = vpop.permute.xlu0 %2168
        %v2178 = vmul.f32 %v2091, %v2155
        %v2179 = vmul.f32 %v2093, %v2157
        %v2180 = vmul.f32 %v2095, %v2159
        %v2181 = vmul.f32 %v2097, %v2161
        %v2182 = vmul.f32 %v2099, %v2163
        %v2183 = vmul.f32 %v2101, %v2165
        %v2184 = vmul.f32 %v2103, %v2167
        %v2185 = vmul.f32 %v2105, %v2169
        %2194 = vrot.lane.b32.xlu0 %v2178, 120
        %v2195 = vpop.permute.xlu0 %2194
        %2196 = vrot.lane.b32.xlu0 %v2179, 120
        %v2197 = vpop.permute.xlu0 %2196
        %2198 = vrot.lane.b32.xlu0 %v2180, 120
        %v2199 = vpop.permute.xlu0 %2198
        %2200 = vrot.lane.b32.xlu0 %v2181, 120
        %v2201 = vpop.permute.xlu0 %2200
        %2202 = vrot.lane.b32.xlu0 %v2182, 120
        %v2203 = vpop.permute.xlu0 %2202
        %2204 = vrot.lane.b32.xlu0 %v2183, 120
        %v2205 = vpop.permute.xlu0 %2204
        %2206 = vrot.lane.b32.xlu0 %v2184, 120
        %v2207 = vpop.permute.xlu0 %2206
        %2208 = vrot.lane.b32.xlu0 %v2185, 120
        %v2209 = vpop.permute.xlu0 %2208
        %v2218 = vadd.f32 %v2020, %v2195
        %v2219 = vadd.f32 %v2025, %v2197
        %v2220 = vadd.f32 %v2030, %v2199
        %v2221 = vadd.f32 %v2035, %v2201
        %v2222 = vadd.f32 %v2040, %v2203
        %v2223 = vadd.f32 %v2045, %v2205
        %v2224 = vadd.f32 %v2050, %v2207
        %v2225 = vadd.f32 %v2055, %v2209
        %2234 = vrot.lane.b32.xlu0 %v2091, 3
        %v2235 = vpop.permute.xlu0 %2234
        %2236 = vrot.lane.b32.xlu0 %v2093, 3
        %v2237 = vpop.permute.xlu0 %2236
        %2238 = vrot.lane.b32.xlu0 %v2095, 3
        %v2239 = vpop.permute.xlu0 %2238
        %2240 = vrot.lane.b32.xlu0 %v2097, 3
        %v2241 = vpop.permute.xlu0 %2240
        %2242 = vrot.lane.b32.xlu0 %v2099, 3
        %v2243 = vpop.permute.xlu0 %2242
        %2244 = vrot.lane.b32.xlu0 %v2101, 3
        %v2245 = vpop.permute.xlu0 %2244
        %2246 = vrot.lane.b32.xlu0 %v2103, 3
        %v2247 = vpop.permute.xlu0 %2246
        %2248 = vrot.lane.b32.xlu0 %v2105, 3
        %v2249 = vpop.permute.xlu0 %2248
        %v2258 = vsub.f32 %v2091, %v2235
        %v2259 = vsub.f32 %v2093, %v2237
        %v2260 = vsub.f32 %v2095, %v2239
        %v2261 = vsub.f32 %v2097, %v2241
        %v2262 = vsub.f32 %v2099, %v2243
        %v2263 = vsub.f32 %v2101, %v2245
        %v2264 = vsub.f32 %v2103, %v2247
        %v2265 = vsub.f32 %v2105, %v2249
        %2266 = vset.pattern.permute.xlu0 8
        %2267 = vperm.xlu0 %2266, %v2091
        %v2268 = vpop.permute.xlu0 %2267
        %2270 = vset.pattern.permute.xlu0 8
        %2271 = vperm.xlu0 %2270, %v2093
        %v2272 = vpop.permute.xlu0 %2271
        %2274 = vset.pattern.permute.xlu0 8
        %2275 = vperm.xlu0 %2274, %v2095
        %v2276 = vpop.permute.xlu0 %2275
        %2278 = vset.pattern.permute.xlu0 8
        %2279 = vperm.xlu0 %2278, %v2097
        %v2280 = vpop.permute.xlu0 %2279
        %2282 = vset.pattern.permute.xlu0 8
        %2283 = vperm.xlu0 %2282, %v2099
        %v2284 = vpop.permute.xlu0 %2283
        %2286 = vset.pattern.permute.xlu0 8
        %2287 = vperm.xlu0 %2286, %v2101
        %v2288 = vpop.permute.xlu0 %2287
        %2290 = vset.pattern.permute.xlu0 8
        %2291 = vperm.xlu0 %2290, %v2103
        %v2292 = vpop.permute.xlu0 %2291
        %2294 = vset.pattern.permute.xlu0 8
        %2295 = vperm.xlu0 %2294, %v2105
        %v2296 = vpop.permute.xlu0 %2295
        %v2298 = vmul.f32 %v2268, %v2258
        %v2299 = vmul.f32 %v2272, %v2259
        %v2300 = vmul.f32 %v2276, %v2260
        %v2301 = vmul.f32 %v2280, %v2261
        %v2302 = vmul.f32 %v2284, %v2262
        %v2303 = vmul.f32 %v2288, %v2263
        %v2304 = vmul.f32 %v2292, %v2264
        %v2305 = vmul.f32 %v2296, %v2265
        %2314 = vrot.lane.b32.xlu0 %v2298, 125
        %v2315 = vpop.permute.xlu0 %2314
        %2316 = vrot.lane.b32.xlu0 %v2299, 125
        %v2317 = vpop.permute.xlu0 %2316
        %2318 = vrot.lane.b32.xlu0 %v2300, 125
        %v2319 = vpop.permute.xlu0 %2318
        %2320 = vrot.lane.b32.xlu0 %v2301, 125
        %v2321 = vpop.permute.xlu0 %2320
        %2322 = vrot.lane.b32.xlu0 %v2302, 125
        %v2323 = vpop.permute.xlu0 %2322
        %2324 = vrot.lane.b32.xlu0 %v2303, 125
        %v2325 = vpop.permute.xlu0 %2324
        %2326 = vrot.lane.b32.xlu0 %v2304, 125
        %v2327 = vpop.permute.xlu0 %2326
        %2328 = vrot.lane.b32.xlu0 %v2305, 125
        %v2329 = vpop.permute.xlu0 %2328
        %v2338 = vadd.f32 %v2091, %v2315
        %v2339 = vadd.f32 %v2093, %v2317
        %v2340 = vadd.f32 %v2095, %v2319
        %v2341 = vadd.f32 %v2097, %v2321
        %v2342 = vadd.f32 %v2099, %v2323
        %v2343 = vadd.f32 %v2101, %v2325
        %v2344 = vadd.f32 %v2103, %v2327
        %v2345 = vadd.f32 %v2105, %v2329
        %v2346 = vld [vmem:[%s447] sm:$0xff]
        %v2347 = vlaneseq
        %v2348 = vand.u32 %v2347, 127
        %vm2349 = vcmask 1047616
        %2350 = vrot.lane.b32.xlu0 %v2346, 8
        %v2351 = vpop.permute.xlu0 %2350
        %v2352 = vsel %vm2349, %v2351, %v2346
        %2353 = vrot.lane.b32.xlu0 %v2352, 8
        %v2354 = vpop.permute.xlu0 %2353
        %v2355 = vsel %vm2349, %v2354, %v2346
        %vm2356 = vcmp.eq.s32.totalorder %v2348, 7
        %2358 = vrot.lane.b32.xlu0 %v2346, 1
        %v2359 = vpop.permute.xlu0 %2358
        %v2361 = vsub.f32 %v2355, %v2359
        %2363 = vrot.lane.b32.xlu0 %v2361, 127
        %v2364 = vpop.permute.xlu0 %2363
        %v2366 = vsel %vm2356, 1e+10, %v2364
        %v2367 = vsub.f32 0.0, %v2218
        %v2368 = vsub.f32 0.0, %v2219
        %v2369 = vsub.f32 0.0, %v2220
        %v2370 = vsub.f32 0.0, %v2221
        %v2371 = vsub.f32 0.0, %v2222
        %v2372 = vsub.f32 0.0, %v2223
        %v2373 = vsub.f32 0.0, %v2224
        %v2374 = vsub.f32 0.0, %v2225
        %v2376 = vlaneseq
        %v2377 = vshrl.u32 %v2376, 7
        %v2378 = vsub.s32 0, %v2377
        %v2379 = vrot.slane %v2366, %v2378
        %2381 = vbcast.lane.b32.xlu0 %v2379, 256
        %v2382 = vpop.permute.xlu0 %2381
        %v2383 = vlaneseq
        %v2384 = vshrl.u32 %v2383, 7
        %v2385 = vsub.s32 1, %v2384
        %v2386 = vrot.slane %v2366, %v2385
        %2388 = vbcast.lane.b32.xlu0 %v2386, 256
        %v2389 = vpop.permute.xlu0 %2388
        %v2390 = vlaneseq
        %v2391 = vshrl.u32 %v2390, 7
        %v2392 = vsub.s32 2, %v2391
        %v2393 = vrot.slane %v2366, %v2392
        %2395 = vbcast.lane.b32.xlu0 %v2393, 256
        %v2396 = vpop.permute.xlu0 %2395
        %v2397 = vlaneseq
        %v2398 = vshrl.u32 %v2397, 7
        %v2399 = vsub.s32 3, %v2398
        %v2400 = vrot.slane %v2366, %v2399
        %2402 = vbcast.lane.b32.xlu0 %v2400, 256
        %v2403 = vpop.permute.xlu0 %2402
        %v2404 = vlaneseq
        %v2405 = vshrl.u32 %v2404, 7
        %v2406 = vsub.s32 4, %v2405
        %v2407 = vrot.slane %v2366, %v2406
        %2409 = vbcast.lane.b32.xlu0 %v2407, 256
        %v2410 = vpop.permute.xlu0 %2409
        %v2411 = vlaneseq
        %v2412 = vshrl.u32 %v2411, 7
        %v2413 = vsub.s32 5, %v2412
        %v2414 = vrot.slane %v2366, %v2413
        %2416 = vbcast.lane.b32.xlu0 %v2414, 256
        %v2417 = vpop.permute.xlu0 %2416
        %v2418 = vlaneseq
        %v2419 = vshrl.u32 %v2418, 7
        %v2420 = vsub.s32 6, %v2419
        %v2421 = vrot.slane %v2366, %v2420
        %2423 = vbcast.lane.b32.xlu0 %v2421, 256
        %v2424 = vpop.permute.xlu0 %2423
        %v2425 = vlaneseq
        %v2426 = vshrl.u32 %v2425, 7
        %v2427 = vsub.s32 7, %v2426
        %v2428 = vrot.slane %v2366, %v2427
        %2430 = vbcast.lane.b32.xlu0 %v2428, 256
        %v2431 = vpop.permute.xlu0 %2430
        %v2440 = vmul.f32 %v2367, %v2382
        %v2441 = vmul.f32 %v2368, %v2389
        %v2442 = vmul.f32 %v2369, %v2396
        %v2443 = vmul.f32 %v2370, %v2403
        %v2444 = vmul.f32 %v2371, %v2410
        %v2445 = vmul.f32 %v2372, %v2417
        %v2446 = vmul.f32 %v2373, %v2424
        %v2447 = vmul.f32 %v2374, %v2431
        %v2448 = vmul.f32 %v2440, 1.442695
        %v2449 = vpow.pop %v2448
        %v2450 = vmul.f32 %v2441, 1.442695
        %v2451 = vpow.pop %v2450
        %v2452 = vmul.f32 %v2442, 1.442695
        %v2453 = vpow.pop %v2452
        %v2454 = vmul.f32 %v2443, 1.442695
        %v2455 = vpow.pop %v2454
        %v2456 = vmul.f32 %v2444, 1.442695
        %v2457 = vpow.pop %v2456
        %v2458 = vmul.f32 %v2445, 1.442695
        %v2459 = vpow.pop %v2458
        %v2460 = vmul.f32 %v2446, 1.442695
        %v2461 = vpow.pop %v2460
        %v2462 = vmul.f32 %v2447, 1.442695
        %v2463 = vpow.pop %v2462
        %v2464 = vsub.f32 1.0, %v2449
        %v2465 = vsub.f32 1.0, %v2451
        %v2466 = vsub.f32 1.0, %v2453
        %v2467 = vsub.f32 1.0, %v2455
        %v2468 = vsub.f32 1.0, %v2457
        %v2469 = vsub.f32 1.0, %v2459
        %v2470 = vsub.f32 1.0, %v2461
        %v2471 = vsub.f32 1.0, %v2463
        %v2472 = vsub.f32 1.0, %v2464
        %v2473 = vsub.f32 1.0, %v2465
        %v2474 = vsub.f32 1.0, %v2466
        %v2475 = vsub.f32 1.0, %v2467
        %v2476 = vsub.f32 1.0, %v2468
        %v2477 = vsub.f32 1.0, %v2469
        %v2478 = vsub.f32 1.0, %v2470
        %v2479 = vsub.f32 1.0, %v2471
        %v2480 = vadd.f32 %v2472, 1e-10
        %v2481 = vadd.f32 %v2473, 1e-10
        %v2482 = vadd.f32 %v2474, 1e-10
        %v2483 = vadd.f32 %v2475, 1e-10
        %v2484 = vadd.f32 %v2476, 1e-10
        %v2485 = vadd.f32 %v2477, 1e-10
        %v2486 = vadd.f32 %v2478, 1e-10
        %v2487 = vadd.f32 %v2479, 1e-10
        %vm2488 = vcmp.ge.s32.totalorder %v2348, 1
        %2497 = vset.pattern.permute.xlu0 0
        %2498 = vperm.xlu0 %2497, %v2480
        %v2499 = vpop.permute.xlu0 %2498
        %2500 = vset.pattern.permute.xlu0 0
        %2501 = vperm.xlu0 %2500, %v2481
        %v2502 = vpop.permute.xlu0 %2501
        %2503 = vset.pattern.permute.xlu0 0
        %2504 = vperm.xlu0 %2503, %v2482
        %v2505 = vpop.permute.xlu0 %2504
        %2506 = vset.pattern.permute.xlu0 0
        %2507 = vperm.xlu0 %2506, %v2483
        %v2508 = vpop.permute.xlu0 %2507
        %2509 = vset.pattern.permute.xlu0 0
        %2510 = vperm.xlu0 %2509, %v2484
        %v2511 = vpop.permute.xlu0 %2510
        %2512 = vset.pattern.permute.xlu0 0
        %2513 = vperm.xlu0 %2512, %v2485
        %v2514 = vpop.permute.xlu0 %2513
        %2515 = vset.pattern.permute.xlu0 0
        %2516 = vperm.xlu0 %2515, %v2486
        %v2517 = vpop.permute.xlu0 %2516
        %2518 = vset.pattern.permute.xlu0 0
        %2519 = vperm.xlu0 %2518, %v2487
        %v2520 = vpop.permute.xlu0 %2519
        %v2521 = vlaneseq
        %v2522 = vshrl.u32 %v2521, 7
        %v2523 = vsub.s32 %v2348, %v2522
        %v2524 = vrot.slane %v2499, %v2523
        %v2525 = vlaneseq
        %v2526 = vshrl.u32 %v2525, 7
        %v2527 = vsub.s32 %v2348, %v2526
        %v2528 = vrot.slane %v2502, %v2527
        %v2529 = vlaneseq
        %v2530 = vshrl.u32 %v2529, 7
        %v2531 = vsub.s32 %v2348, %v2530
        %v2532 = vrot.slane %v2505, %v2531
        %v2533 = vlaneseq
        %v2534 = vshrl.u32 %v2533, 7
        %v2535 = vsub.s32 %v2348, %v2534
        %v2536 = vrot.slane %v2508, %v2535
        %v2537 = vlaneseq
        %v2538 = vshrl.u32 %v2537, 7
        %v2539 = vsub.s32 %v2348, %v2538
        %v2540 = vrot.slane %v2511, %v2539
        %v2541 = vlaneseq
        %v2542 = vshrl.u32 %v2541, 7
        %v2543 = vsub.s32 %v2348, %v2542
        %v2544 = vrot.slane %v2514, %v2543
        %v2545 = vlaneseq
        %v2546 = vshrl.u32 %v2545, 7
        %v2547 = vsub.s32 %v2348, %v2546
        %v2548 = vrot.slane %v2517, %v2547
        %v2549 = vlaneseq
        %v2550 = vshrl.u32 %v2549, 7
        %v2551 = vsub.s32 %v2348, %v2550
        %v2552 = vrot.slane %v2520, %v2551
        %vm2553 = vcmask 1041409
        %v2554 = vsel %vm2553, %v2528, %v2524
        %vm2555 = vcmask 1042434
        %v2556 = vsel %vm2555, %v2532, %v2554
        %vm2557 = vcmask 1043459
        %v2558 = vsel %vm2557, %v2536, %v2556
        %vm2559 = vcmask 1044484
        %v2560 = vsel %vm2559, %v2540, %v2558
        %vm2561 = vcmask 1045509
        %v2562 = vsel %vm2561, %v2544, %v2560
        %vm2563 = vcmask 1046534
        %v2564 = vsel %vm2563, %v2548, %v2562
        %vm2565 = vcmask 1047559
        %v2566 = vsel %vm2565, %v2552, %v2564
        %2568 = vrot.lane.b32.xlu0 %v2566, 8
        %v2569 = vpop.permute.xlu0 %2568
        %v2570 = vsel %vm2349, %v2569, %v2566
        %2571 = vrot.lane.b32.xlu0 %v2570, 8
        %v2572 = vpop.permute.xlu0 %2571
        %v2573 = vsel %vm2349, %v2572, %v2566
        %2575 = vrot.lane.b32.xlu0 %v2573, 121
        %v2576 = vpop.permute.xlu0 %2575
        %v2578 = vsel %vm2488, %v2576, 1.0
        %2579 = vrot.lane.b32.xlu0 %v2578, 8
        %v2580 = vpop.permute.xlu0 %2579
        %v2581 = vsel %vm2349, %v2580, %v2578
        %2582 = vrot.lane.b32.xlu0 %v2581, 8
        %v2583 = vpop.permute.xlu0 %2582
        %v2584 = vsel %vm2349, %v2583, %v2578
        %2586 = vrot.lane.b32.xlu0 %v2584, 121
        %v2587 = vpop.permute.xlu0 %2586
        %v2589 = vsel %vm2488, %v2587, 1.0
        %v2590 = vmul.f32 %v2578, %v2589
        %vm2591 = vcmp.ge.s32.totalorder %v2348, 2
        %2592 = vrot.lane.b32.xlu0 %v2590, 8
        %v2593 = vpop.permute.xlu0 %2592
        %v2594 = vsel %vm2349, %v2593, %v2590
        %2595 = vrot.lane.b32.xlu0 %v2594, 8
        %v2596 = vpop.permute.xlu0 %2595
        %v2597 = vsel %vm2349, %v2596, %v2590
        %2599 = vrot.lane.b32.xlu0 %v2597, 122
        %v2600 = vpop.permute.xlu0 %2599
        %v2602 = vsel %vm2591, %v2600, 1.0
        %v2603 = vmul.f32 %v2590, %v2602
        %vm2604 = vcmp.ge.s32.totalorder %v2348, 4
        %2605 = vrot.lane.b32.xlu0 %v2603, 8
        %v2606 = vpop.permute.xlu0 %2605
        %v2607 = vsel %vm2349, %v2606, %v2603
        %2608 = vrot.lane.b32.xlu0 %v2607, 8
        %v2609 = vpop.permute.xlu0 %2608
        %v2610 = vsel %vm2349, %v2609, %v2603
        %2612 = vrot.lane.b32.xlu0 %v2610, 124
        %v2613 = vpop.permute.xlu0 %2612
        %v2615 = vsel %vm2604, %v2613, 1.0
        %v2616 = vmul.f32 %v2603, %v2615
        %v2618 = vlaneseq
        %v2619 = vshrl.u32 %v2618, 7
        %v2620 = vsub.s32 0, %v2619
        %v2621 = vrot.slane %v2616, %v2620
        %2623 = vbcast.lane.b32.xlu0 %v2621, 256
        %v2624 = vpop.permute.xlu0 %2623
        %v2625 = vlaneseq
        %v2626 = vshrl.u32 %v2625, 7
        %v2627 = vsub.s32 1, %v2626
        %v2628 = vrot.slane %v2616, %v2627
        %2630 = vbcast.lane.b32.xlu0 %v2628, 256
        %v2631 = vpop.permute.xlu0 %2630
        %v2632 = vlaneseq
        %v2633 = vshrl.u32 %v2632, 7
        %v2634 = vsub.s32 2, %v2633
        %v2635 = vrot.slane %v2616, %v2634
        %2637 = vbcast.lane.b32.xlu0 %v2635, 256
        %v2638 = vpop.permute.xlu0 %2637
        %v2639 = vlaneseq
        %v2640 = vshrl.u32 %v2639, 7
        %v2641 = vsub.s32 3, %v2640
        %v2642 = vrot.slane %v2616, %v2641
        %2644 = vbcast.lane.b32.xlu0 %v2642, 256
        %v2645 = vpop.permute.xlu0 %2644
        %v2646 = vlaneseq
        %v2647 = vshrl.u32 %v2646, 7
        %v2648 = vsub.s32 4, %v2647
        %v2649 = vrot.slane %v2616, %v2648
        %2651 = vbcast.lane.b32.xlu0 %v2649, 256
        %v2652 = vpop.permute.xlu0 %2651
        %v2653 = vlaneseq
        %v2654 = vshrl.u32 %v2653, 7
        %v2655 = vsub.s32 5, %v2654
        %v2656 = vrot.slane %v2616, %v2655
        %2658 = vbcast.lane.b32.xlu0 %v2656, 256
        %v2659 = vpop.permute.xlu0 %2658
        %v2660 = vlaneseq
        %v2661 = vshrl.u32 %v2660, 7
        %v2662 = vsub.s32 6, %v2661
        %v2663 = vrot.slane %v2616, %v2662
        %2665 = vbcast.lane.b32.xlu0 %v2663, 256
        %v2666 = vpop.permute.xlu0 %2665
        %v2667 = vlaneseq
        %v2668 = vshrl.u32 %v2667, 7
        %v2669 = vsub.s32 7, %v2668
        %v2670 = vrot.slane %v2616, %v2669
        %2672 = vbcast.lane.b32.xlu0 %v2670, 256
        %v2673 = vpop.permute.xlu0 %2672
        %v2682 = vmul.f32 %v2464, %v2624
        %v2683 = vmul.f32 %v2465, %v2631
        %v2684 = vmul.f32 %v2466, %v2638
        %v2685 = vmul.f32 %v2467, %v2645
        %v2686 = vmul.f32 %v2468, %v2652
        %v2687 = vmul.f32 %v2469, %v2659
        %v2688 = vmul.f32 %v2470, %v2666
        %v2689 = vmul.f32 %v2471, %v2673
        %2698 = vrot.lane.b32.xlu0 %v2682, 8
        %v2699 = vpop.permute.xlu0 %2698
        %2700 = vrot.lane.b32.xlu0 %v2683, 8
        %v2701 = vpop.permute.xlu0 %2700
        %2702 = vrot.lane.b32.xlu0 %v2684, 8
        %v2703 = vpop.permute.xlu0 %2702
        %2704 = vrot.lane.b32.xlu0 %v2685, 8
        %v2705 = vpop.permute.xlu0 %2704
        %2706 = vrot.lane.b32.xlu0 %v2686, 8
        %v2707 = vpop.permute.xlu0 %2706
        %2708 = vrot.lane.b32.xlu0 %v2687, 8
        %v2709 = vpop.permute.xlu0 %2708
        %2710 = vrot.lane.b32.xlu0 %v2688, 8
        %v2711 = vpop.permute.xlu0 %2710
        %2712 = vrot.lane.b32.xlu0 %v2689, 8
        %v2713 = vpop.permute.xlu0 %2712
        %v2722 = vmul.f32 %v2091, %v2699
        %v2723 = vmul.f32 %v2093, %v2701
        %v2724 = vmul.f32 %v2095, %v2703
        %v2725 = vmul.f32 %v2097, %v2705
        %v2726 = vmul.f32 %v2099, %v2707
        %v2727 = vmul.f32 %v2101, %v2709
        %v2728 = vmul.f32 %v2103, %v2711
        %v2729 = vmul.f32 %v2105, %v2713
        %2738 = vrot.lane.b32.xlu0 %v2722, 120
        %v2739 = vpop.permute.xlu0 %2738
        %2740 = vrot.lane.b32.xlu0 %v2723, 120
        %v2741 = vpop.permute.xlu0 %2740
        %2742 = vrot.lane.b32.xlu0 %v2724, 120
        %v2743 = vpop.permute.xlu0 %2742
        %2744 = vrot.lane.b32.xlu0 %v2725, 120
        %v2745 = vpop.permute.xlu0 %2744
        %2746 = vrot.lane.b32.xlu0 %v2726, 120
        %v2747 = vpop.permute.xlu0 %2746
        %2748 = vrot.lane.b32.xlu0 %v2727, 120
        %v2749 = vpop.permute.xlu0 %2748
        %2750 = vrot.lane.b32.xlu0 %v2728, 120
        %v2751 = vpop.permute.xlu0 %2750
        %2752 = vrot.lane.b32.xlu0 %v2729, 120
        %v2753 = vpop.permute.xlu0 %2752
        %v2762 = vsub.f32 %v2682, %v2739
        %v2763 = vsub.f32 %v2683, %v2741
        %v2764 = vsub.f32 %v2684, %v2743
        %v2765 = vsub.f32 %v2685, %v2745
        %v2766 = vsub.f32 %v2686, %v2747
        %v2767 = vsub.f32 %v2687, %v2749
        %v2768 = vsub.f32 %v2688, %v2751
        %v2769 = vsub.f32 %v2689, %v2753
        %2778 = vrot.lane.b32.xlu0 %v2338, 126
        %v2779 = vpop.permute.xlu0 %2778
        %2780 = vrot.lane.b32.xlu0 %v2339, 126
        %v2781 = vpop.permute.xlu0 %2780
        %2782 = vrot.lane.b32.xlu0 %v2340, 126
        %v2783 = vpop.permute.xlu0 %2782
        %2784 = vrot.lane.b32.xlu0 %v2341, 126
        %v2785 = vpop.permute.xlu0 %2784
        %2786 = vrot.lane.b32.xlu0 %v2342, 126
        %v2787 = vpop.permute.xlu0 %2786
        %2788 = vrot.lane.b32.xlu0 %v2343, 126
        %v2789 = vpop.permute.xlu0 %2788
        %2790 = vrot.lane.b32.xlu0 %v2344, 126
        %v2791 = vpop.permute.xlu0 %2790
        %2792 = vrot.lane.b32.xlu0 %v2345, 126
        %v2793 = vpop.permute.xlu0 %2792
        %v2802 = vmul.f32 %v2682, %v2779
        %v2803 = vmul.f32 %v2683, %v2781
        %v2804 = vmul.f32 %v2684, %v2783
        %v2805 = vmul.f32 %v2685, %v2785
        %v2806 = vmul.f32 %v2686, %v2787
        %v2807 = vmul.f32 %v2687, %v2789
        %v2808 = vmul.f32 %v2688, %v2791
        %v2809 = vmul.f32 %v2689, %v2793
        %2818 = vset.pattern.permute.xlu0 0
        %2819 = vperm.xlu0 %2818, %v2802
        %v2820 = vpop.permute.xlu0 %2819
        %2821 = vset.pattern.permute.xlu0 0
        %2822 = vperm.xlu0 %2821, %v2803
        %v2823 = vpop.permute.xlu0 %2822
        %2824 = vset.pattern.permute.xlu0 0
        %2825 = vperm.xlu0 %2824, %v2804
        %v2826 = vpop.permute.xlu0 %2825
        %2827 = vset.pattern.permute.xlu0 0
        %2828 = vperm.xlu0 %2827, %v2805
        %v2829 = vpop.permute.xlu0 %2828
        %2830 = vset.pattern.permute.xlu0 0
        %2831 = vperm.xlu0 %2830, %v2806
        %v2832 = vpop.permute.xlu0 %2831
        %2833 = vset.pattern.permute.xlu0 0
        %2834 = vperm.xlu0 %2833, %v2807
        %v2835 = vpop.permute.xlu0 %2834
        %2836 = vset.pattern.permute.xlu0 0
        %2837 = vperm.xlu0 %2836, %v2808
        %v2838 = vpop.permute.xlu0 %2837
        %2839 = vset.pattern.permute.xlu0 0
        %2840 = vperm.xlu0 %2839, %v2809
        %v2841 = vpop.permute.xlu0 %2840
        %v2842 = vlaneseq
        %v2843 = vshrl.u32 %v2842, 7
        %v2844 = vsub.s32 %v2348, %v2843
        %v2845 = vrot.slane %v2820, %v2844
        %v2846 = vlaneseq
        %v2847 = vshrl.u32 %v2846, 7
        %v2848 = vsub.s32 %v2348, %v2847
        %v2849 = vrot.slane %v2823, %v2848
        %v2850 = vlaneseq
        %v2851 = vshrl.u32 %v2850, 7
        %v2852 = vsub.s32 %v2348, %v2851
        %v2853 = vrot.slane %v2826, %v2852
        %v2854 = vlaneseq
        %v2855 = vshrl.u32 %v2854, 7
        %v2856 = vsub.s32 %v2348, %v2855
        %v2857 = vrot.slane %v2829, %v2856
        %v2858 = vlaneseq
        %v2859 = vshrl.u32 %v2858, 7
        %v2860 = vsub.s32 %v2348, %v2859
        %v2861 = vrot.slane %v2832, %v2860
        %v2862 = vlaneseq
        %v2863 = vshrl.u32 %v2862, 7
        %v2864 = vsub.s32 %v2348, %v2863
        %v2865 = vrot.slane %v2835, %v2864
        %v2866 = vlaneseq
        %v2867 = vshrl.u32 %v2866, 7
        %v2868 = vsub.s32 %v2348, %v2867
        %v2869 = vrot.slane %v2838, %v2868
        %v2870 = vlaneseq
        %v2871 = vshrl.u32 %v2870, 7
        %v2872 = vsub.s32 %v2348, %v2871
        %v2873 = vrot.slane %v2841, %v2872
        %v2874 = vsel %vm2553, %v2849, %v2845
        %v2875 = vsel %vm2555, %v2853, %v2874
        %v2876 = vsel %vm2557, %v2857, %v2875
        %v2877 = vsel %vm2559, %v2861, %v2876
        %v2878 = vsel %vm2561, %v2865, %v2877
        %v2879 = vsel %vm2563, %v2869, %v2878
        %v2880 = vsel %vm2565, %v2873, %v2879
        %v2882 = vsel %vm564, %v2880, 0.0
        %2883 = vadd.xlane.f32.xlu0 %v2882
        %v2884 = vpop.xlane.xlu0 %2883
        %2885 = vrot.lane.b32.xlu0 %v2338, 125
        %v2886 = vpop.permute.xlu0 %2885
        %2887 = vrot.lane.b32.xlu0 %v2339, 125
        %v2888 = vpop.permute.xlu0 %2887
        %2889 = vrot.lane.b32.xlu0 %v2340, 125
        %v2890 = vpop.permute.xlu0 %2889
        %2891 = vrot.lane.b32.xlu0 %v2341, 125
        %v2892 = vpop.permute.xlu0 %2891
        %2893 = vrot.lane.b32.xlu0 %v2342, 125
        %v2894 = vpop.permute.xlu0 %2893
        %2895 = vrot.lane.b32.xlu0 %v2343, 125
        %v2896 = vpop.permute.xlu0 %2895
        %2897 = vrot.lane.b32.xlu0 %v2344, 125
        %v2898 = vpop.permute.xlu0 %2897
        %2899 = vrot.lane.b32.xlu0 %v2345, 125
        %v2900 = vpop.permute.xlu0 %2899
        %v2909 = vmul.f32 %v2682, %v2886
        %v2910 = vmul.f32 %v2683, %v2888
        %v2911 = vmul.f32 %v2684, %v2890
        %v2912 = vmul.f32 %v2685, %v2892
        %v2913 = vmul.f32 %v2686, %v2894
        %v2914 = vmul.f32 %v2687, %v2896
        %v2915 = vmul.f32 %v2688, %v2898
        %v2916 = vmul.f32 %v2689, %v2900
        %2925 = vset.pattern.permute.xlu0 0
        %2926 = vperm.xlu0 %2925, %v2909
        %v2927 = vpop.permute.xlu0 %2926
        %2928 = vset.pattern.permute.xlu0 0
        %2929 = vperm.xlu0 %2928, %v2910
        %v2930 = vpop.permute.xlu0 %2929
        %2931 = vset.pattern.permute.xlu0 0
        %2932 = vperm.xlu0 %2931, %v2911
        %v2933 = vpop.permute.xlu0 %2932
        %2934 = vset.pattern.permute.xlu0 0
        %2935 = vperm.xlu0 %2934, %v2912
        %v2936 = vpop.permute.xlu0 %2935
        %2937 = vset.pattern.permute.xlu0 0
        %2938 = vperm.xlu0 %2937, %v2913
        %v2939 = vpop.permute.xlu0 %2938
        %2940 = vset.pattern.permute.xlu0 0
        %2941 = vperm.xlu0 %2940, %v2914
        %v2942 = vpop.permute.xlu0 %2941
        %2943 = vset.pattern.permute.xlu0 0
        %2944 = vperm.xlu0 %2943, %v2915
        %v2945 = vpop.permute.xlu0 %2944
        %2946 = vset.pattern.permute.xlu0 0
        %2947 = vperm.xlu0 %2946, %v2916
        %v2948 = vpop.permute.xlu0 %2947
        %v2949 = vlaneseq
        %v2950 = vshrl.u32 %v2949, 7
        %v2951 = vsub.s32 %v2348, %v2950
        %v2952 = vrot.slane %v2927, %v2951
        %v2953 = vlaneseq
        %v2954 = vshrl.u32 %v2953, 7
        %v2955 = vsub.s32 %v2348, %v2954
        %v2956 = vrot.slane %v2930, %v2955
        %v2957 = vlaneseq
        %v2958 = vshrl.u32 %v2957, 7
        %v2959 = vsub.s32 %v2348, %v2958
        %v2960 = vrot.slane %v2933, %v2959
        %v2961 = vlaneseq
        %v2962 = vshrl.u32 %v2961, 7
        %v2963 = vsub.s32 %v2348, %v2962
        %v2964 = vrot.slane %v2936, %v2963
        %v2965 = vlaneseq
        %v2966 = vshrl.u32 %v2965, 7
        %v2967 = vsub.s32 %v2348, %v2966
        %v2968 = vrot.slane %v2939, %v2967
        %v2969 = vlaneseq
        %v2970 = vshrl.u32 %v2969, 7
        %v2971 = vsub.s32 %v2348, %v2970
        %v2972 = vrot.slane %v2942, %v2971
        %v2973 = vlaneseq
        %v2974 = vshrl.u32 %v2973, 7
        %v2975 = vsub.s32 %v2348, %v2974
        %v2976 = vrot.slane %v2945, %v2975
        %v2977 = vlaneseq
        %v2978 = vshrl.u32 %v2977, 7
        %v2979 = vsub.s32 %v2348, %v2978
        %v2980 = vrot.slane %v2948, %v2979
        %v2981 = vsel %vm2553, %v2956, %v2952
        %v2982 = vsel %vm2555, %v2960, %v2981
        %v2983 = vsel %vm2557, %v2964, %v2982
        %v2984 = vsel %vm2559, %v2968, %v2983
        %v2985 = vsel %vm2561, %v2972, %v2984
        %v2986 = vsel %vm2563, %v2976, %v2985
        %v2987 = vsel %vm2565, %v2980, %v2986
        %v2989 = vsel %vm564, %v2987, 0.0
        %2990 = vadd.xlane.f32.xlu0 %v2989
        %v2991 = vpop.xlane.xlu0 %2990
        %2992 = vrot.lane.b32.xlu0 %v2338, 124
        %v2993 = vpop.permute.xlu0 %2992
        %2994 = vrot.lane.b32.xlu0 %v2339, 124
        %v2995 = vpop.permute.xlu0 %2994
        %2996 = vrot.lane.b32.xlu0 %v2340, 124
        %v2997 = vpop.permute.xlu0 %2996
        %2998 = vrot.lane.b32.xlu0 %v2341, 124
        %v2999 = vpop.permute.xlu0 %2998
        %3000 = vrot.lane.b32.xlu0 %v2342, 124
        %v3001 = vpop.permute.xlu0 %3000
        %3002 = vrot.lane.b32.xlu0 %v2343, 124
        %v3003 = vpop.permute.xlu0 %3002
        %3004 = vrot.lane.b32.xlu0 %v2344, 124
        %v3005 = vpop.permute.xlu0 %3004
        %3006 = vrot.lane.b32.xlu0 %v2345, 124
        %v3007 = vpop.permute.xlu0 %3006
        %v3016 = vmul.f32 %v2682, %v2993
        %v3017 = vmul.f32 %v2683, %v2995
        %v3018 = vmul.f32 %v2684, %v2997
        %v3019 = vmul.f32 %v2685, %v2999
        %v3020 = vmul.f32 %v2686, %v3001
        %v3021 = vmul.f32 %v2687, %v3003
        %v3022 = vmul.f32 %v2688, %v3005
        %v3023 = vmul.f32 %v2689, %v3007
        %3032 = vset.pattern.permute.xlu0 0
        %3033 = vperm.xlu0 %3032, %v3016
        %v3034 = vpop.permute.xlu0 %3033
        %3035 = vset.pattern.permute.xlu0 0
        %3036 = vperm.xlu0 %3035, %v3017
        %v3037 = vpop.permute.xlu0 %3036
        %3038 = vset.pattern.permute.xlu0 0
        %3039 = vperm.xlu0 %3038, %v3018
        %v3040 = vpop.permute.xlu0 %3039
        %3041 = vset.pattern.permute.xlu0 0
        %3042 = vperm.xlu0 %3041, %v3019
        %v3043 = vpop.permute.xlu0 %3042
        %3044 = vset.pattern.permute.xlu0 0
        %3045 = vperm.xlu0 %3044, %v3020
        %v3046 = vpop.permute.xlu0 %3045
        %3047 = vset.pattern.permute.xlu0 0
        %3048 = vperm.xlu0 %3047, %v3021
        %v3049 = vpop.permute.xlu0 %3048
        %3050 = vset.pattern.permute.xlu0 0
        %3051 = vperm.xlu0 %3050, %v3022
        %v3052 = vpop.permute.xlu0 %3051
        %3053 = vset.pattern.permute.xlu0 0
        %3054 = vperm.xlu0 %3053, %v3023
        %v3055 = vpop.permute.xlu0 %3054
        %v3056 = vlaneseq
        %v3057 = vshrl.u32 %v3056, 7
        %v3058 = vsub.s32 %v2348, %v3057
        %v3059 = vrot.slane %v3034, %v3058
        %v3060 = vlaneseq
        %v3061 = vshrl.u32 %v3060, 7
        %v3062 = vsub.s32 %v2348, %v3061
        %v3063 = vrot.slane %v3037, %v3062
        %v3064 = vlaneseq
        %v3065 = vshrl.u32 %v3064, 7
        %v3066 = vsub.s32 %v2348, %v3065
        %v3067 = vrot.slane %v3040, %v3066
        %v3068 = vlaneseq
        %v3069 = vshrl.u32 %v3068, 7
        %v3070 = vsub.s32 %v2348, %v3069
        %v3071 = vrot.slane %v3043, %v3070
        %v3072 = vlaneseq
        %v3073 = vshrl.u32 %v3072, 7
        %v3074 = vsub.s32 %v2348, %v3073
        %v3075 = vrot.slane %v3046, %v3074
        %v3076 = vlaneseq
        %v3077 = vshrl.u32 %v3076, 7
        %v3078 = vsub.s32 %v2348, %v3077
        %v3079 = vrot.slane %v3049, %v3078
        %v3080 = vlaneseq
        %v3081 = vshrl.u32 %v3080, 7
        %v3082 = vsub.s32 %v2348, %v3081
        %v3083 = vrot.slane %v3052, %v3082
        %v3084 = vlaneseq
        %v3085 = vshrl.u32 %v3084, 7
        %v3086 = vsub.s32 %v2348, %v3085
        %v3087 = vrot.slane %v3055, %v3086
        %v3088 = vsel %vm2553, %v3063, %v3059
        %v3089 = vsel %vm2555, %v3067, %v3088
        %v3090 = vsel %vm2557, %v3071, %v3089
        %v3091 = vsel %vm2559, %v3075, %v3090
        %v3092 = vsel %vm2561, %v3079, %v3091
        %v3093 = vsel %vm2563, %v3083, %v3092
        %v3094 = vsel %vm2565, %v3087, %v3093
        %v3096 = vsel %vm564, %v3094, 0.0
        %3097 = vadd.xlane.f32.xlu0 %v3096
        %v3098 = vpop.xlane.xlu0 %3097
        %v3099 = vlaneseq
        %v3100 = vshrl.u32 %v3099, 7
        %v3101 = vsub.s32 0, %v3100
        %v3102 = vrot.slane %v2346, %v3101
        %3104 = vbcast.lane.b32.xlu0 %v3102, 256
        %v3105 = vpop.permute.xlu0 %3104
        %v3106 = vlaneseq
        %v3107 = vshrl.u32 %v3106, 7
        %v3108 = vsub.s32 1, %v3107
        %v3109 = vrot.slane %v2346, %v3108
        %3111 = vbcast.lane.b32.xlu0 %v3109, 256
        %v3112 = vpop.permute.xlu0 %3111
        %v3113 = vlaneseq
        %v3114 = vshrl.u32 %v3113, 7
        %v3115 = vsub.s32 2, %v3114
        %v3116 = vrot.slane %v2346, %v3115
        %3118 = vbcast.lane.b32.xlu0 %v3116, 256
        %v3119 = vpop.permute.xlu0 %3118
        %v3120 = vlaneseq
        %v3121 = vshrl.u32 %v3120, 7
        %v3122 = vsub.s32 3, %v3121
        %v3123 = vrot.slane %v2346, %v3122
        %3125 = vbcast.lane.b32.xlu0 %v3123, 256
        %v3126 = vpop.permute.xlu0 %3125
        %v3127 = vlaneseq
        %v3128 = vshrl.u32 %v3127, 7
        %v3129 = vsub.s32 4, %v3128
        %v3130 = vrot.slane %v2346, %v3129
        %3132 = vbcast.lane.b32.xlu0 %v3130, 256
        %v3133 = vpop.permute.xlu0 %3132
        %v3134 = vlaneseq
        %v3135 = vshrl.u32 %v3134, 7
        %v3136 = vsub.s32 5, %v3135
        %v3137 = vrot.slane %v2346, %v3136
        %3139 = vbcast.lane.b32.xlu0 %v3137, 256
        %v3140 = vpop.permute.xlu0 %3139
        %v3141 = vlaneseq
        %v3142 = vshrl.u32 %v3141, 7
        %v3143 = vsub.s32 6, %v3142
        %v3144 = vrot.slane %v2346, %v3143
        %3146 = vbcast.lane.b32.xlu0 %v3144, 256
        %v3147 = vpop.permute.xlu0 %3146
        %v3148 = vlaneseq
        %v3149 = vshrl.u32 %v3148, 7
        %v3150 = vsub.s32 7, %v3149
        %v3151 = vrot.slane %v2346, %v3150
        %3153 = vbcast.lane.b32.xlu0 %v3151, 256
        %v3154 = vpop.permute.xlu0 %3153
        %v3163 = vmul.f32 %v2682, %v3105
        %v3164 = vmul.f32 %v2683, %v3112
        %v3165 = vmul.f32 %v2684, %v3119
        %v3166 = vmul.f32 %v2685, %v3126
        %v3167 = vmul.f32 %v2686, %v3133
        %v3168 = vmul.f32 %v2687, %v3140
        %v3169 = vmul.f32 %v2688, %v3147
        %v3170 = vmul.f32 %v2689, %v3154
        %3179 = vset.pattern.permute.xlu0 0
        %3180 = vperm.xlu0 %3179, %v3163
        %v3181 = vpop.permute.xlu0 %3180
        %3182 = vset.pattern.permute.xlu0 0
        %3183 = vperm.xlu0 %3182, %v3164
        %v3184 = vpop.permute.xlu0 %3183
        %3185 = vset.pattern.permute.xlu0 0
        %3186 = vperm.xlu0 %3185, %v3165
        %v3187 = vpop.permute.xlu0 %3186
        %3188 = vset.pattern.permute.xlu0 0
        %3189 = vperm.xlu0 %3188, %v3166
        %v3190 = vpop.permute.xlu0 %3189
        %3191 = vset.pattern.permute.xlu0 0
        %3192 = vperm.xlu0 %3191, %v3167
        %v3193 = vpop.permute.xlu0 %3192
        %3194 = vset.pattern.permute.xlu0 0
        %3195 = vperm.xlu0 %3194, %v3168
        %v3196 = vpop.permute.xlu0 %3195
        %3197 = vset.pattern.permute.xlu0 0
        %3198 = vperm.xlu0 %3197, %v3169
        %v3199 = vpop.permute.xlu0 %3198
        %3200 = vset.pattern.permute.xlu0 0
        %3201 = vperm.xlu0 %3200, %v3170
        %v3202 = vpop.permute.xlu0 %3201
        %v3203 = vlaneseq
        %v3204 = vshrl.u32 %v3203, 7
        %v3205 = vsub.s32 %v2348, %v3204
        %v3206 = vrot.slane %v3181, %v3205
        %v3207 = vlaneseq
        %v3208 = vshrl.u32 %v3207, 7
        %v3209 = vsub.s32 %v2348, %v3208
        %v3210 = vrot.slane %v3184, %v3209
        %v3211 = vlaneseq
        %v3212 = vshrl.u32 %v3211, 7
        %v3213 = vsub.s32 %v2348, %v3212
        %v3214 = vrot.slane %v3187, %v3213
        %v3215 = vlaneseq
        %v3216 = vshrl.u32 %v3215, 7
        %v3217 = vsub.s32 %v2348, %v3216
        %v3218 = vrot.slane %v3190, %v3217
        %v3219 = vlaneseq
        %v3220 = vshrl.u32 %v3219, 7
        %v3221 = vsub.s32 %v2348, %v3220
        %v3222 = vrot.slane %v3193, %v3221
        %v3223 = vlaneseq
        %v3224 = vshrl.u32 %v3223, 7
        %v3225 = vsub.s32 %v2348, %v3224
        %v3226 = vrot.slane %v3196, %v3225
        %v3227 = vlaneseq
        %v3228 = vshrl.u32 %v3227, 7
        %v3229 = vsub.s32 %v2348, %v3228
        %v3230 = vrot.slane %v3199, %v3229
        %v3231 = vlaneseq
        %v3232 = vshrl.u32 %v3231, 7
        %v3233 = vsub.s32 %v2348, %v3232
        %v3234 = vrot.slane %v3202, %v3233
        %v3235 = vsel %vm2553, %v3210, %v3206
        %v3236 = vsel %vm2555, %v3214, %v3235
        %v3237 = vsel %vm2557, %v3218, %v3236
        %v3238 = vsel %vm2559, %v3222, %v3237
        %v3239 = vsel %vm2561, %v3226, %v3238
        %v3240 = vsel %vm2563, %v3230, %v3239
        %v3241 = vsel %vm2565, %v3234, %v3240
        %v3243 = vsel %vm564, %v3241, 0.0
        %3244 = vadd.xlane.f32.xlu0 %v3243
        %v3245 = vpop.xlane.xlu0 %3244
        %3246 = vset.pattern.permute.xlu0 0
        %3247 = vperm.xlu0 %3246, %v2682
        %v3248 = vpop.permute.xlu0 %3247
        %3249 = vset.pattern.permute.xlu0 0
        %3250 = vperm.xlu0 %3249, %v2683
        %v3251 = vpop.permute.xlu0 %3250
        %3252 = vset.pattern.permute.xlu0 0
        %3253 = vperm.xlu0 %3252, %v2684
        %v3254 = vpop.permute.xlu0 %3253
        %3255 = vset.pattern.permute.xlu0 0
        %3256 = vperm.xlu0 %3255, %v2685
        %v3257 = vpop.permute.xlu0 %3256
        %3258 = vset.pattern.permute.xlu0 0
        %3259 = vperm.xlu0 %3258, %v2686
        %v3260 = vpop.permute.xlu0 %3259
        %3261 = vset.pattern.permute.xlu0 0
        %3262 = vperm.xlu0 %3261, %v2687
        %v3263 = vpop.permute.xlu0 %3262
        %3264 = vset.pattern.permute.xlu0 0
        %3265 = vperm.xlu0 %3264, %v2688
        %v3266 = vpop.permute.xlu0 %3265
        %3267 = vset.pattern.permute.xlu0 0
        %3268 = vperm.xlu0 %3267, %v2689
        %v3269 = vpop.permute.xlu0 %3268
        %v3270 = vlaneseq
        %v3271 = vshrl.u32 %v3270, 7
        %v3272 = vsub.s32 %v2348, %v3271
        %v3273 = vrot.slane %v3248, %v3272
        %v3274 = vlaneseq
        %v3275 = vshrl.u32 %v3274, 7
        %v3276 = vsub.s32 %v2348, %v3275
        %v3277 = vrot.slane %v3251, %v3276
        %v3278 = vlaneseq
        %v3279 = vshrl.u32 %v3278, 7
        %v3280 = vsub.s32 %v2348, %v3279
        %v3281 = vrot.slane %v3254, %v3280
        %v3282 = vlaneseq
        %v3283 = vshrl.u32 %v3282, 7
        %v3284 = vsub.s32 %v2348, %v3283
        %v3285 = vrot.slane %v3257, %v3284
        %v3286 = vlaneseq
        %v3287 = vshrl.u32 %v3286, 7
        %v3288 = vsub.s32 %v2348, %v3287
        %v3289 = vrot.slane %v3260, %v3288
        %v3290 = vlaneseq
        %v3291 = vshrl.u32 %v3290, 7
        %v3292 = vsub.s32 %v2348, %v3291
        %v3293 = vrot.slane %v3263, %v3292
        %v3294 = vlaneseq
        %v3295 = vshrl.u32 %v3294, 7
        %v3296 = vsub.s32 %v2348, %v3295
        %v3297 = vrot.slane %v3266, %v3296
        %v3298 = vlaneseq
        %v3299 = vshrl.u32 %v3298, 7
        %v3300 = vsub.s32 %v2348, %v3299
        %v3301 = vrot.slane %v3269, %v3300
        %v3302 = vsel %vm2553, %v3277, %v3273
        %v3303 = vsel %vm2555, %v3281, %v3302
        %v3304 = vsel %vm2557, %v3285, %v3303
        %v3305 = vsel %vm2559, %v3289, %v3304
        %v3306 = vsel %vm2561, %v3293, %v3305
        %v3307 = vsel %vm2563, %v3297, %v3306
        %v3308 = vsel %vm2565, %v3301, %v3307
        %3318 = vset.pattern.permute.xlu0 0
        %3319 = vperm.xlu0 %3318, %v2762
        %v3320 = vpop.permute.xlu0 %3319
        %3321 = vset.pattern.permute.xlu0 0
        %3322 = vperm.xlu0 %3321, %v2763
        %v3323 = vpop.permute.xlu0 %3322
        %3324 = vset.pattern.permute.xlu0 0
        %3325 = vperm.xlu0 %3324, %v2764
        %v3326 = vpop.permute.xlu0 %3325
        %3327 = vset.pattern.permute.xlu0 0
        %3328 = vperm.xlu0 %3327, %v2765
        %v3329 = vpop.permute.xlu0 %3328
        %3330 = vset.pattern.permute.xlu0 0
        %3331 = vperm.xlu0 %3330, %v2766
        %v3332 = vpop.permute.xlu0 %3331
        %3333 = vset.pattern.permute.xlu0 0
        %3334 = vperm.xlu0 %3333, %v2767
        %v3335 = vpop.permute.xlu0 %3334
        %3336 = vset.pattern.permute.xlu0 0
        %3337 = vperm.xlu0 %3336, %v2768
        %v3338 = vpop.permute.xlu0 %3337
        %3339 = vset.pattern.permute.xlu0 0
        %3340 = vperm.xlu0 %3339, %v2769
        %v3341 = vpop.permute.xlu0 %3340
        %v3342 = vadd.s32 %v2348, 4294967288
        %v3343 = vlaneseq
        %v3344 = vshrl.u32 %v3343, 7
        %v3345 = vsub.s32 %v3342, %v3344
        %v3346 = vrot.slane %v3320, %v3345
        %v3347 = vlaneseq
        %v3348 = vshrl.u32 %v3347, 7
        %v3349 = vsub.s32 %v3342, %v3348
        %v3350 = vrot.slane %v3323, %v3349
        %v3351 = vlaneseq
        %v3352 = vshrl.u32 %v3351, 7
        %v3353 = vsub.s32 %v3342, %v3352
        %v3354 = vrot.slane %v3326, %v3353
        %v3355 = vlaneseq
        %v3356 = vshrl.u32 %v3355, 7
        %v3357 = vsub.s32 %v3342, %v3356
        %v3358 = vrot.slane %v3329, %v3357
        %v3359 = vlaneseq
        %v3360 = vshrl.u32 %v3359, 7
        %v3361 = vsub.s32 %v3342, %v3360
        %v3362 = vrot.slane %v3332, %v3361
        %v3363 = vlaneseq
        %v3364 = vshrl.u32 %v3363, 7
        %v3365 = vsub.s32 %v3342, %v3364
        %v3366 = vrot.slane %v3335, %v3365
        %v3367 = vlaneseq
        %v3368 = vshrl.u32 %v3367, 7
        %v3369 = vsub.s32 %v3342, %v3368
        %v3370 = vrot.slane %v3338, %v3369
        %v3371 = vlaneseq
        %v3372 = vshrl.u32 %v3371, 7
        %v3373 = vsub.s32 %v3342, %v3372
        %v3374 = vrot.slane %v3341, %v3373
        %v3375 = vsel %vm2553, %v3350, %v3346
        %v3376 = vsel %vm2555, %v3354, %v3375
        %v3377 = vsel %vm2557, %v3358, %v3376
        %v3378 = vsel %vm2559, %v3362, %v3377
        %v3379 = vsel %vm2561, %v3366, %v3378
        %v3380 = vsel %vm2563, %v3370, %v3379
        %v3381 = vsel %vm2565, %v3374, %v3380
        %3383 = vset.pattern.permute.xlu0 8
        %3384 = vperm.xlu0 %3383, %v2722
        %v3385 = vpop.permute.xlu0 %3384
        %3386 = vset.pattern.permute.xlu0 8
        %3387 = vperm.xlu0 %3386, %v2723
        %v3388 = vpop.permute.xlu0 %3387
        %3389 = vset.pattern.permute.xlu0 8
        %3390 = vperm.xlu0 %3389, %v2724
        %v3391 = vpop.permute.xlu0 %3390
        %3392 = vset.pattern.permute.xlu0 8
        %3393 = vperm.xlu0 %3392, %v2725
        %v3394 = vpop.permute.xlu0 %3393
        %3395 = vset.pattern.permute.xlu0 8
        %3396 = vperm.xlu0 %3395, %v2726
        %v3397 = vpop.permute.xlu0 %3396
        %3398 = vset.pattern.permute.xlu0 8
        %3399 = vperm.xlu0 %3398, %v2727
        %v3400 = vpop.permute.xlu0 %3399
        %3401 = vset.pattern.permute.xlu0 8
        %3402 = vperm.xlu0 %3401, %v2728
        %v3403 = vpop.permute.xlu0 %3402
        %3404 = vset.pattern.permute.xlu0 8
        %3405 = vperm.xlu0 %3404, %v2729
        %v3406 = vpop.permute.xlu0 %3405
        %v3407 = vadd.s32 %v2348, 4294967280
        %v3408 = vlaneseq
        %v3409 = vshrl.u32 %v3408, 7
        %v3410 = vsub.s32 %v3407, %v3409
        %v3411 = vrot.slane %v3385, %v3410
        %v3412 = vlaneseq
        %v3413 = vshrl.u32 %v3412, 7
        %v3414 = vsub.s32 %v3407, %v3413
        %v3415 = vrot.slane %v3388, %v3414
        %v3416 = vlaneseq
        %v3417 = vshrl.u32 %v3416, 7
        %v3418 = vsub.s32 %v3407, %v3417
        %v3419 = vrot.slane %v3391, %v3418
        %v3420 = vlaneseq
        %v3421 = vshrl.u32 %v3420, 7
        %v3422 = vsub.s32 %v3407, %v3421
        %v3423 = vrot.slane %v3394, %v3422
        %v3424 = vlaneseq
        %v3425 = vshrl.u32 %v3424, 7
        %v3426 = vsub.s32 %v3407, %v3425
        %v3427 = vrot.slane %v3397, %v3426
        %v3428 = vlaneseq
        %v3429 = vshrl.u32 %v3428, 7
        %v3430 = vsub.s32 %v3407, %v3429
        %v3431 = vrot.slane %v3400, %v3430
        %v3432 = vlaneseq
        %v3433 = vshrl.u32 %v3432, 7
        %v3434 = vsub.s32 %v3407, %v3433
        %v3435 = vrot.slane %v3403, %v3434
        %v3436 = vlaneseq
        %v3437 = vshrl.u32 %v3436, 7
        %v3438 = vsub.s32 %v3407, %v3437
        %v3439 = vrot.slane %v3406, %v3438
        %v3440 = vsel %vm2553, %v3415, %v3411
        %v3441 = vsel %vm2555, %v3419, %v3440
        %v3442 = vsel %vm2557, %v3423, %v3441
        %v3443 = vsel %vm2559, %v3427, %v3442
        %v3444 = vsel %vm2561, %v3431, %v3443
        %v3445 = vsel %vm2563, %v3435, %v3444
        %v3446 = vsel %vm2565, %v3439, %v3445
        %v3448 = vsel %vm564, %v3308, %v3381
        %vm3449 = vcmask 130048
        %v3450 = vsel %vm3449, %v3448, %v3446
        %vm3451 = vcmask 195584
        %v3452 = vsel %vm3451, %v3450, %v2884
        %vm3453 = vcmask 203776
        %v3454 = vsel %vm3453, %v3452, %v2991
        %vm3455 = vcmask 211968
        %v3456 = vsel %vm3455, %v3454, %v3098
        %vm3457 = vcmask 220160
        %v3458 = vsel %vm3457, %v3456, %v3245
        %vm3459 = vcmask 228352
        %v3460 = vsel %vm3459, %v3458, 0.0
        %3461 = vst [vmem:[%s425] sm:$0xff] %v3460
        %s3462 = sand.u32 %s284, 1
        %s3463 = scalar_lea.sflag [#allocation3], %s3462
        %s3464 = sand.u32 %s284, 1
        %s3465 = smul.addr %s3464, 8
        %s3466 = scalar_lea.vmem [#allocation2], %s3465
        // Predicated region
        $region65: #{tpu_custom_call.1} parent=63 // pred_check
          %p3467 = pneg %p294
        $region66: #{tpu_custom_call.1} parent=63 // pred_check_branch
          %3469 = sbr.rel (%p3467) target = $region68
        $region67: #{tpu_custom_call.1} parent=63 // pred_region
          %s3471 = ssub.s32 128, 128
          %3472 = vsyncadd %s3463, %s3471
          %s3473 = smul.addr %s25, 128
          %s3474 = scalar_lea.hbm %s11, %s3473
          %s3476 = sshll.u32 %s3466, 4
          %s3477 = int_to_ptr.vmem [resolvable:$true] %s3476
          %3479 = dma.vmem_to_hbm [thread:$0]  %s3477, 128, %s3474, %s3463
        $region68: #{tpu_custom_call.1} parent=63 // pred_fallthru
          _
      $region64: #{tpu_custom_call.1} parent=5 // pred_fallthru
        _
      %p3480 = scmp.le.s32.totalorder 2, %s20
      // Predicated region
      $region69: #{tpu_custom_call.1} parent=5 // pred_check
        %p3481 = pneg %p3480
      $region70: #{tpu_custom_call.1} parent=5 // pred_check_branch
        %3483 = sbr.rel (%p3481) target = $region72
      $region71: #{tpu_custom_call.1} parent=5 // pred_region
        %s3484 = ssub.s32 %s20, 2
        // Predicated region
        $region73: #{tpu_custom_call.1} parent=71 // pred_check
          %p3485 = pneg %p300
        $region74: #{tpu_custom_call.1} parent=71 // pred_check_branch
          %3487 = sbr.rel (%p3485) target = $region76
        $region75: #{tpu_custom_call.1} parent=71 // pred_region
          %s3488 = sand.u32 %s285, 1
          %s3489 = scalar_lea.sflag [#allocation3], %s3488
          %s3490 = sand.u32 %s285, 1
          %s3491 = smul.addr %s3490, 8
          %s3492 = scalar_lea.vmem [#allocation2], %s3491
          %3493 = dma.done %s3489, 128
        $region76: #{tpu_custom_call.1} parent=71 // pred_fallthru
          _
      $region72: #{tpu_custom_call.1} parent=5 // pred_fallthru
        _
    $region6: #{tpu_custom_call.1} parent=1 // loop_footer
      %s24 = sadd.s32 1, %s20
    $region7: #{tpu_custom_call.1} parent=1 // loop_footer_branch
      %19 = sbr.rel target = $region3
    $region8: #{tpu_custom_call.1} parent=1 // loop_exit
      _
    %3494 = vsyncpa [#allocation3], 1
    %s3495 = scalar_lea.sflag [#allocation3], 1
    %3496 = vsyncpa %s3495, 1

</llo_original>
